<compile_context>
chip_gen: v7x
topology: tpu7x:2x2x1
jax: 0.10.0
libtpu: 0.0.40
codegen_flags: <defaults>
</compile_context>

<pallas_src>
import functools

import numpy as np
import jax
import jax.numpy as jnp
from jax import lax
from jax.experimental import pallas as pl
from jax.experimental.pallas import tpu as pltpu

LN_EPS = 1e-5
NEG_INF = -1e9
# HBM storage dtype for matmul weights (wq/wkv/wo/w1/w2/fc_w).  bf16 halves weight bandwidth
# and runs the MXU at full rate; set to jnp.float32 for exact PyTorch float32 parity.
WEIGHT_DTYPE = jnp.bfloat16


def _mm(a, w):
    """MXU matmul: cast the activation to the weight's (storage) dtype, accumulate in f32."""
    return jnp.dot(a.astype(w.dtype), w, preferred_element_type=jnp.float32)


def _layernorm(x, g, b):
    mu = jnp.mean(x, axis=-1, keepdims=True)
    xc = x - mu
    var = jnp.mean(xc * xc, axis=-1, keepdims=True)
    return xc * lax.rsqrt(var + LN_EPS) * g + b


def _tile(n, target, align):
    """Largest tile <= target that is a multiple of `align` and evenly divides n.
    Falls back to the full dimension (always legal for BlockSpec) when none exists."""
    if n <= target:
        return n
    t = (target // align) * align
    while t >= align:
        if n % t == 0:
            return t
        t -= align
    return n


# -------------------- fused positional-encoding add + LayerNorm --------------------

def _pe_ln_kernel(x_ref, pe_ref, g_ref, b_ref, o_ref):
    o_ref[...] = _layernorm(x_ref[...] + pe_ref[...], g_ref[...], b_ref[...])


def pe_layernorm(x, pe_s, g, b):
    B, S, D = x.shape
    return pl.pallas_call(
        _pe_ln_kernel,
        out_shape=jax.ShapeDtypeStruct((B, S, D), jnp.float32),
        grid=(B,),
        in_specs=[
            pl.BlockSpec((None, S, D), lambda i: (i, 0, 0)),
            pl.BlockSpec((S, D), lambda i: (0, 0)),      # pe already sliced to (S, D)
            pl.BlockSpec((1, D), lambda i: (0, 0)),
            pl.BlockSpec((1, D), lambda i: (0, 0)),
        ],
        out_specs=pl.BlockSpec((None, S, D), lambda i: (i, 0, 0)),
        compiler_params=pltpu.CompilerParams(dimension_semantics=("parallel",)),
    )(x, pe_s, g.reshape(1, D), b.reshape(1, D))


# ------------------------- fused decoder layer (one pallas_call) -------------------------

def _attention(xq, kv_ref, wq_ref, bq_ref, wo_ref, bo_ref, ctx_ref, bias, nhead, scale):
    """MHA on one query tile.  kv_ref is the per-batch packed K|V VMEM cache (S, 2D).
    Per-head contexts are written to lane ranges of ctx_ref, then ONE full-width
    (TQ, D) @ (D, D) output projection is applied.  Returns residual + out-proj."""
    D = xq.shape[-1]
    dh = D // nhead
    q = _mm(xq, wq_ref[...]) + bq_ref[...]                      # (TQ, D) f32
    # TODO(synk): replace this static unroll with lax.fori_loop + pl.ds if nhead grows past ~8.
    for h in range(nhead):
        lo = h * dh
        kh = kv_ref[:, lo:lo + dh]                              # (S, dh)
        vh = kv_ref[:, D + lo:D + lo + dh]                      # (S, dh)
        # contract on the head dim directly -- K is never transposed in VMEM
        s = lax.dot_general(q[:, lo:lo + dh].astype(kh.dtype), kh,
                            dimension_numbers=(((1,), (1,)), ((), ())),
                            preferred_element_type=jnp.float32) * scale
        if bias is not None:
            s = s + bias
        s = s - jnp.max(s, axis=-1, keepdims=True)
        p = jnp.exp(s)
        p = p * pl.reciprocal(jnp.sum(p, axis=-1, keepdims=True), approx=False)
        ctx_ref[:, lo:lo + dh] = jnp.dot(p.astype(vh.dtype), vh,
                                         preferred_element_type=jnp.float32
                                         ).astype(ctx_ref.dtype)
    return xq + _mm(ctx_ref[...], wo_ref[...]) + bo_ref[...]


def _decoder_layer_kernel(
        x_ref, mem_ref, pad_ref,
        wq_s_ref, bq_s_ref, wkv_s_ref, bkv_s_ref, wo_s_ref, bo_s_ref, g1_ref, b1_ref,
        wq_c_ref, bq_c_ref, wkv_c_ref, bkv_c_ref, wo_c_ref, bo_c_ref, g2_ref, b2_ref,
        w1_ref, b1f_ref, w2_ref, b2f_ref, g3_ref, b3_ref,
        o_ref,
        kv_self_ref, kv_cross_ref, ctx_ref,
        *, nhead, scale, tq):
    S, D = x_ref.shape
    qi = pl.program_id(1)

    # K/V projections for self- and cross-attention are computed once per batch element
    # (first query tile) and cached in VMEM for all remaining query tiles.
    @pl.when(qi == 0)
    def _():
        kv_self_ref[...] = (_mm(x_ref[...], wkv_s_ref[...])
                            + bkv_s_ref[...]).astype(WEIGHT_DTYPE)
        kv_cross_ref[...] = (_mm(mem_ref[...], wkv_c_ref[...])
                             + bkv_c_ref[...]).astype(WEIGHT_DTYPE)

    q0 = pl.multiple_of(qi * tq, tq)
    xq = x_ref[pl.ds(q0, tq), :]                                # (TQ, D) query tile / residual

    # Self-attention additive bias: causal part generated in-kernel from iota (the (B,S,S)
    # mask is never built in HBM) + tiny (1, S) key-padding bias.
    rows = q0 + lax.broadcasted_iota(jnp.int32, (tq, S), 0)
    cols = lax.broadcasted_iota(jnp.int32, (tq, S), 1)
    self_bias = jnp.where(cols > rows, NEG_INF, 0.0).astype(jnp.float32) + pad_ref[...]

    h1 = _attention(xq, kv_self_ref, wq_s_ref, bq_s_ref, wo_s_ref, bo_s_ref,
                    ctx_ref, self_bias, nhead, scale)
    h1 = _layernorm(h1, g1_ref[...], b1_ref[...])

    # Cross-attention carries no mask in the reference model.
    h2 = _attention(h1, kv_cross_ref, wq_c_ref, bq_c_ref, wo_c_ref, bo_c_ref,
                    ctx_ref, None, nhead, scale)
    h2 = _layernorm(h2, g2_ref[...], b2_ref[...])

    f = jnp.maximum(_mm(h2, w1_ref[...]) + b1f_ref[...], 0.0)
    y = h2 + _mm(f, w2_ref[...]) + b2f_ref[...]
    o_ref[...] = _layernorm(y, g3_ref[...], b3_ref[...]).astype(o_ref.dtype)


def decoder_layer(x, memory, pad_bias, lp, nhead):
    B, S, D = x.shape
    scale = 1.0 / float(np.sqrt(D // nhead))
    TQ = _tile(S, 256, 8)
    NQ = S // TQ
    sa, ca = lp["self_attn"], lp["cross_attn"]

    def vec(v):
        return v.reshape(1, -1)

    weight_args = [
        sa["wq"], vec(sa["bq"]), sa["wkv"], vec(sa["bkv"]), sa["wo"], vec(sa["bo"]),
        vec(lp["ln1_g"]), vec(lp["ln1_b"]),
        ca["wq"], vec(ca["bq"]), ca["wkv"], vec(ca["bkv"]), ca["wo"], vec(ca["bo"]),
        vec(lp["ln2_g"]), vec(lp["ln2_b"]),
        lp["w1"], vec(lp["b1"]), lp["w2"], vec(lp["b2"]),
        vec(lp["ln3_g"]), vec(lp["ln3_b"]),
    ]

    def rep(a):                                  # replicated (constant block index) weight spec
        nd = a.ndim
        return pl.BlockSpec(a.shape, lambda b, q, _nd=nd: (0,) * _nd)

    in_specs = [
        pl.BlockSpec((None, S, D), lambda b, q: (b, 0, 0)),      # x (full seq, for self K/V)
        pl.BlockSpec((None, S, D), lambda b, q: (b, 0, 0)),      # memory (full, for cross K/V)
        pl.BlockSpec((None, 1, S), lambda b, q: (b, 0, 0)),      # key-padding additive bias
    ] + [rep(a) for a in weight_args]

    # VMEM accounting (v7x has only 64 MiB physical): only raise the scoped limit when the
    # resident weights + activation blocks + K/V scratch exceed the 32 MiB default.
    itemsize = np.dtype(WEIGHT_DTYPE).itemsize
    weight_bytes = sum(int(np.prod(a.shape)) * a.dtype.itemsize for a in weight_args)
    act_bytes = 4 * (2 * S * D + S + TQ * D) * 2
    scratch_bytes = 2 * S * 2 * D * itemsize + TQ * D * 4
    est = int(1.25 * (2 * weight_bytes + act_bytes + scratch_bytes))
    vmem_limit = est if est > (32 << 20) else None

    kernel = functools.partial(_decoder_layer_kernel, nhead=nhead, scale=scale, tq=TQ)
    return pl.pallas_call(
        kernel,
        out_shape=jax.ShapeDtypeStruct((B, S, D), jnp.float32),
        grid=(B, NQ),
        in_specs=in_specs,
        out_specs=pl.BlockSpec((None, TQ, D), lambda b, q: (b, q, 0)),
        scratch_shapes=[
            pltpu.VMEM((S, 2 * D), WEIGHT_DTYPE),     # self-attn packed K|V cache
            pltpu.VMEM((S, 2 * D), WEIGHT_DTYPE),     # cross-attn packed K|V cache
            pltpu.VMEM((TQ, D), jnp.float32),         # per-head context, lane-concatenated
        ],
        compiler_params=pltpu.CompilerParams(
            # Batch axis is megacore-parallel; the query axis must stay "arbitrary" so the
            # qi==0 step that fills the K/V caches runs before the other query tiles.
            dimension_semantics=("parallel", "arbitrary"),
            vmem_limit_bytes=vmem_limit,
        ),
    )(x, memory, pad_bias, *weight_args)


# ----------------------------- row/N-tiled output projection -----------------------------

def _linear_kernel(x_ref, w_ref, b_ref, o_ref):
    o_ref[...] = (_mm(x_ref[...], w_ref[...]) + b_ref[...]).astype(o_ref.dtype)


def linear(x2d, w, b):
    M, K = x2d.shape
    N = w.shape[1]
    TM = _tile(M, 512, 8)
    TN = _tile(N, 512, 128)     # lane-dense output tiles for large vocab
    return pl.pallas_call(
        _linear_kernel,
        out_shape=jax.ShapeDtypeStruct((M, N), jnp.float32),
        grid=(M // TM, N // TN),
        in_specs=[
            pl.BlockSpec((TM, K), lambda i, j: (i, 0)),
            pl.BlockSpec((K, TN), lambda i, j: (0, j)),
            pl.BlockSpec((1, TN), lambda i, j: (0, j)),
        ],
        out_specs=pl.BlockSpec((TM, TN), lambda i, j: (i, j)),
        compiler_params=pltpu.CompilerParams(dimension_semantics=("parallel", "parallel")),
    )(x2d, w, b.reshape(1, N))


# ------------------------------------ model glue ------------------------------------

def key_emotions_forward(params, tokens, tgt_mask, tgt_pad_mask, nhead):
    B, S = tokens.shape
    D = params["embedding"].shape[1]
    del tgt_mask  # the causal mask is regenerated in-kernel (assumed == subsequent_mask(S))

    # Embedding gather (tiny, XLA-native) feeding the fused PE-add + LayerNorm kernel.
    # TODO(synk): dropout in PositionalEncoding / decoder layers is identity (eval mode).
    x = jnp.take(params["embedding"], tokens, axis=0)
    x = pe_layernorm(x, params["pe"][:S], params["norm_g"], params["norm_b"])
    memory = x                                               # decoder memory = normed tgt

    # PyTorch mask semantics: True == masked  ->  tiny (B, 1, S) additive key-padding bias.
    pad_bias = jnp.where(tgt_pad_mask, NEG_INF, 0.0).astype(jnp.float32).reshape(B, 1, S)

    for lp in params["layers"]:
        x = decoder_layer(x, memory, pad_bias, lp, nhead)

    logits = linear(x.reshape(B * S, D), params["fc_w"], params["fc_b"])
    return logits.reshape(B, S, -1)


def positional_encoding(d_model, max_len=1400):
    position = np.arange(max_len, dtype=np.float32)[:, None]
    div_term = np.exp(np.arange(0, d_model, 2, dtype=np.float32) * (-np.log(10000.0) / d_model))
    pe = np.zeros((max_len, d_model), dtype=np.float32)
    pe[:, 0::2] = np.sin(position * div_term)
    pe[:, 1::2] = np.cos(position * div_term)
    return jnp.asarray(pe)


def init_params(key, vocab_size, d_model, nhead, num_layers, d_ff):
    keys = iter(jax.random.split(key, 256))

    def w(shape, scale=0.02, dtype=WEIGHT_DTYPE):
        return (scale * jax.random.normal(next(keys), shape)).astype(dtype)

    def attn_params():
        return {"wq": w((d_model, d_model)), "bq": jnp.zeros((d_model,), jnp.float32),
                "wkv": w((d_model, 2 * d_model)),                    # packed K|V projection
                "bkv": jnp.zeros((2 * d_model,), jnp.float32),
                "wo": w((d_model, d_model)), "bo": jnp.zeros((d_model,), jnp.float32)}

    layers = []
    for _ in range(num_layers):
        layers.append({
            "self_attn": attn_params(),
            "cross_attn": attn_params(),
            "w1": w((d_model, d_ff)), "b1": jnp.zeros((d_ff,), jnp.float32),
            "w2": w((d_ff, d_model)), "b2": jnp.zeros((d_model,), jnp.float32),
            "ln1_g": jnp.ones((d_model,), jnp.float32), "ln1_b": jnp.zeros((d_model,), jnp.float32),
            "ln2_g": jnp.ones((d_model,), jnp.float32), "ln2_b": jnp.zeros((d_model,), jnp.float32),
            "ln3_g": jnp.ones((d_model,), jnp.float32), "ln3_b": jnp.zeros((d_model,), jnp.float32),
        })

    return {
        "embedding": w((vocab_size, d_model), scale=1.0, dtype=jnp.float32),
        "pe": positional_encoding(d_model),
        "norm_g": jnp.ones((d_model,), jnp.float32),
        "norm_b": jnp.zeros((d_model,), jnp.float32),
        "layers": layers,
        "fc_w": w((d_model, vocab_size)),
        "fc_b": jnp.zeros((vocab_size,), jnp.float32),
    }


if __name__ == "__main__":
    vocab_size, d_model, nhead, num_layers, d_ff = 32, 32, 2, 2, 64
    B, S, pad_idx = 2, 8, 0

    key = jax.random.PRNGKey(0)
    pkey, tkey = jax.random.split(key)
    params = init_params(pkey, vocab_size, d_model, nhead, num_layers, d_ff)

    tokens = jax.random.randint(tkey, (B, S), 1, vocab_size, dtype=jnp.int32)
    tokens = tokens.at[1, -1].set(pad_idx)                                   # exercise padding mask

    tgt_mask = jnp.triu(jnp.ones((S, S), jnp.float32), k=1).astype(bool)     # subsequent_mask
    tgt_pad_mask = tokens == pad_idx                                          # create_pad_mask

    fwd = jax.jit(functools.partial(key_emotions_forward, nhead=nhead))
    out = jax.block_until_ready(fwd(params, tokens, tgt_mask, tgt_pad_mask))

    assert out.shape == (B, S, vocab_size)
    assert bool(jnp.all(jnp.isfinite(out)))
    print("KERNEL_OK")
</pallas_src>

<mosaic_0001>
module attributes {stable_mosaic.version = 11 : i64} {
  func.func @_pe_ln_kernel(%arg0: i32, %arg1: memref<1x8x32xf32, #tpu.memory_space<vmem>>, %arg2: memref<8x32xf32, #tpu.memory_space<vmem>>, %arg3: memref<1x32xf32, #tpu.memory_space<vmem>>, %arg4: memref<1x32xf32, #tpu.memory_space<vmem>>, %arg5: memref<1x8x32xf32, #tpu.memory_space<vmem>>) attributes {dimension_semantics = [#tpu.dimension_semantics<parallel>], iteration_bounds = array<i64: 2>, scalar_prefetch = 0 : i64, scratch_operands = 0 : i64, tpu.core_type = #tpu.core_type<tc>, window_params = [{transform_indices = @transform_0, window_bounds = array<i64: 1, 8, 32>}, {pipeline_mode = #tpu.pipeline_mode<synchronous>, transform_indices = @transform_1, window_bounds = array<i64: 8, 32>}, {pipeline_mode = #tpu.pipeline_mode<synchronous>, transform_indices = @transform_2, window_bounds = array<i64: 1, 32>}, {pipeline_mode = #tpu.pipeline_mode<synchronous>, transform_indices = @transform_3, window_bounds = array<i64: 1, 32>}, {transform_indices = @transform_4, window_bounds = array<i64: 1, 8, 32>}]} {
    %c0 = arith.constant 0 : index
    %c0_0 = arith.constant 0 : index
    %c0_1 = arith.constant 0 : index
    %0 = vector.load %arg1[%c0, %c0_0, %c0_1] : memref<1x8x32xf32, #tpu.memory_space<vmem>>, vector<1x8x32xf32>
    %1 = vector.shape_cast %0 : vector<1x8x32xf32> to vector<8x32xf32>
    %c0_2 = arith.constant 0 : index
    %c0_3 = arith.constant 0 : index
    %2 = vector.load %arg2[%c0_2, %c0_3] : memref<8x32xf32, #tpu.memory_space<vmem>>, vector<8x32xf32>
    %3 = arith.addf %1, %2 : vector<8x32xf32>
    %c0_4 = arith.constant 0 : index
    %c0_5 = arith.constant 0 : index
    %4 = vector.load %arg3[%c0_4, %c0_5] : memref<1x32xf32, #tpu.memory_space<vmem>>, vector<1x32xf32>
    %c0_6 = arith.constant 0 : index
    %c0_7 = arith.constant 0 : index
    %5 = vector.load %arg4[%c0_6, %c0_7] : memref<1x32xf32, #tpu.memory_space<vmem>>, vector<1x32xf32>
    %cst = arith.constant dense<0.000000e+00> : vector<8xf32>
    %6 = vector.multi_reduction <add>, %3, %cst [1] : vector<8x32xf32> to vector<8xf32>
    %7 = vector.shape_cast %6 : vector<8xf32> to vector<8x1xf32>
    %cst_8 = arith.constant 3.200000e+01 : f32
    %8 = vector.broadcast %cst_8 : f32 to vector<8x1xf32>
    %9 = arith.divf %7, %8 : vector<8x1xf32>
    %10 = vector.broadcast %9 : vector<8x1xf32> to vector<8x32xf32>
    %11 = arith.subf %3, %10 : vector<8x32xf32>
    %12 = arith.mulf %11, %11 : vector<8x32xf32>
    %cst_9 = arith.constant dense<0.000000e+00> : vector<8xf32>
    %13 = vector.multi_reduction <add>, %12, %cst_9 [1] : vector<8x32xf32> to vector<8xf32>
    %14 = vector.shape_cast %13 : vector<8xf32> to vector<8x1xf32>
    %cst_10 = arith.constant 3.200000e+01 : f32
    %15 = vector.broadcast %cst_10 : f32 to vector<8x1xf32>
    %16 = arith.divf %14, %15 : vector<8x1xf32>
    %cst_11 = arith.constant 9.99999974E-6 : f32
    %17 = vector.broadcast %cst_11 : f32 to vector<8x1xf32>
    %18 = arith.addf %16, %17 : vector<8x1xf32>
    %19 = math.rsqrt %18 : vector<8x1xf32>
    %20 = vector.broadcast %19 : vector<8x1xf32> to vector<8x32xf32>
    %21 = arith.mulf %11, %20 : vector<8x32xf32>
    %22 = vector.broadcast %4 : vector<1x32xf32> to vector<8x32xf32>
    %23 = arith.mulf %21, %22 : vector<8x32xf32>
    %24 = vector.broadcast %5 : vector<1x32xf32> to vector<8x32xf32>
    %25 = arith.addf %23, %24 : vector<8x32xf32>
    %c0_12 = arith.constant 0 : index
    %c0_13 = arith.constant 0 : index
    %c0_14 = arith.constant 0 : index
    %26 = vector.load %arg5[%c0_12, %c0_13, %c0_14] : memref<1x8x32xf32, #tpu.memory_space<vmem>>, vector<1x8x32xf32>
    %27 = vector.shape_cast %26 : vector<1x8x32xf32> to vector<8x32xf32>
    %28 = vector.shape_cast %25 : vector<8x32xf32> to vector<1x8x32xf32>
    tpu.vector_store %arg5[%c0_12, %c0_13, %c0_14], %28 {strides = array<i32>} : memref<1x8x32xf32, #tpu.memory_space<vmem>>, vector<1x8x32xf32>,
    return
  }
  func.func @transform_0(%arg0: i32) -> (i32, i32, i32) {
    %c0_i32 = arith.constant 0 : i32
    %c0_i32_0 = arith.constant 0 : i32
    %c0_i32_1 = arith.constant 0 : i32
    return %arg0, %c0_i32, %c0_i32_0 : i32, i32, i32
  }
  func.func @transform_1(%arg0: i32) -> (i32, i32) {
    %c0_i32 = arith.constant 0 : i32
    %c0_i32_0 = arith.constant 0 : i32
    %c0_i32_1 = arith.constant 0 : i32
    return %c0_i32, %c0_i32_0 : i32, i32
  }
  func.func @transform_2(%arg0: i32) -> (i32, i32) {
    %c0_i32 = arith.constant 0 : i32
    %c0_i32_0 = arith.constant 0 : i32
    %c0_i32_1 = arith.constant 0 : i32
    return %c0_i32, %c0_i32_0 : i32, i32
  }
  func.func @transform_3(%arg0: i32) -> (i32, i32) {
    %c0_i32 = arith.constant 0 : i32
    %c0_i32_0 = arith.constant 0 : i32
    %c0_i32_1 = arith.constant 0 : i32
    return %c0_i32, %c0_i32_0 : i32, i32
  }
  func.func @transform_4(%arg0: i32) -> (i32, i32, i32) {
    %c0_i32 = arith.constant 0 : i32
    %c0_i32_0 = arith.constant 0 : i32
    %c0_i32_1 = arith.constant 0 : i32
    return %arg0, %c0_i32, %c0_i32_0 : i32, i32, i32
  }
}

module attributes {stable_mosaic.version = 11 : i64} {
  func.func @_linear_kernel(%arg0: i32, %arg1: i32, %arg2: memref<16x32xf32, #tpu.memory_space<vmem>>, %arg3: memref<32x32xbf16, #tpu.memory_space<vmem>>, %arg4: memref<1x32xf32, #tpu.memory_space<vmem>>, %arg5: memref<16x32xf32, #tpu.memory_space<vmem>>) attributes {dimension_semantics = [#tpu.dimension_semantics<parallel>, #tpu.dimension_semantics<parallel>], iteration_bounds = array<i64: 1, 1>, scalar_prefetch = 0 : i64, scratch_operands = 0 : i64, tpu.core_type = #tpu.core_type<tc>, window_params = [{transform_indices = @transform_0, window_bounds = array<i64: 16, 32>}, {transform_indices = @transform_1, window_bounds = array<i64: 32, 32>}, {transform_indices = @transform_2, window_bounds = array<i64: 1, 32>}, {transform_indices = @transform_3, window_bounds = array<i64: 16, 32>}]} {
    %c0 = arith.constant 0 : index
    %c0_0 = arith.constant 0 : index
    %0 = vector.load %arg2[%c0, %c0_0] : memref<16x32xf32, #tpu.memory_space<vmem>>, vector<16x32xf32>
    %c0_1 = arith.constant 0 : index
    %c0_2 = arith.constant 0 : index
    %1 = vector.load %arg3[%c0_1, %c0_2] : memref<32x32xbf16, #tpu.memory_space<vmem>>, vector<32x32xbf16>
    %2 = arith.truncf %0 : vector<16x32xf32> to vector<16x32xbf16>
    %cst = arith.constant dense<0.000000e+00> : vector<16x32xf32>
    %3 = tpu.matmul %2, %1, %cst {dimension_numbers = #tpu.dot_dimension_numbers<[1], [0], [0], [1], [0, 0, 1, 1], [], []>} : vector<16x32xbf16>, vector<32x32xbf16>, vector<16x32xf32> -> vector<16x32xf32>
    %c0_3 = arith.constant 0 : index
    %c0_4 = arith.constant 0 : index
    %4 = vector.load %arg4[%c0_3, %c0_4] : memref<1x32xf32, #tpu.memory_space<vmem>>, vector<1x32xf32>
    %5 = vector.broadcast %4 : vector<1x32xf32> to vector<16x32xf32>
    %6 = arith.addf %3, %5 : vector<16x32xf32>
    %c0_5 = arith.constant 0 : index
    %c0_6 = arith.constant 0 : index
    %7 = vector.load %arg5[%c0_5, %c0_6] : memref<16x32xf32, #tpu.memory_space<vmem>>, vector<16x32xf32>
    tpu.vector_store %arg5[%c0_5, %c0_6], %6 {strides = array<i32>} : memref<16x32xf32, #tpu.memory_space<vmem>>, vector<16x32xf32>,
    return
  }
  func.func @transform_0(%arg0: i32, %arg1: i32) -> (i32, i32) {
    %c0_i32 = arith.constant 0 : i32
    %c0_i32_0 = arith.constant 0 : i32
    return %arg0, %c0_i32 : i32, i32
  }
  func.func @transform_1(%arg0: i32, %arg1: i32) -> (i32, i32) {
    %c0_i32 = arith.constant 0 : i32
    %c0_i32_0 = arith.constant 0 : i32
    return %c0_i32, %arg1 : i32, i32
  }
  func.func @transform_2(%arg0: i32, %arg1: i32) -> (i32, i32) {
    %c0_i32 = arith.constant 0 : i32
    %c0_i32_0 = arith.constant 0 : i32
    return %c0_i32, %arg1 : i32, i32
  }
  func.func @transform_3(%arg0: i32, %arg1: i32) -> (i32, i32) {
    %c0_i32 = arith.constant 0 : i32
    return %arg0, %arg1 : i32, i32
  }
}

module attributes {stable_mosaic.version = 11 : i64} {
  func.func @_decoder_layer_kernel(%arg0: i32, %arg1: i32, %arg2: memref<1x8x32xf32, #tpu.memory_space<vmem>>, %arg3: memref<1x8x32xf32, #tpu.memory_space<vmem>>, %arg4: memref<1x1x8xf32, #tpu.memory_space<vmem>>, %arg5: memref<32x32xbf16, #tpu.memory_space<vmem>>, %arg6: memref<1x32xf32, #tpu.memory_space<vmem>>, %arg7: memref<32x64xbf16, #tpu.memory_space<vmem>>, %arg8: memref<1x64xf32, #tpu.memory_space<vmem>>, %arg9: memref<32x32xbf16, #tpu.memory_space<vmem>>, %arg10: memref<1x32xf32, #tpu.memory_space<vmem>>, %arg11: memref<1x32xf32, #tpu.memory_space<vmem>>, %arg12: memref<1x32xf32, #tpu.memory_space<vmem>>, %arg13: memref<32x32xbf16, #tpu.memory_space<vmem>>, %arg14: memref<1x32xf32, #tpu.memory_space<vmem>>, %arg15: memref<32x64xbf16, #tpu.memory_space<vmem>>, %arg16: memref<1x64xf32, #tpu.memory_space<vmem>>, %arg17: memref<32x32xbf16, #tpu.memory_space<vmem>>, %arg18: memref<1x32xf32, #tpu.memory_space<vmem>>, %arg19: memref<1x32xf32, #tpu.memory_space<vmem>>, %arg20: memref<1x32xf32, #tpu.memory_space<vmem>>, %arg21: memref<32x64xbf16, #tpu.memory_space<vmem>>, %arg22: memref<1x64xf32, #tpu.memory_space<vmem>>, %arg23: memref<64x32xbf16, #tpu.memory_space<vmem>>, %arg24: memref<1x32xf32, #tpu.memory_space<vmem>>, %arg25: memref<1x32xf32, #tpu.memory_space<vmem>>, %arg26: memref<1x32xf32, #tpu.memory_space<vmem>>, %arg27: memref<1x8x32xf32, #tpu.memory_space<vmem>>, %arg28: memref<8x64xbf16, #tpu.memory_space<vmem>>, %arg29: memref<8x64xbf16, #tpu.memory_space<vmem>>, %arg30: memref<8x32xf32, #tpu.memory_space<vmem>>) attributes {dimension_semantics = [#tpu.dimension_semantics<parallel>, #tpu.dimension_semantics<arbitrary>], iteration_bounds = array<i64: 2, 1>, scalar_prefetch = 0 : i64, scratch_operands = 3 : i64, tpu.core_type = #tpu.core_type<tc>, window_params = [{transform_indices = @transform_0, window_bounds = array<i64: 1, 8, 32>}, {transform_indices = @transform_1, window_bounds = array<i64: 1, 8, 32>}, {transform_indices = @transform_2, window_bounds = array<i64: 1, 1, 8>}, {pipeline_mode = #tpu.pipeline_mode<synchronous>, transform_indices = @transform_3, window_bounds = array<i64: 32, 32>}, {pipeline_mode = #tpu.pipeline_mode<synchronous>, transform_indices = @transform_4, window_bounds = array<i64: 1, 32>}, {pipeline_mode = #tpu.pipeline_mode<synchronous>, transform_indices = @transform_5, window_bounds = array<i64: 32, 64>}, {pipeline_mode = #tpu.pipeline_mode<synchronous>, transform_indices = @transform_6, window_bounds = array<i64: 1, 64>}, {pipeline_mode = #tpu.pipeline_mode<synchronous>, transform_indices = @transform_7, window_bounds = array<i64: 32, 32>}, {pipeline_mode = #tpu.pipeline_mode<synchronous>, transform_indices = @transform_8, window_bounds = array<i64: 1, 32>}, {pipeline_mode = #tpu.pipeline_mode<synchronous>, transform_indices = @transform_9, window_bounds = array<i64: 1, 32>}, {pipeline_mode = #tpu.pipeline_mode<synchronous>, transform_indices = @transform_10, window_bounds = array<i64: 1, 32>}, {pipeline_mode = #tpu.pipeline_mode<synchronous>, transform_indices = @transform_11, window_bounds = array<i64: 32, 32>}, {pipeline_mode = #tpu.pipeline_mode<synchronous>, transform_indices = @transform_12, window_bounds = array<i64: 1, 32>}, {pipeline_mode = #tpu.pipeline_mode<synchronous>, transform_indices = @transform_13, window_bounds = array<i64: 32, 64>}, {pipeline_mode = #tpu.pipeline_mode<synchronous>, transform_indices = @transform_14, window_bounds = array<i64: 1, 64>}, {pipeline_mode = #tpu.pipeline_mode<synchronous>, transform_indices = @transform_15, window_bounds = array<i64: 32, 32>}, {pipeline_mode = #tpu.pipeline_mode<synchronous>, transform_indices = @transform_16, window_bounds = array<i64: 1, 32>}, {pipeline_mode = #tpu.pipeline_mode<synchronous>, transform_indices = @transform_17, window_bounds = array<i64: 1, 32>}, {pipeline_mode = #tpu.pipeline_mode<synchronous>, transform_indices = @transform_18, window_bounds = array<i64: 1, 32>}, {pipeline_mode = #tpu.pipeline_mode<synchronous>, transform_indices = @transform_19, window_bounds = array<i64: 32, 64>}, {pipeline_mode = #tpu.pipeline_mode<synchronous>, transform_indices = @transform_20, window_bounds = array<i64: 1, 64>}, {pipeline_mode = #tpu.pipeline_mode<synchronous>, transform_indices = @transform_21, window_bounds = array<i64: 64, 32>}, {pipeline_mode = #tpu.pipeline_mode<synchronous>, transform_indices = @transform_22, window_bounds = array<i64: 1, 32>}, {pipeline_mode = #tpu.pipeline_mode<synchronous>, transform_indices = @transform_23, window_bounds = array<i64: 1, 32>}, {pipeline_mode = #tpu.pipeline_mode<synchronous>, transform_indices = @transform_24, window_bounds = array<i64: 1, 32>}, {transform_indices = @transform_25, window_bounds = array<i64: 1, 8, 32>}]} {
    %c0_i32 = arith.constant 0 : i32
    %0 = arith.cmpi eq, %arg1, %c0_i32 : i32
    %1 = arith.extui %0 : i1 to i32
    %c0_i32_0 = arith.constant 0 : i32
    %2 = arith.cmpi ne, %1, %c0_i32_0 : i32
    scf.if %2 {
      %c0_112 = arith.constant 0 : index
      %c0_113 = arith.constant 0 : index
      %c0_114 = arith.constant 0 : index
      %214 = vector.load %arg2[%c0_112, %c0_113, %c0_114] : memref<1x8x32xf32, #tpu.memory_space<vmem>>, vector<1x8x32xf32>
      %215 = vector.shape_cast %214 : vector<1x8x32xf32> to vector<8x32xf32>
      %c0_115 = arith.constant 0 : index
      %c0_116 = arith.constant 0 : index
      %216 = vector.load %arg7[%c0_115, %c0_116] : memref<32x64xbf16, #tpu.memory_space<vmem>>, vector<32x64xbf16>
      %217 = arith.truncf %215 : vector<8x32xf32> to vector<8x32xbf16>
      %cst_117 = arith.constant dense<0.000000e+00> : vector<8x64xf32>
      %218 = tpu.matmul %217, %216, %cst_117 {dimension_numbers = #tpu.dot_dimension_numbers<[1], [0], [0], [1], [0, 0, 1, 1], [], []>} : vector<8x32xbf16>, vector<32x64xbf16>, vector<8x64xf32> -> vector<8x64xf32>
      %c0_118 = arith.constant 0 : index
      %c0_119 = arith.constant 0 : index
      %219 = vector.load %arg8[%c0_118, %c0_119] : memref<1x64xf32, #tpu.memory_space<vmem>>, vector<1x64xf32>
      %220 = vector.broadcast %219 : vector<1x64xf32> to vector<8x64xf32>
      %221 = arith.addf %218, %220 : vector<8x64xf32>
      %222 = arith.truncf %221 : vector<8x64xf32> to vector<8x64xbf16>
      %c0_120 = arith.constant 0 : index
      %c0_121 = arith.constant 0 : index
      %223 = vector.load %arg28[%c0_120, %c0_121] : memref<8x64xbf16, #tpu.memory_space<vmem>>, vector<8x64xbf16>
      tpu.vector_store %arg28[%c0_120, %c0_121], %222 {strides = array<i32>} : memref<8x64xbf16, #tpu.memory_space<vmem>>, vector<8x64xbf16>,
      %c0_122 = arith.constant 0 : index
      %c0_123 = arith.constant 0 : index
      %c0_124 = arith.constant 0 : index
      %224 = vector.load %arg3[%c0_122, %c0_123, %c0_124] : memref<1x8x32xf32, #tpu.memory_space<vmem>>, vector<1x8x32xf32>
      %225 = vector.shape_cast %224 : vector<1x8x32xf32> to vector<8x32xf32>
      %c0_125 = arith.constant 0 : index
      %c0_126 = arith.constant 0 : index
      %226 = vector.load %arg15[%c0_125, %c0_126] : memref<32x64xbf16, #tpu.memory_space<vmem>>, vector<32x64xbf16>
      %227 = arith.truncf %225 : vector<8x32xf32> to vector<8x32xbf16>
      %cst_127 = arith.constant dense<0.000000e+00> : vector<8x64xf32>
      %228 = tpu.matmul %227, %226, %cst_127 {dimension_numbers = #tpu.dot_dimension_numbers<[1], [0], [0], [1], [0, 0, 1, 1], [], []>} : vector<8x32xbf16>, vector<32x64xbf16>, vector<8x64xf32> -> vector<8x64xf32>
      %c0_128 = arith.constant 0 : index
      %c0_129 = arith.constant 0 : index
      %229 = vector.load %arg16[%c0_128, %c0_129] : memref<1x64xf32, #tpu.memory_space<vmem>>, vector<1x64xf32>
      %230 = vector.broadcast %229 : vector<1x64xf32> to vector<8x64xf32>
      %231 = arith.addf %228, %230 : vector<8x64xf32>
      %232 = arith.truncf %231 : vector<8x64xf32> to vector<8x64xbf16>
      %c0_130 = arith.constant 0 : index
      %c0_131 = arith.constant 0 : index
      %233 = vector.load %arg29[%c0_130, %c0_131] : memref<8x64xbf16, #tpu.memory_space<vmem>>, vector<8x64xbf16>
      tpu.vector_store %arg29[%c0_130, %c0_131], %232 {strides = array<i32>} : memref<8x64xbf16, #tpu.memory_space<vmem>>, vector<8x64xbf16>,
    } else {
    }
    %c8_i32 = arith.constant 8 : i32
    %3 = arith.muli %arg1, %c8_i32 : i32
    %4 = tpu.assume_multiple %3, 8 : i32
    %c0 = arith.constant 0 : index
    %5 = arith.index_cast %4 : i32 to index
    %c0_1 = arith.constant 0 : index
    %6 = vector.load %arg2[%c0, %5, %c0_1] : memref<1x8x32xf32, #tpu.memory_space<vmem>>, vector<1x8x32xf32>
    %7 = vector.shape_cast %6 : vector<1x8x32xf32> to vector<8x32xf32>
    %8 = tpu.iota {dimensions = array<i32: 0>} : vector<8x8xi32>
    %9 = vector.broadcast %4 : i32 to vector<8x8xi32>
    %10 = arith.addi %9, %8 : vector<8x8xi32>
    %11 = tpu.iota {dimensions = array<i32: 1>} : vector<8x8xi32>
    %12 = arith.cmpi sgt, %11, %10 : vector<8x8xi32>
    %cst = arith.constant -1.000000e+09 : f32
    %cst_2 = arith.constant 0.000000e+00 : f32
    %13 = vector.broadcast %cst : f32 to vector<8x8xf32>
    %14 = vector.broadcast %cst_2 : f32 to vector<8x8xf32>
    %15 = arith.select %12, %13, %14 : vector<8x8xi1>, vector<8x8xf32>
    %c0_3 = arith.constant 0 : index
    %c0_4 = arith.constant 0 : index
    %c0_5 = arith.constant 0 : index
    %16 = vector.load %arg4[%c0_3, %c0_4, %c0_5] : memref<1x1x8xf32, #tpu.memory_space<vmem>>, vector<1x1x8xf32>
    %17 = vector.shape_cast %16 : vector<1x1x8xf32> to vector<1x8xf32>
    %18 = vector.broadcast %17 : vector<1x8xf32> to vector<8x8xf32>
    %19 = arith.addf %15, %18 : vector<8x8xf32>
    %c0_6 = arith.constant 0 : index
    %c0_7 = arith.constant 0 : index
    %20 = vector.load %arg5[%c0_6, %c0_7] : memref<32x32xbf16, #tpu.memory_space<vmem>>, vector<32x32xbf16>
    %21 = arith.truncf %7 : vector<8x32xf32> to vector<8x32xbf16>
    %cst_8 = arith.constant dense<0.000000e+00> : vector<8x32xf32>
    %22 = tpu.matmul %21, %20, %cst_8 {dimension_numbers = #tpu.dot_dimension_numbers<[1], [0], [0], [1], [0, 0, 1, 1], [], []>} : vector<8x32xbf16>, vector<32x32xbf16>, vector<8x32xf32> -> vector<8x32xf32>
    %c0_9 = arith.constant 0 : index
    %c0_10 = arith.constant 0 : index
    %23 = vector.load %arg6[%c0_9, %c0_10] : memref<1x32xf32, #tpu.memory_space<vmem>>, vector<1x32xf32>
    %24 = vector.broadcast %23 : vector<1x32xf32> to vector<8x32xf32>
    %25 = arith.addf %22, %24 : vector<8x32xf32>
    %c0_11 = arith.constant 0 : index
    %c0_12 = arith.constant 0 : index
    %26 = vector.load %arg28[%c0_11, %c0_12] : memref<8x64xbf16, #tpu.memory_space<vmem>>, vector<8x16xbf16>
    %c0_13 = arith.constant 0 : index
    %c32 = arith.constant 32 : index
    %27 = vector.load %arg28[%c0_13, %c32] : memref<8x64xbf16, #tpu.memory_space<vmem>>, vector<8x16xbf16>
    %28 = vector.extract_strided_slice %25 {offsets = [0, 0], sizes = [8, 16], strides = [1, 1]} : vector<8x32xf32> to vector<8x16xf32>
    %29 = arith.truncf %28 : vector<8x16xf32> to vector<8x16xbf16>
    %cst_14 = arith.constant dense<0.000000e+00> : vector<8x8xf32>
    %30 = tpu.matmul %29, %26, %cst_14 {dimension_numbers = #tpu.dot_dimension_numbers<[1], [1], [0], [0], [0, 0, 1, 0], [], []>} : vector<8x16xbf16>, vector<8x16xbf16>, vector<8x8xf32> -> vector<8x8xf32>
    %cst_15 = arith.constant 2.500000e-01 : f32
    %31 = vector.broadcast %cst_15 : f32 to vector<8x8xf32>
    %32 = arith.mulf %30, %31 : vector<8x8xf32>
    %33 = arith.addf %32, %19 : vector<8x8xf32>
    %cst_16 = arith.constant dense<0xFF800000> : vector<8xf32>
    %34 = vector.multi_reduction <maximumf>, %33, %cst_16 [1] : vector<8x8xf32> to vector<8xf32>
    %35 = vector.shape_cast %34 : vector<8xf32> to vector<8x1xf32>
    %36 = vector.broadcast %35 : vector<8x1xf32> to vector<8x8xf32>
    %37 = arith.subf %33, %36 : vector<8x8xf32>
    %38 = math.exp %37 : vector<8x8xf32>
    %cst_17 = arith.constant dense<0.000000e+00> : vector<8xf32>
    %39 = vector.multi_reduction <add>, %38, %cst_17 [1] : vector<8x8xf32> to vector<8xf32>
    %40 = vector.shape_cast %39 : vector<8xf32> to vector<8x1xf32>
    %41 = tpu.reciprocal %40 : vector<8x1xf32> -> vector<8x1xf32>
    %42 = vector.broadcast %41 : vector<8x1xf32> to vector<8x8xf32>
    %43 = arith.mulf %38, %42 : vector<8x8xf32>
    %44 = arith.truncf %43 : vector<8x8xf32> to vector<8x8xbf16>
    %cst_18 = arith.constant dense<0.000000e+00> : vector<8x16xf32>
    %45 = tpu.matmul %44, %27, %cst_18 {dimension_numbers = #tpu.dot_dimension_numbers<[1], [0], [0], [1], [0, 0, 1, 1], [], []>} : vector<8x8xbf16>, vector<8x16xbf16>, vector<8x16xf32> -> vector<8x16xf32>
    %c0_19 = arith.constant 0 : index
    %c0_20 = arith.constant 0 : index
    %46 = vector.load %arg30[%c0_19, %c0_20] : memref<8x32xf32, #tpu.memory_space<vmem>>, vector<8x16xf32>
    tpu.vector_store %arg30[%c0_19, %c0_20], %45 {strides = array<i32>} : memref<8x32xf32, #tpu.memory_space<vmem>>, vector<8x16xf32>,
    %c0_21 = arith.constant 0 : index
    %c16 = arith.constant 16 : index
    %47 = vector.load %arg28[%c0_21, %c16] : memref<8x64xbf16, #tpu.memory_space<vmem>>, vector<8x16xbf16>
    %c0_22 = arith.constant 0 : index
    %c48 = arith.constant 48 : index
    %48 = vector.load %arg28[%c0_22, %c48] : memref<8x64xbf16, #tpu.memory_space<vmem>>, vector<8x16xbf16>
    %49 = vector.extract_strided_slice %25 {offsets = [0, 16], sizes = [8, 16], strides = [1, 1]} : vector<8x32xf32> to vector<8x16xf32>
    %50 = arith.truncf %49 : vector<8x16xf32> to vector<8x16xbf16>
    %cst_23 = arith.constant dense<0.000000e+00> : vector<8x8xf32>
    %51 = tpu.matmul %50, %47, %cst_23 {dimension_numbers = #tpu.dot_dimension_numbers<[1], [1], [0], [0], [0, 0, 1, 0], [], []>} : vector<8x16xbf16>, vector<8x16xbf16>, vector<8x8xf32> -> vector<8x8xf32>
    %cst_24 = arith.constant 2.500000e-01 : f32
    %52 = vector.broadcast %cst_24 : f32 to vector<8x8xf32>
    %53 = arith.mulf %51, %52 : vector<8x8xf32>
    %54 = arith.addf %53, %19 : vector<8x8xf32>
    %cst_25 = arith.constant dense<0xFF800000> : vector<8xf32>
    %55 = vector.multi_reduction <maximumf>, %54, %cst_25 [1] : vector<8x8xf32> to vector<8xf32>
    %56 = vector.shape_cast %55 : vector<8xf32> to vector<8x1xf32>
    %57 = vector.broadcast %56 : vector<8x1xf32> to vector<8x8xf32>
    %58 = arith.subf %54, %57 : vector<8x8xf32>
    %59 = math.exp %58 : vector<8x8xf32>
    %cst_26 = arith.constant dense<0.000000e+00> : vector<8xf32>
    %60 = vector.multi_reduction <add>, %59, %cst_26 [1] : vector<8x8xf32> to vector<8xf32>
    %61 = vector.shape_cast %60 : vector<8xf32> to vector<8x1xf32>
    %62 = tpu.reciprocal %61 : vector<8x1xf32> -> vector<8x1xf32>
    %63 = vector.broadcast %62 : vector<8x1xf32> to vector<8x8xf32>
    %64 = arith.mulf %59, %63 : vector<8x8xf32>
    %65 = arith.truncf %64 : vector<8x8xf32> to vector<8x8xbf16>
    %cst_27 = arith.constant dense<0.000000e+00> : vector<8x16xf32>
    %66 = tpu.matmul %65, %48, %cst_27 {dimension_numbers = #tpu.dot_dimension_numbers<[1], [0], [0], [1], [0, 0, 1, 1], [], []>} : vector<8x8xbf16>, vector<8x16xbf16>, vector<8x16xf32> -> vector<8x16xf32>
    %c0_28 = arith.constant 0 : index
    %c16_29 = arith.constant 16 : index
    %67 = vector.load %arg30[%c0_28, %c16_29] : memref<8x32xf32, #tpu.memory_space<vmem>>, vector<8x16xf32>
    tpu.vector_store %arg30[%c0_28, %c16_29], %66 {strides = array<i32>} : memref<8x32xf32, #tpu.memory_space<vmem>>, vector<8x16xf32>,
    %c0_30 = arith.constant 0 : index
    %c0_31 = arith.constant 0 : index
    %68 = vector.load %arg30[%c0_30, %c0_31] : memref<8x32xf32, #tpu.memory_space<vmem>>, vector<8x32xf32>
    %c0_32 = arith.constant 0 : index
    %c0_33 = arith.constant 0 : index
    %69 = vector.load %arg9[%c0_32, %c0_33] : memref<32x32xbf16, #tpu.memory_space<vmem>>, vector<32x32xbf16>
    %70 = arith.truncf %68 : vector<8x32xf32> to vector<8x32xbf16>
    %cst_34 = arith.constant dense<0.000000e+00> : vector<8x32xf32>
    %71 = tpu.matmul %70, %69, %cst_34 {dimension_numbers = #tpu.dot_dimension_numbers<[1], [0], [0], [1], [0, 0, 1, 1], [], []>} : vector<8x32xbf16>, vector<32x32xbf16>, vector<8x32xf32> -> vector<8x32xf32>
    %72 = arith.addf %7, %71 : vector<8x32xf32>
    %c0_35 = arith.constant 0 : index
    %c0_36 = arith.constant 0 : index
    %73 = vector.load %arg10[%c0_35, %c0_36] : memref<1x32xf32, #tpu.memory_space<vmem>>, vector<1x32xf32>
    %74 = vector.broadcast %73 : vector<1x32xf32> to vector<8x32xf32>
    %75 = arith.addf %72, %74 : vector<8x32xf32>
    %c0_37 = arith.constant 0 : index
    %c0_38 = arith.constant 0 : index
    %76 = vector.load %arg11[%c0_37, %c0_38] : memref<1x32xf32, #tpu.memory_space<vmem>>, vector<1x32xf32>
    %c0_39 = arith.constant 0 : index
    %c0_40 = arith.constant 0 : index
    %77 = vector.load %arg12[%c0_39, %c0_40] : memref<1x32xf32, #tpu.memory_space<vmem>>, vector<1x32xf32>
    %cst_41 = arith.constant dense<0.000000e+00> : vector<8xf32>
    %78 = vector.multi_reduction <add>, %75, %cst_41 [1] : vector<8x32xf32> to vector<8xf32>
    %79 = vector.shape_cast %78 : vector<8xf32> to vector<8x1xf32>
    %cst_42 = arith.constant 3.200000e+01 : f32
    %80 = vector.broadcast %cst_42 : f32 to vector<8x1xf32>
    %81 = arith.divf %79, %80 : vector<8x1xf32>
    %82 = vector.broadcast %81 : vector<8x1xf32> to vector<8x32xf32>
    %83 = arith.subf %75, %82 : vector<8x32xf32>
    %84 = arith.mulf %83, %83 : vector<8x32xf32>
    %cst_43 = arith.constant dense<0.000000e+00> : vector<8xf32>
    %85 = vector.multi_reduction <add>, %84, %cst_43 [1] : vector<8x32xf32> to vector<8xf32>
    %86 = vector.shape_cast %85 : vector<8xf32> to vector<8x1xf32>
    %cst_44 = arith.constant 3.200000e+01 : f32
    %87 = vector.broadcast %cst_44 : f32 to vector<8x1xf32>
    %88 = arith.divf %86, %87 : vector<8x1xf32>
    %cst_45 = arith.constant 9.99999974E-6 : f32
    %89 = vector.broadcast %cst_45 : f32 to vector<8x1xf32>
    %90 = arith.addf %88, %89 : vector<8x1xf32>
    %91 = math.rsqrt %90 : vector<8x1xf32>
    %92 = vector.broadcast %91 : vector<8x1xf32> to vector<8x32xf32>
    %93 = arith.mulf %83, %92 : vector<8x32xf32>
    %94 = vector.broadcast %76 : vector<1x32xf32> to vector<8x32xf32>
    %95 = arith.mulf %93, %94 : vector<8x32xf32>
    %96 = vector.broadcast %77 : vector<1x32xf32> to vector<8x32xf32>
    %97 = arith.addf %95, %96 : vector<8x32xf32>
    %c0_46 = arith.constant 0 : index
    %c0_47 = arith.constant 0 : index
    %98 = vector.load %arg13[%c0_46, %c0_47] : memref<32x32xbf16, #tpu.memory_space<vmem>>, vector<32x32xbf16>
    %99 = arith.truncf %97 : vector<8x32xf32> to vector<8x32xbf16>
    %cst_48 = arith.constant dense<0.000000e+00> : vector<8x32xf32>
    %100 = tpu.matmul %99, %98, %cst_48 {dimension_numbers = #tpu.dot_dimension_numbers<[1], [0], [0], [1], [0, 0, 1, 1], [], []>} : vector<8x32xbf16>, vector<32x32xbf16>, vector<8x32xf32> -> vector<8x32xf32>
    %c0_49 = arith.constant 0 : index
    %c0_50 = arith.constant 0 : index
    %101 = vector.load %arg14[%c0_49, %c0_50] : memref<1x32xf32, #tpu.memory_space<vmem>>, vector<1x32xf32>
    %102 = vector.broadcast %101 : vector<1x32xf32> to vector<8x32xf32>
    %103 = arith.addf %100, %102 : vector<8x32xf32>
    %c0_51 = arith.constant 0 : index
    %c0_52 = arith.constant 0 : index
    %104 = vector.load %arg29[%c0_51, %c0_52] : memref<8x64xbf16, #tpu.memory_space<vmem>>, vector<8x16xbf16>
    %c0_53 = arith.constant 0 : index
    %c32_54 = arith.constant 32 : index
    %105 = vector.load %arg29[%c0_53, %c32_54] : memref<8x64xbf16, #tpu.memory_space<vmem>>, vector<8x16xbf16>
    %106 = vector.extract_strided_slice %103 {offsets = [0, 0], sizes = [8, 16], strides = [1, 1]} : vector<8x32xf32> to vector<8x16xf32>
    %107 = arith.truncf %106 : vector<8x16xf32> to vector<8x16xbf16>
    %cst_55 = arith.constant dense<0.000000e+00> : vector<8x8xf32>
    %108 = tpu.matmul %107, %104, %cst_55 {dimension_numbers = #tpu.dot_dimension_numbers<[1], [1], [0], [0], [0, 0, 1, 0], [], []>} : vector<8x16xbf16>, vector<8x16xbf16>, vector<8x8xf32> -> vector<8x8xf32>
    %cst_56 = arith.constant 2.500000e-01 : f32
    %109 = vector.broadcast %cst_56 : f32 to vector<8x8xf32>
    %110 = arith.mulf %108, %109 : vector<8x8xf32>
    %cst_57 = arith.constant dense<0xFF800000> : vector<8xf32>
    %111 = vector.multi_reduction <maximumf>, %110, %cst_57 [1] : vector<8x8xf32> to vector<8xf32>
    %112 = vector.shape_cast %111 : vector<8xf32> to vector<8x1xf32>
    %113 = vector.broadcast %112 : vector<8x1xf32> to vector<8x8xf32>
    %114 = arith.subf %110, %113 : vector<8x8xf32>
    %115 = math.exp %114 : vector<8x8xf32>
    %cst_58 = arith.constant dense<0.000000e+00> : vector<8xf32>
    %116 = vector.multi_reduction <add>, %115, %cst_58 [1] : vector<8x8xf32> to vector<8xf32>
    %117 = vector.shape_cast %116 : vector<8xf32> to vector<8x1xf32>
    %118 = tpu.reciprocal %117 : vector<8x1xf32> -> vector<8x1xf32>
    %119 = vector.broadcast %118 : vector<8x1xf32> to vector<8x8xf32>
    %120 = arith.mulf %115, %119 : vector<8x8xf32>
    %121 = arith.truncf %120 : vector<8x8xf32> to vector<8x8xbf16>
    %cst_59 = arith.constant dense<0.000000e+00> : vector<8x16xf32>
    %122 = tpu.matmul %121, %105, %cst_59 {dimension_numbers = #tpu.dot_dimension_numbers<[1], [0], [0], [1], [0, 0, 1, 1], [], []>} : vector<8x8xbf16>, vector<8x16xbf16>, vector<8x16xf32> -> vector<8x16xf32>
    %c0_60 = arith.constant 0 : index
    %c0_61 = arith.constant 0 : index
    %123 = vector.load %arg30[%c0_60, %c0_61] : memref<8x32xf32, #tpu.memory_space<vmem>>, vector<8x16xf32>
    tpu.vector_store %arg30[%c0_60, %c0_61], %122 {strides = array<i32>} : memref<8x32xf32, #tpu.memory_space<vmem>>, vector<8x16xf32>,
    %c0_62 = arith.constant 0 : index
    %c16_63 = arith.constant 16 : index
    %124 = vector.load %arg29[%c0_62, %c16_63] : memref<8x64xbf16, #tpu.memory_space<vmem>>, vector<8x16xbf16>
    %c0_64 = arith.constant 0 : index
    %c48_65 = arith.constant 48 : index
    %125 = vector.load %arg29[%c0_64, %c48_65] : memref<8x64xbf16, #tpu.memory_space<vmem>>, vector<8x16xbf16>
    %126 = vector.extract_strided_slice %103 {offsets = [0, 16], sizes = [8, 16], strides = [1, 1]} : vector<8x32xf32> to vector<8x16xf32>
    %127 = arith.truncf %126 : vector<8x16xf32> to vector<8x16xbf16>
    %cst_66 = arith.constant dense<0.000000e+00> : vector<8x8xf32>
    %128 = tpu.matmul %127, %124, %cst_66 {dimension_numbers = #tpu.dot_dimension_numbers<[1], [1], [0], [0], [0, 0, 1, 0], [], []>} : vector<8x16xbf16>, vector<8x16xbf16>, vector<8x8xf32> -> vector<8x8xf32>
    %cst_67 = arith.constant 2.500000e-01 : f32
    %129 = vector.broadcast %cst_67 : f32 to vector<8x8xf32>
    %130 = arith.mulf %128, %129 : vector<8x8xf32>
    %cst_68 = arith.constant dense<0xFF800000> : vector<8xf32>
    %131 = vector.multi_reduction <maximumf>, %130, %cst_68 [1] : vector<8x8xf32> to vector<8xf32>
    %132 = vector.shape_cast %131 : vector<8xf32> to vector<8x1xf32>
    %133 = vector.broadcast %132 : vector<8x1xf32> to vector<8x8xf32>
    %134 = arith.subf %130, %133 : vector<8x8xf32>
    %135 = math.exp %134 : vector<8x8xf32>
    %cst_69 = arith.constant dense<0.000000e+00> : vector<8xf32>
    %136 = vector.multi_reduction <add>, %135, %cst_69 [1] : vector<8x8xf32> to vector<8xf32>
    %137 = vector.shape_cast %136 : vector<8xf32> to vector<8x1xf32>
    %138 = tpu.reciprocal %137 : vector<8x1xf32> -> vector<8x1xf32>
    %139 = vector.broadcast %138 : vector<8x1xf32> to vector<8x8xf32>
    %140 = arith.mulf %135, %139 : vector<8x8xf32>
    %141 = arith.truncf %140 : vector<8x8xf32> to vector<8x8xbf16>
    %cst_70 = arith.constant dense<0.000000e+00> : vector<8x16xf32>
    %142 = tpu.matmul %141, %125, %cst_70 {dimension_numbers = #tpu.dot_dimension_numbers<[1], [0], [0], [1], [0, 0, 1, 1], [], []>} : vector<8x8xbf16>, vector<8x16xbf16>, vector<8x16xf32> -> vector<8x16xf32>
    %c0_71 = arith.constant 0 : index
    %c16_72 = arith.constant 16 : index
    %143 = vector.load %arg30[%c0_71, %c16_72] : memref<8x32xf32, #tpu.memory_space<vmem>>, vector<8x16xf32>
    tpu.vector_store %arg30[%c0_71, %c16_72], %142 {strides = array<i32>} : memref<8x32xf32, #tpu.memory_space<vmem>>, vector<8x16xf32>,
    %c0_73 = arith.constant 0 : index
    %c0_74 = arith.constant 0 : index
    %144 = vector.load %arg30[%c0_73, %c0_74] : memref<8x32xf32, #tpu.memory_space<vmem>>, vector<8x32xf32>
    %c0_75 = arith.constant 0 : index
    %c0_76 = arith.constant 0 : index
    %145 = vector.load %arg17[%c0_75, %c0_76] : memref<32x32xbf16, #tpu.memory_space<vmem>>, vector<32x32xbf16>
    %146 = arith.truncf %144 : vector<8x32xf32> to vector<8x32xbf16>
    %cst_77 = arith.constant dense<0.000000e+00> : vector<8x32xf32>
    %147 = tpu.matmul %146, %145, %cst_77 {dimension_numbers = #tpu.dot_dimension_numbers<[1], [0], [0], [1], [0, 0, 1, 1], [], []>} : vector<8x32xbf16>, vector<32x32xbf16>, vector<8x32xf32> -> vector<8x32xf32>
    %148 = arith.addf %97, %147 : vector<8x32xf32>
    %c0_78 = arith.constant 0 : index
    %c0_79 = arith.constant 0 : index
    %149 = vector.load %arg18[%c0_78, %c0_79] : memref<1x32xf32, #tpu.memory_space<vmem>>, vector<1x32xf32>
    %150 = vector.broadcast %149 : vector<1x32xf32> to vector<8x32xf32>
    %151 = arith.addf %148, %150 : vector<8x32xf32>
    %c0_80 = arith.constant 0 : index
    %c0_81 = arith.constant 0 : index
    %152 = vector.load %arg19[%c0_80, %c0_81] : memref<1x32xf32, #tpu.memory_space<vmem>>, vector<1x32xf32>
    %c0_82 = arith.constant 0 : index
    %c0_83 = arith.constant 0 : index
    %153 = vector.load %arg20[%c0_82, %c0_83] : memref<1x32xf32, #tpu.memory_space<vmem>>, vector<1x32xf32>
    %cst_84 = arith.constant dense<0.000000e+00> : vector<8xf32>
    %154 = vector.multi_reduction <add>, %151, %cst_84 [1] : vector<8x32xf32> to vector<8xf32>
    %155 = vector.shape_cast %154 : vector<8xf32> to vector<8x1xf32>
    %cst_85 = arith.constant 3.200000e+01 : f32
    %156 = vector.broadcast %cst_85 : f32 to vector<8x1xf32>
    %157 = arith.divf %155, %156 : vector<8x1xf32>
    %158 = vector.broadcast %157 : vector<8x1xf32> to vector<8x32xf32>
    %159 = arith.subf %151, %158 : vector<8x32xf32>
    %160 = arith.mulf %159, %159 : vector<8x32xf32>
    %cst_86 = arith.constant dense<0.000000e+00> : vector<8xf32>
    %161 = vector.multi_reduction <add>, %160, %cst_86 [1] : vector<8x32xf32> to vector<8xf32>
    %162 = vector.shape_cast %161 : vector<8xf32> to vector<8x1xf32>
    %cst_87 = arith.constant 3.200000e+01 : f32
    %163 = vector.broadcast %cst_87 : f32 to vector<8x1xf32>
    %164 = arith.divf %162, %163 : vector<8x1xf32>
    %cst_88 = arith.constant 9.99999974E-6 : f32
    %165 = vector.broadcast %cst_88 : f32 to vector<8x1xf32>
    %166 = arith.addf %164, %165 : vector<8x1xf32>
    %167 = math.rsqrt %166 : vector<8x1xf32>
    %168 = vector.broadcast %167 : vector<8x1xf32> to vector<8x32xf32>
    %169 = arith.mulf %159, %168 : vector<8x32xf32>
    %170 = vector.broadcast %152 : vector<1x32xf32> to vector<8x32xf32>
    %171 = arith.mulf %169, %170 : vector<8x32xf32>
    %172 = vector.broadcast %153 : vector<1x32xf32> to vector<8x32xf32>
    %173 = arith.addf %171, %172 : vector<8x32xf32>
    %c0_89 = arith.constant 0 : index
    %c0_90 = arith.constant 0 : index
    %174 = vector.load %arg21[%c0_89, %c0_90] : memref<32x64xbf16, #tpu.memory_space<vmem>>, vector<32x64xbf16>
    %175 = arith.truncf %173 : vector<8x32xf32> to vector<8x32xbf16>
    %cst_91 = arith.constant dense<0.000000e+00> : vector<8x64xf32>
    %176 = tpu.matmul %175, %174, %cst_91 {dimension_numbers = #tpu.dot_dimension_numbers<[1], [0], [0], [1], [0, 0, 1, 1], [], []>} : vector<8x32xbf16>, vector<32x64xbf16>, vector<8x64xf32> -> vector<8x64xf32>
    %c0_92 = arith.constant 0 : index
    %c0_93 = arith.constant 0 : index
    %177 = vector.load %arg22[%c0_92, %c0_93] : memref<1x64xf32, #tpu.memory_space<vmem>>, vector<1x64xf32>
    %178 = vector.broadcast %177 : vector<1x64xf32> to vector<8x64xf32>
    %179 = arith.addf %176, %178 : vector<8x64xf32>
    %cst_94 = arith.constant 0.000000e+00 : f32
    %180 = vector.broadcast %cst_94 : f32 to vector<8x64xf32>
    %181 = arith.maximumf %179, %180 : vector<8x64xf32>
    %c0_95 = arith.constant 0 : index
    %c0_96 = arith.constant 0 : index
    %182 = vector.load %arg23[%c0_95, %c0_96] : memref<64x32xbf16, #tpu.memory_space<vmem>>, vector<64x32xbf16>
    %183 = arith.truncf %181 : vector<8x64xf32> to vector<8x64xbf16>
    %cst_97 = arith.constant dense<0.000000e+00> : vector<8x32xf32>
    %184 = tpu.matmul %183, %182, %cst_97 {dimension_numbers = #tpu.dot_dimension_numbers<[1], [0], [0], [1], [0, 0, 1, 1], [], []>} : vector<8x64xbf16>, vector<64x32xbf16>, vector<8x32xf32> -> vector<8x32xf32>
    %185 = arith.addf %173, %184 : vector<8x32xf32>
    %c0_98 = arith.constant 0 : index
    %c0_99 = arith.constant 0 : index
    %186 = vector.load %arg24[%c0_98, %c0_99] : memref<1x32xf32, #tpu.memory_space<vmem>>, vector<1x32xf32>
    %187 = vector.broadcast %186 : vector<1x32xf32> to vector<8x32xf32>
    %188 = arith.addf %185, %187 : vector<8x32xf32>
    %c0_100 = arith.constant 0 : index
    %c0_101 = arith.constant 0 : index
    %189 = vector.load %arg25[%c0_100, %c0_101] : memref<1x32xf32, #tpu.memory_space<vmem>>, vector<1x32xf32>
    %c0_102 = arith.constant 0 : index
    %c0_103 = arith.constant 0 : index
    %190 = vector.load %arg26[%c0_102, %c0_103] : memref<1x32xf32, #tpu.memory_space<vmem>>, vector<1x32xf32>
    %cst_104 = arith.constant dense<0.000000e+00> : vector<8xf32>
    %191 = vector.multi_reduction <add>, %188, %cst_104 [1] : vector<8x32xf32> to vector<8xf32>
    %192 = vector.shape_cast %191 : vector<8xf32> to vector<8x1xf32>
    %cst_105 = arith.constant 3.200000e+01 : f32
    %193 = vector.broadcast %cst_105 : f32 to vector<8x1xf32>
    %194 = arith.divf %192, %193 : vector<8x1xf32>
    %195 = vector.broadcast %194 : vector<8x1xf32> to vector<8x32xf32>
    %196 = arith.subf %188, %195 : vector<8x32xf32>
    %197 = arith.mulf %196, %196 : vector<8x32xf32>
    %cst_106 = arith.constant dense<0.000000e+00> : vector<8xf32>
    %198 = vector.multi_reduction <add>, %197, %cst_106 [1] : vector<8x32xf32> to vector<8xf32>
    %199 = vector.shape_cast %198 : vector<8xf32> to vector<8x1xf32>
    %cst_107 = arith.constant 3.200000e+01 : f32
    %200 = vector.broadcast %cst_107 : f32 to vector<8x1xf32>
    %201 = arith.divf %199, %200 : vector<8x1xf32>
    %cst_108 = arith.constant 9.99999974E-6 : f32
    %202 = vector.broadcast %cst_108 : f32 to vector<8x1xf32>
    %203 = arith.addf %201, %202 : vector<8x1xf32>
    %204 = math.rsqrt %203 : vector<8x1xf32>
    %205 = vector.broadcast %204 : vector<8x1xf32> to vector<8x32xf32>
    %206 = arith.mulf %196, %205 : vector<8x32xf32>
    %207 = vector.broadcast %189 : vector<1x32xf32> to vector<8x32xf32>
    %208 = arith.mulf %206, %207 : vector<8x32xf32>
    %209 = vector.broadcast %190 : vector<1x32xf32> to vector<8x32xf32>
    %210 = arith.addf %208, %209 : vector<8x32xf32>
    %c0_109 = arith.constant 0 : index
    %c0_110 = arith.constant 0 : index
    %c0_111 = arith.constant 0 : index
    %211 = vector.load %arg27[%c0_109, %c0_110, %c0_111] : memref<1x8x32xf32, #tpu.memory_space<vmem>>, vector<1x8x32xf32>
    %212 = vector.shape_cast %211 : vector<1x8x32xf32> to vector<8x32xf32>
    %213 = vector.shape_cast %210 : vector<8x32xf32> to vector<1x8x32xf32>
    tpu.vector_store %arg27[%c0_109, %c0_110, %c0_111], %213 {strides = array<i32>} : memref<1x8x32xf32, #tpu.memory_space<vmem>>, vector<1x8x32xf32>,
    return
  }
  func.func @transform_0(%arg0: i32, %arg1: i32) -> (i32, i32, i32) {
    %c0_i32 = arith.constant 0 : i32
    %c0_i32_0 = arith.constant 0 : i32
    %c0_i32_1 = arith.constant 0 : i32
    return %arg0, %c0_i32, %c0_i32_0 : i32, i32, i32
  }
  func.func @transform_1(%arg0: i32, %arg1: i32) -> (i32, i32, i32) {
    %c0_i32 = arith.constant 0 : i32
    %c0_i32_0 = arith.constant 0 : i32
    %c0_i32_1 = arith.constant 0 : i32
    return %arg0, %c0_i32, %c0_i32_0 : i32, i32, i32
  }
  func.func @transform_2(%arg0: i32, %arg1: i32) -> (i32, i32, i32) {
    %c0_i32 = arith.constant 0 : i32
    %c0_i32_0 = arith.constant 0 : i32
    %c0_i32_1 = arith.constant 0 : i32
    return %arg0, %c0_i32, %c0_i32_0 : i32, i32, i32
  }
  func.func @transform_3(%arg0: i32, %arg1: i32) -> (i32, i32) {
    %c0_i32 = arith.constant 0 : i32
    %c0_i32_0 = arith.constant 0 : i32
    %c0_i32_1 = arith.constant 0 : i32
    return %c0_i32, %c0_i32_0 : i32, i32
  }
  func.func @transform_4(%arg0: i32, %arg1: i32) -> (i32, i32) {
    %c0_i32 = arith.constant 0 : i32
    %c0_i32_0 = arith.constant 0 : i32
    %c0_i32_1 = arith.constant 0 : i32
    return %c0_i32, %c0_i32_0 : i32, i32
  }
  func.func @transform_5(%arg0: i32, %arg1: i32) -> (i32, i32) {
    %c0_i32 = arith.constant 0 : i32
    %c0_i32_0 = arith.constant 0 : i32
    %c0_i32_1 = arith.constant 0 : i32
    return %c0_i32, %c0_i32_0 : i32, i32
  }
  func.func @transform_6(%arg0: i32, %arg1: i32) -> (i32, i32) {
    %c0_i32 = arith.constant 0 : i32
    %c0_i32_0 = arith.constant 0 : i32
    %c0_i32_1 = arith.constant 0 : i32
    return %c0_i32, %c0_i32_0 : i32, i32
  }
  func.func @transform_7(%arg0: i32, %arg1: i32) -> (i32, i32) {
    %c0_i32 = arith.constant 0 : i32
    %c0_i32_0 = arith.constant 0 : i32
    %c0_i32_1 = arith.constant 0 : i32
    return %c0_i32, %c0_i32_0 : i32, i32
  }
  func.func @transform_8(%arg0: i32, %arg1: i32) -> (i32, i32) {
    %c0_i32 = arith.constant 0 : i32
    %c0_i32_0 = arith.constant 0 : i32
    %c0_i32_1 = arith.constant 0 : i32
    return %c0_i32, %c0_i32_0 : i32, i32
  }
  func.func @transform_9(%arg0: i32, %arg1: i32) -> (i32, i32) {
    %c0_i32 = arith.constant 0 : i32
    %c0_i32_0 = arith.constant 0 : i32
    %c0_i32_1 = arith.constant 0 : i32
    return %c0_i32, %c0_i32_0 : i32, i32
  }
  func.func @transform_10(%arg0: i32, %arg1: i32) -> (i32, i32) {
    %c0_i32 = arith.constant 0 : i32
    %c0_i32_0 = arith.constant 0 : i32
    %c0_i32_1 = arith.constant 0 : i32
    return %c0_i32, %c0_i32_0 : i32, i32
  }
  func.func @transform_11(%arg0: i32, %arg1: i32) -> (i32, i32) {
    %c0_i32 = arith.constant 0 : i32
    %c0_i32_0 = arith.constant 0 : i32
    %c0_i32_1 = arith.constant 0 : i32
    return %c0_i32, %c0_i32_0 : i32, i32
  }
  func.func @transform_12(%arg0: i32, %arg1: i32) -> (i32, i32) {
    %c0_i32 = arith.constant 0 : i32
    %c0_i32_0 = arith.constant 0 : i32
    %c0_i32_1 = arith.constant 0 : i32
    return %c0_i32, %c0_i32_0 : i32, i32
  }
  func.func @transform_13(%arg0: i32, %arg1: i32) -> (i32, i32) {
    %c0_i32 = arith.constant 0 : i32
    %c0_i32_0 = arith.constant 0 : i32
    %c0_i32_1 = arith.constant 0 : i32
    return %c0_i32, %c0_i32_0 : i32, i32
  }
  func.func @transform_14(%arg0: i32, %arg1: i32) -> (i32, i32) {
    %c0_i32 = arith.constant 0 : i32
    %c0_i32_0 = arith.constant 0 : i32
    %c0_i32_1 = arith.constant 0 : i32
    return %c0_i32, %c0_i32_0 : i32, i32
  }
  func.func @transform_15(%arg0: i32, %arg1: i32) -> (i32, i32) {
    %c0_i32 = arith.constant 0 : i32
    %c0_i32_0 = arith.constant 0 : i32
    %c0_i32_1 = arith.constant 0 : i32
    return %c0_i32, %c0_i32_0 : i32, i32
  }
  func.func @transform_16(%arg0: i32, %arg1: i32) -> (i32, i32) {
    %c0_i32 = arith.constant 0 : i32
    %c0_i32_0 = arith.constant 0 : i32
    %c0_i32_1 = arith.constant 0 : i32
    return %c0_i32, %c0_i32_0 : i32, i32
  }
  func.func @transform_17(%arg0: i32, %arg1: i32) -> (i32, i32) {
    %c0_i32 = arith.constant 0 : i32
    %c0_i32_0 = arith.constant 0 : i32
    %c0_i32_1 = arith.constant 0 : i32
    return %c0_i32, %c0_i32_0 : i32, i32
  }
  func.func @transform_18(%arg0: i32, %arg1: i32) -> (i32, i32) {
    %c0_i32 = arith.constant 0 : i32
    %c0_i32_0 = arith.constant 0 : i32
    %c0_i32_1 = arith.constant 0 : i32
    return %c0_i32, %c0_i32_0 : i32, i32
  }
  func.func @transform_19(%arg0: i32, %arg1: i32) -> (i32, i32) {
    %c0_i32 = arith.constant 0 : i32
    %c0_i32_0 = arith.constant 0 : i32
    %c0_i32_1 = arith.constant 0 : i32
    return %c0_i32, %c0_i32_0 : i32, i32
  }
  func.func @transform_20(%arg0: i32, %arg1: i32) -> (i32, i32) {
    %c0_i32 = arith.constant 0 : i32
    %c0_i32_0 = arith.constant 0 : i32
    %c0_i32_1 = arith.constant 0 : i32
    return %c0_i32, %c0_i32_0 : i32, i32
  }
  func.func @transform_21(%arg0: i32, %arg1: i32) -> (i32, i32) {
    %c0_i32 = arith.constant 0 : i32
    %c0_i32_0 = arith.constant 0 : i32
    %c0_i32_1 = arith.constant 0 : i32
    return %c0_i32, %c0_i32_0 : i32, i32
  }
  func.func @transform_22(%arg0: i32, %arg1: i32) -> (i32, i32) {
    %c0_i32 = arith.constant 0 : i32
    %c0_i32_0 = arith.constant 0 : i32
    %c0_i32_1 = arith.constant 0 : i32
    return %c0_i32, %c0_i32_0 : i32, i32
  }
  func.func @transform_23(%arg0: i32, %arg1: i32) -> (i32, i32) {
    %c0_i32 = arith.constant 0 : i32
    %c0_i32_0 = arith.constant 0 : i32
    %c0_i32_1 = arith.constant 0 : i32
    return %c0_i32, %c0_i32_0 : i32, i32
  }
  func.func @transform_24(%arg0: i32, %arg1: i32) -> (i32, i32) {
    %c0_i32 = arith.constant 0 : i32
    %c0_i32_0 = arith.constant 0 : i32
    %c0_i32_1 = arith.constant 0 : i32
    return %c0_i32, %c0_i32_0 : i32, i32
  }
  func.func @transform_25(%arg0: i32, %arg1: i32) -> (i32, i32, i32) {
    %c0_i32 = arith.constant 0 : i32
    %c0_i32_0 = arith.constant 0 : i32
    return %arg0, %arg1, %c0_i32 : i32, i32, i32
  }
}

module attributes {stable_mosaic.version = 11 : i64} {
  func.func @_decoder_layer_kernel(%arg0: i32, %arg1: i32, %arg2: memref<1x8x32xf32, #tpu.memory_space<vmem>>, %arg3: memref<1x8x32xf32, #tpu.memory_space<vmem>>, %arg4: memref<1x1x8xf32, #tpu.memory_space<vmem>>, %arg5: memref<32x32xbf16, #tpu.memory_space<vmem>>, %arg6: memref<1x32xf32, #tpu.memory_space<vmem>>, %arg7: memref<32x64xbf16, #tpu.memory_space<vmem>>, %arg8: memref<1x64xf32, #tpu.memory_space<vmem>>, %arg9: memref<32x32xbf16, #tpu.memory_space<vmem>>, %arg10: memref<1x32xf32, #tpu.memory_space<vmem>>, %arg11: memref<1x32xf32, #tpu.memory_space<vmem>>, %arg12: memref<1x32xf32, #tpu.memory_space<vmem>>, %arg13: memref<32x32xbf16, #tpu.memory_space<vmem>>, %arg14: memref<1x32xf32, #tpu.memory_space<vmem>>, %arg15: memref<32x64xbf16, #tpu.memory_space<vmem>>, %arg16: memref<1x64xf32, #tpu.memory_space<vmem>>, %arg17: memref<32x32xbf16, #tpu.memory_space<vmem>>, %arg18: memref<1x32xf32, #tpu.memory_space<vmem>>, %arg19: memref<1x32xf32, #tpu.memory_space<vmem>>, %arg20: memref<1x32xf32, #tpu.memory_space<vmem>>, %arg21: memref<32x64xbf16, #tpu.memory_space<vmem>>, %arg22: memref<1x64xf32, #tpu.memory_space<vmem>>, %arg23: memref<64x32xbf16, #tpu.memory_space<vmem>>, %arg24: memref<1x32xf32, #tpu.memory_space<vmem>>, %arg25: memref<1x32xf32, #tpu.memory_space<vmem>>, %arg26: memref<1x32xf32, #tpu.memory_space<vmem>>, %arg27: memref<1x8x32xf32, #tpu.memory_space<vmem>>, %arg28: memref<8x64xbf16, #tpu.memory_space<vmem>>, %arg29: memref<8x64xbf16, #tpu.memory_space<vmem>>, %arg30: memref<8x32xf32, #tpu.memory_space<vmem>>) attributes {dimension_semantics = [#tpu.dimension_semantics<parallel>, #tpu.dimension_semantics<arbitrary>], iteration_bounds = array<i64: 2, 1>, scalar_prefetch = 0 : i64, scratch_operands = 3 : i64, tpu.core_type = #tpu.core_type<tc>, window_params = [{transform_indices = @transform_0, window_bounds = array<i64: 1, 8, 32>}, {transform_indices = @transform_1, window_bounds = array<i64: 1, 8, 32>}, {transform_indices = @transform_2, window_bounds = array<i64: 1, 1, 8>}, {pipeline_mode = #tpu.pipeline_mode<synchronous>, transform_indices = @transform_3, window_bounds = array<i64: 32, 32>}, {pipeline_mode = #tpu.pipeline_mode<synchronous>, transform_indices = @transform_4, window_bounds = array<i64: 1, 32>}, {pipeline_mode = #tpu.pipeline_mode<synchronous>, transform_indices = @transform_5, window_bounds = array<i64: 32, 64>}, {pipeline_mode = #tpu.pipeline_mode<synchronous>, transform_indices = @transform_6, window_bounds = array<i64: 1, 64>}, {pipeline_mode = #tpu.pipeline_mode<synchronous>, transform_indices = @transform_7, window_bounds = array<i64: 32, 32>}, {pipeline_mode = #tpu.pipeline_mode<synchronous>, transform_indices = @transform_8, window_bounds = array<i64: 1, 32>}, {pipeline_mode = #tpu.pipeline_mode<synchronous>, transform_indices = @transform_9, window_bounds = array<i64: 1, 32>}, {pipeline_mode = #tpu.pipeline_mode<synchronous>, transform_indices = @transform_10, window_bounds = array<i64: 1, 32>}, {pipeline_mode = #tpu.pipeline_mode<synchronous>, transform_indices = @transform_11, window_bounds = array<i64: 32, 32>}, {pipeline_mode = #tpu.pipeline_mode<synchronous>, transform_indices = @transform_12, window_bounds = array<i64: 1, 32>}, {pipeline_mode = #tpu.pipeline_mode<synchronous>, transform_indices = @transform_13, window_bounds = array<i64: 32, 64>}, {pipeline_mode = #tpu.pipeline_mode<synchronous>, transform_indices = @transform_14, window_bounds = array<i64: 1, 64>}, {pipeline_mode = #tpu.pipeline_mode<synchronous>, transform_indices = @transform_15, window_bounds = array<i64: 32, 32>}, {pipeline_mode = #tpu.pipeline_mode<synchronous>, transform_indices = @transform_16, window_bounds = array<i64: 1, 32>}, {pipeline_mode = #tpu.pipeline_mode<synchronous>, transform_indices = @transform_17, window_bounds = array<i64: 1, 32>}, {pipeline_mode = #tpu.pipeline_mode<synchronous>, transform_indices = @transform_18, window_bounds = array<i64: 1, 32>}, {pipeline_mode = #tpu.pipeline_mode<synchronous>, transform_indices = @transform_19, window_bounds = array<i64: 32, 64>}, {pipeline_mode = #tpu.pipeline_mode<synchronous>, transform_indices = @transform_20, window_bounds = array<i64: 1, 64>}, {pipeline_mode = #tpu.pipeline_mode<synchronous>, transform_indices = @transform_21, window_bounds = array<i64: 64, 32>}, {pipeline_mode = #tpu.pipeline_mode<synchronous>, transform_indices = @transform_22, window_bounds = array<i64: 1, 32>}, {pipeline_mode = #tpu.pipeline_mode<synchronous>, transform_indices = @transform_23, window_bounds = array<i64: 1, 32>}, {pipeline_mode = #tpu.pipeline_mode<synchronous>, transform_indices = @transform_24, window_bounds = array<i64: 1, 32>}, {transform_indices = @transform_25, window_bounds = array<i64: 1, 8, 32>}]} {
    %c0_i32 = arith.constant 0 : i32
    %0 = arith.cmpi eq, %arg1, %c0_i32 : i32
    %1 = arith.extui %0 : i1 to i32
    %c0_i32_0 = arith.constant 0 : i32
    %2 = arith.cmpi ne, %1, %c0_i32_0 : i32
    scf.if %2 {
      %c0_112 = arith.constant 0 : index
      %c0_113 = arith.constant 0 : index
      %c0_114 = arith.constant 0 : index
      %214 = vector.load %arg2[%c0_112, %c0_113, %c0_114] : memref<1x8x32xf32, #tpu.memory_space<vmem>>, vector<1x8x32xf32>
      %215 = vector.shape_cast %214 : vector<1x8x32xf32> to vector<8x32xf32>
      %c0_115 = arith.constant 0 : index
      %c0_116 = arith.constant 0 : index
      %216 = vector.load %arg7[%c0_115, %c0_116] : memref<32x64xbf16, #tpu.memory_space<vmem>>, vector<32x64xbf16>
      %217 = arith.truncf %215 : vector<8x32xf32> to vector<8x32xbf16>
      %cst_117 = arith.constant dense<0.000000e+00> : vector<8x64xf32>
      %218 = tpu.matmul %217, %216, %cst_117 {dimension_numbers = #tpu.dot_dimension_numbers<[1], [0], [0], [1], [0, 0, 1, 1], [], []>} : vector<8x32xbf16>, vector<32x64xbf16>, vector<8x64xf32> -> vector<8x64xf32>
      %c0_118 = arith.constant 0 : index
      %c0_119 = arith.constant 0 : index
      %219 = vector.load %arg8[%c0_118, %c0_119] : memref<1x64xf32, #tpu.memory_space<vmem>>, vector<1x64xf32>
      %220 = vector.broadcast %219 : vector<1x64xf32> to vector<8x64xf32>
      %221 = arith.addf %218, %220 : vector<8x64xf32>
      %222 = arith.truncf %221 : vector<8x64xf32> to vector<8x64xbf16>
      %c0_120 = arith.constant 0 : index
      %c0_121 = arith.constant 0 : index
      %223 = vector.load %arg28[%c0_120, %c0_121] : memref<8x64xbf16, #tpu.memory_space<vmem>>, vector<8x64xbf16>
      tpu.vector_store %arg28[%c0_120, %c0_121], %222 {strides = array<i32>} : memref<8x64xbf16, #tpu.memory_space<vmem>>, vector<8x64xbf16>,
      %c0_122 = arith.constant 0 : index
      %c0_123 = arith.constant 0 : index
      %c0_124 = arith.constant 0 : index
      %224 = vector.load %arg3[%c0_122, %c0_123, %c0_124] : memref<1x8x32xf32, #tpu.memory_space<vmem>>, vector<1x8x32xf32>
      %225 = vector.shape_cast %224 : vector<1x8x32xf32> to vector<8x32xf32>
      %c0_125 = arith.constant 0 : index
      %c0_126 = arith.constant 0 : index
      %226 = vector.load %arg15[%c0_125, %c0_126] : memref<32x64xbf16, #tpu.memory_space<vmem>>, vector<32x64xbf16>
      %227 = arith.truncf %225 : vector<8x32xf32> to vector<8x32xbf16>
      %cst_127 = arith.constant dense<0.000000e+00> : vector<8x64xf32>
      %228 = tpu.matmul %227, %226, %cst_127 {dimension_numbers = #tpu.dot_dimension_numbers<[1], [0], [0], [1], [0, 0, 1, 1], [], []>} : vector<8x32xbf16>, vector<32x64xbf16>, vector<8x64xf32> -> vector<8x64xf32>
      %c0_128 = arith.constant 0 : index
      %c0_129 = arith.constant 0 : index
      %229 = vector.load %arg16[%c0_128, %c0_129] : memref<1x64xf32, #tpu.memory_space<vmem>>, vector<1x64xf32>
      %230 = vector.broadcast %229 : vector<1x64xf32> to vector<8x64xf32>
      %231 = arith.addf %228, %230 : vector<8x64xf32>
      %232 = arith.truncf %231 : vector<8x64xf32> to vector<8x64xbf16>
      %c0_130 = arith.constant 0 : index
      %c0_131 = arith.constant 0 : index
      %233 = vector.load %arg29[%c0_130, %c0_131] : memref<8x64xbf16, #tpu.memory_space<vmem>>, vector<8x64xbf16>
      tpu.vector_store %arg29[%c0_130, %c0_131], %232 {strides = array<i32>} : memref<8x64xbf16, #tpu.memory_space<vmem>>, vector<8x64xbf16>,
    } else {
    }
    %c8_i32 = arith.constant 8 : i32
    %3 = arith.muli %arg1, %c8_i32 : i32
    %4 = tpu.assume_multiple %3, 8 : i32
    %c0 = arith.constant 0 : index
    %5 = arith.index_cast %4 : i32 to index
    %c0_1 = arith.constant 0 : index
    %6 = vector.load %arg2[%c0, %5, %c0_1] : memref<1x8x32xf32, #tpu.memory_space<vmem>>, vector<1x8x32xf32>
    %7 = vector.shape_cast %6 : vector<1x8x32xf32> to vector<8x32xf32>
    %8 = tpu.iota {dimensions = array<i32: 0>} : vector<8x8xi32>
    %9 = vector.broadcast %4 : i32 to vector<8x8xi32>
    %10 = arith.addi %9, %8 : vector<8x8xi32>
    %11 = tpu.iota {dimensions = array<i32: 1>} : vector<8x8xi32>
    %12 = arith.cmpi sgt, %11, %10 : vector<8x8xi32>
    %cst = arith.constant -1.000000e+09 : f32
    %cst_2 = arith.constant 0.000000e+00 : f32
    %13 = vector.broadcast %cst : f32 to vector<8x8xf32>
    %14 = vector.broadcast %cst_2 : f32 to vector<8x8xf32>
    %15 = arith.select %12, %13, %14 : vector<8x8xi1>, vector<8x8xf32>
    %c0_3 = arith.constant 0 : index
    %c0_4 = arith.constant 0 : index
    %c0_5 = arith.constant 0 : index
    %16 = vector.load %arg4[%c0_3, %c0_4, %c0_5] : memref<1x1x8xf32, #tpu.memory_space<vmem>>, vector<1x1x8xf32>
    %17 = vector.shape_cast %16 : vector<1x1x8xf32> to vector<1x8xf32>
    %18 = vector.broadcast %17 : vector<1x8xf32> to vector<8x8xf32>
    %19 = arith.addf %15, %18 : vector<8x8xf32>
    %c0_6 = arith.constant 0 : index
    %c0_7 = arith.constant 0 : index
    %20 = vector.load %arg5[%c0_6, %c0_7] : memref<32x32xbf16, #tpu.memory_space<vmem>>, vector<32x32xbf16>
    %21 = arith.truncf %7 : vector<8x32xf32> to vector<8x32xbf16>
    %cst_8 = arith.constant dense<0.000000e+00> : vector<8x32xf32>
    %22 = tpu.matmul %21, %20, %cst_8 {dimension_numbers = #tpu.dot_dimension_numbers<[1], [0], [0], [1], [0, 0, 1, 1], [], []>} : vector<8x32xbf16>, vector<32x32xbf16>, vector<8x32xf32> -> vector<8x32xf32>
    %c0_9 = arith.constant 0 : index
    %c0_10 = arith.constant 0 : index
    %23 = vector.load %arg6[%c0_9, %c0_10] : memref<1x32xf32, #tpu.memory_space<vmem>>, vector<1x32xf32>
    %24 = vector.broadcast %23 : vector<1x32xf32> to vector<8x32xf32>
    %25 = arith.addf %22, %24 : vector<8x32xf32>
    %c0_11 = arith.constant 0 : index
    %c0_12 = arith.constant 0 : index
    %26 = vector.load %arg28[%c0_11, %c0_12] : memref<8x64xbf16, #tpu.memory_space<vmem>>, vector<8x16xbf16>
    %c0_13 = arith.constant 0 : index
    %c32 = arith.constant 32 : index
    %27 = vector.load %arg28[%c0_13, %c32] : memref<8x64xbf16, #tpu.memory_space<vmem>>, vector<8x16xbf16>
    %28 = vector.extract_strided_slice %25 {offsets = [0, 0], sizes = [8, 16], strides = [1, 1]} : vector<8x32xf32> to vector<8x16xf32>
    %29 = arith.truncf %28 : vector<8x16xf32> to vector<8x16xbf16>
    %cst_14 = arith.constant dense<0.000000e+00> : vector<8x8xf32>
    %30 = tpu.matmul %29, %26, %cst_14 {dimension_numbers = #tpu.dot_dimension_numbers<[1], [1], [0], [0], [0, 0, 1, 0], [], []>} : vector<8x16xbf16>, vector<8x16xbf16>, vector<8x8xf32> -> vector<8x8xf32>
    %cst_15 = arith.constant 2.500000e-01 : f32
    %31 = vector.broadcast %cst_15 : f32 to vector<8x8xf32>
    %32 = arith.mulf %30, %31 : vector<8x8xf32>
    %33 = arith.addf %32, %19 : vector<8x8xf32>
    %cst_16 = arith.constant dense<0xFF800000> : vector<8xf32>
    %34 = vector.multi_reduction <maximumf>, %33, %cst_16 [1] : vector<8x8xf32> to vector<8xf32>
    %35 = vector.shape_cast %34 : vector<8xf32> to vector<8x1xf32>
    %36 = vector.broadcast %35 : vector<8x1xf32> to vector<8x8xf32>
    %37 = arith.subf %33, %36 : vector<8x8xf32>
    %38 = math.exp %37 : vector<8x8xf32>
    %cst_17 = arith.constant dense<0.000000e+00> : vector<8xf32>
    %39 = vector.multi_reduction <add>, %38, %cst_17 [1] : vector<8x8xf32> to vector<8xf32>
    %40 = vector.shape_cast %39 : vector<8xf32> to vector<8x1xf32>
    %41 = tpu.reciprocal %40 : vector<8x1xf32> -> vector<8x1xf32>
    %42 = vector.broadcast %41 : vector<8x1xf32> to vector<8x8xf32>
    %43 = arith.mulf %38, %42 : vector<8x8xf32>
    %44 = arith.truncf %43 : vector<8x8xf32> to vector<8x8xbf16>
    %cst_18 = arith.constant dense<0.000000e+00> : vector<8x16xf32>
    %45 = tpu.matmul %44, %27, %cst_18 {dimension_numbers = #tpu.dot_dimension_numbers<[1], [0], [0], [1], [0, 0, 1, 1], [], []>} : vector<8x8xbf16>, vector<8x16xbf16>, vector<8x16xf32> -> vector<8x16xf32>
    %c0_19 = arith.constant 0 : index
    %c0_20 = arith.constant 0 : index
    %46 = vector.load %arg30[%c0_19, %c0_20] : memref<8x32xf32, #tpu.memory_space<vmem>>, vector<8x16xf32>
    tpu.vector_store %arg30[%c0_19, %c0_20], %45 {strides = array<i32>} : memref<8x32xf32, #tpu.memory_space<vmem>>, vector<8x16xf32>,
    %c0_21 = arith.constant 0 : index
    %c16 = arith.constant 16 : index
    %47 = vector.load %arg28[%c0_21, %c16] : memref<8x64xbf16, #tpu.memory_space<vmem>>, vector<8x16xbf16>
    %c0_22 = arith.constant 0 : index
    %c48 = arith.constant 48 : index
    %48 = vector.load %arg28[%c0_22, %c48] : memref<8x64xbf16, #tpu.memory_space<vmem>>, vector<8x16xbf16>
    %49 = vector.extract_strided_slice %25 {offsets = [0, 16], sizes = [8, 16], strides = [1, 1]} : vector<8x32xf32> to vector<8x16xf32>
    %50 = arith.truncf %49 : vector<8x16xf32> to vector<8x16xbf16>
    %cst_23 = arith.constant dense<0.000000e+00> : vector<8x8xf32>
    %51 = tpu.matmul %50, %47, %cst_23 {dimension_numbers = #tpu.dot_dimension_numbers<[1], [1], [0], [0], [0, 0, 1, 0], [], []>} : vector<8x16xbf16>, vector<8x16xbf16>, vector<8x8xf32> -> vector<8x8xf32>
    %cst_24 = arith.constant 2.500000e-01 : f32
    %52 = vector.broadcast %cst_24 : f32 to vector<8x8xf32>
    %53 = arith.mulf %51, %52 : vector<8x8xf32>
    %54 = arith.addf %53, %19 : vector<8x8xf32>
    %cst_25 = arith.constant dense<0xFF800000> : vector<8xf32>
    %55 = vector.multi_reduction <maximumf>, %54, %cst_25 [1] : vector<8x8xf32> to vector<8xf32>
    %56 = vector.shape_cast %55 : vector<8xf32> to vector<8x1xf32>
    %57 = vector.broadcast %56 : vector<8x1xf32> to vector<8x8xf32>
    %58 = arith.subf %54, %57 : vector<8x8xf32>
    %59 = math.exp %58 : vector<8x8xf32>
    %cst_26 = arith.constant dense<0.000000e+00> : vector<8xf32>
    %60 = vector.multi_reduction <add>, %59, %cst_26 [1] : vector<8x8xf32> to vector<8xf32>
    %61 = vector.shape_cast %60 : vector<8xf32> to vector<8x1xf32>
    %62 = tpu.reciprocal %61 : vector<8x1xf32> -> vector<8x1xf32>
    %63 = vector.broadcast %62 : vector<8x1xf32> to vector<8x8xf32>
    %64 = arith.mulf %59, %63 : vector<8x8xf32>
    %65 = arith.truncf %64 : vector<8x8xf32> to vector<8x8xbf16>
    %cst_27 = arith.constant dense<0.000000e+00> : vector<8x16xf32>
    %66 = tpu.matmul %65, %48, %cst_27 {dimension_numbers = #tpu.dot_dimension_numbers<[1], [0], [0], [1], [0, 0, 1, 1], [], []>} : vector<8x8xbf16>, vector<8x16xbf16>, vector<8x16xf32> -> vector<8x16xf32>
    %c0_28 = arith.constant 0 : index
    %c16_29 = arith.constant 16 : index
    %67 = vector.load %arg30[%c0_28, %c16_29] : memref<8x32xf32, #tpu.memory_space<vmem>>, vector<8x16xf32>
    tpu.vector_store %arg30[%c0_28, %c16_29], %66 {strides = array<i32>} : memref<8x32xf32, #tpu.memory_space<vmem>>, vector<8x16xf32>,
    %c0_30 = arith.constant 0 : index
    %c0_31 = arith.constant 0 : index
    %68 = vector.load %arg30[%c0_30, %c0_31] : memref<8x32xf32, #tpu.memory_space<vmem>>, vector<8x32xf32>
    %c0_32 = arith.constant 0 : index
    %c0_33 = arith.constant 0 : index
    %69 = vector.load %arg9[%c0_32, %c0_33] : memref<32x32xbf16, #tpu.memory_space<vmem>>, vector<32x32xbf16>
    %70 = arith.truncf %68 : vector<8x32xf32> to vector<8x32xbf16>
    %cst_34 = arith.constant dense<0.000000e+00> : vector<8x32xf32>
    %71 = tpu.matmul %70, %69, %cst_34 {dimension_numbers = #tpu.dot_dimension_numbers<[1], [0], [0], [1], [0, 0, 1, 1], [], []>} : vector<8x32xbf16>, vector<32x32xbf16>, vector<8x32xf32> -> vector<8x32xf32>
    %72 = arith.addf %7, %71 : vector<8x32xf32>
    %c0_35 = arith.constant 0 : index
    %c0_36 = arith.constant 0 : index
    %73 = vector.load %arg10[%c0_35, %c0_36] : memref<1x32xf32, #tpu.memory_space<vmem>>, vector<1x32xf32>
    %74 = vector.broadcast %73 : vector<1x32xf32> to vector<8x32xf32>
    %75 = arith.addf %72, %74 : vector<8x32xf32>
    %c0_37 = arith.constant 0 : index
    %c0_38 = arith.constant 0 : index
    %76 = vector.load %arg11[%c0_37, %c0_38] : memref<1x32xf32, #tpu.memory_space<vmem>>, vector<1x32xf32>
    %c0_39 = arith.constant 0 : index
    %c0_40 = arith.constant 0 : index
    %77 = vector.load %arg12[%c0_39, %c0_40] : memref<1x32xf32, #tpu.memory_space<vmem>>, vector<1x32xf32>
    %cst_41 = arith.constant dense<0.000000e+00> : vector<8xf32>
    %78 = vector.multi_reduction <add>, %75, %cst_41 [1] : vector<8x32xf32> to vector<8xf32>
    %79 = vector.shape_cast %78 : vector<8xf32> to vector<8x1xf32>
    %cst_42 = arith.constant 3.200000e+01 : f32
    %80 = vector.broadcast %cst_42 : f32 to vector<8x1xf32>
    %81 = arith.divf %79, %80 : vector<8x1xf32>
    %82 = vector.broadcast %81 : vector<8x1xf32> to vector<8x32xf32>
    %83 = arith.subf %75, %82 : vector<8x32xf32>
    %84 = arith.mulf %83, %83 : vector<8x32xf32>
    %cst_43 = arith.constant dense<0.000000e+00> : vector<8xf32>
    %85 = vector.multi_reduction <add>, %84, %cst_43 [1] : vector<8x32xf32> to vector<8xf32>
    %86 = vector.shape_cast %85 : vector<8xf32> to vector<8x1xf32>
    %cst_44 = arith.constant 3.200000e+01 : f32
    %87 = vector.broadcast %cst_44 : f32 to vector<8x1xf32>
    %88 = arith.divf %86, %87 : vector<8x1xf32>
    %cst_45 = arith.constant 9.99999974E-6 : f32
    %89 = vector.broadcast %cst_45 : f32 to vector<8x1xf32>
    %90 = arith.addf %88, %89 : vector<8x1xf32>
    %91 = math.rsqrt %90 : vector<8x1xf32>
    %92 = vector.broadcast %91 : vector<8x1xf32> to vector<8x32xf32>
    %93 = arith.mulf %83, %92 : vector<8x32xf32>
    %94 = vector.broadcast %76 : vector<1x32xf32> to vector<8x32xf32>
    %95 = arith.mulf %93, %94 : vector<8x32xf32>
    %96 = vector.broadcast %77 : vector<1x32xf32> to vector<8x32xf32>
    %97 = arith.addf %95, %96 : vector<8x32xf32>
    %c0_46 = arith.constant 0 : index
    %c0_47 = arith.constant 0 : index
    %98 = vector.load %arg13[%c0_46, %c0_47] : memref<32x32xbf16, #tpu.memory_space<vmem>>, vector<32x32xbf16>
    %99 = arith.truncf %97 : vector<8x32xf32> to vector<8x32xbf16>
    %cst_48 = arith.constant dense<0.000000e+00> : vector<8x32xf32>
    %100 = tpu.matmul %99, %98, %cst_48 {dimension_numbers = #tpu.dot_dimension_numbers<[1], [0], [0], [1], [0, 0, 1, 1], [], []>} : vector<8x32xbf16>, vector<32x32xbf16>, vector<8x32xf32> -> vector<8x32xf32>
    %c0_49 = arith.constant 0 : index
    %c0_50 = arith.constant 0 : index
    %101 = vector.load %arg14[%c0_49, %c0_50] : memref<1x32xf32, #tpu.memory_space<vmem>>, vector<1x32xf32>
    %102 = vector.broadcast %101 : vector<1x32xf32> to vector<8x32xf32>
    %103 = arith.addf %100, %102 : vector<8x32xf32>
    %c0_51 = arith.constant 0 : index
    %c0_52 = arith.constant 0 : index
    %104 = vector.load %arg29[%c0_51, %c0_52] : memref<8x64xbf16, #tpu.memory_space<vmem>>, vector<8x16xbf16>
    %c0_53 = arith.constant 0 : index
    %c32_54 = arith.constant 32 : index
    %105 = vector.load %arg29[%c0_53, %c32_54] : memref<8x64xbf16, #tpu.memory_space<vmem>>, vector<8x16xbf16>
    %106 = vector.extract_strided_slice %103 {offsets = [0, 0], sizes = [8, 16], strides = [1, 1]} : vector<8x32xf32> to vector<8x16xf32>
    %107 = arith.truncf %106 : vector<8x16xf32> to vector<8x16xbf16>
    %cst_55 = arith.constant dense<0.000000e+00> : vector<8x8xf32>
    %108 = tpu.matmul %107, %104, %cst_55 {dimension_numbers = #tpu.dot_dimension_numbers<[1], [1], [0], [0], [0, 0, 1, 0], [], []>} : vector<8x16xbf16>, vector<8x16xbf16>, vector<8x8xf32> -> vector<8x8xf32>
    %cst_56 = arith.constant 2.500000e-01 : f32
    %109 = vector.broadcast %cst_56 : f32 to vector<8x8xf32>
    %110 = arith.mulf %108, %109 : vector<8x8xf32>
    %cst_57 = arith.constant dense<0xFF800000> : vector<8xf32>
    %111 = vector.multi_reduction <maximumf>, %110, %cst_57 [1] : vector<8x8xf32> to vector<8xf32>
    %112 = vector.shape_cast %111 : vector<8xf32> to vector<8x1xf32>
    %113 = vector.broadcast %112 : vector<8x1xf32> to vector<8x8xf32>
    %114 = arith.subf %110, %113 : vector<8x8xf32>
    %115 = math.exp %114 : vector<8x8xf32>
    %cst_58 = arith.constant dense<0.000000e+00> : vector<8xf32>
    %116 = vector.multi_reduction <add>, %115, %cst_58 [1] : vector<8x8xf32> to vector<8xf32>
    %117 = vector.shape_cast %116 : vector<8xf32> to vector<8x1xf32>
    %118 = tpu.reciprocal %117 : vector<8x1xf32> -> vector<8x1xf32>
    %119 = vector.broadcast %118 : vector<8x1xf32> to vector<8x8xf32>
    %120 = arith.mulf %115, %119 : vector<8x8xf32>
    %121 = arith.truncf %120 : vector<8x8xf32> to vector<8x8xbf16>
    %cst_59 = arith.constant dense<0.000000e+00> : vector<8x16xf32>
    %122 = tpu.matmul %121, %105, %cst_59 {dimension_numbers = #tpu.dot_dimension_numbers<[1], [0], [0], [1], [0, 0, 1, 1], [], []>} : vector<8x8xbf16>, vector<8x16xbf16>, vector<8x16xf32> -> vector<8x16xf32>
    %c0_60 = arith.constant 0 : index
    %c0_61 = arith.constant 0 : index
    %123 = vector.load %arg30[%c0_60, %c0_61] : memref<8x32xf32, #tpu.memory_space<vmem>>, vector<8x16xf32>
    tpu.vector_store %arg30[%c0_60, %c0_61], %122 {strides = array<i32>} : memref<8x32xf32, #tpu.memory_space<vmem>>, vector<8x16xf32>,
    %c0_62 = arith.constant 0 : index
    %c16_63 = arith.constant 16 : index
    %124 = vector.load %arg29[%c0_62, %c16_63] : memref<8x64xbf16, #tpu.memory_space<vmem>>, vector<8x16xbf16>
    %c0_64 = arith.constant 0 : index
    %c48_65 = arith.constant 48 : index
    %125 = vector.load %arg29[%c0_64, %c48_65] : memref<8x64xbf16, #tpu.memory_space<vmem>>, vector<8x16xbf16>
    %126 = vector.extract_strided_slice %103 {offsets = [0, 16], sizes = [8, 16], strides = [1, 1]} : vector<8x32xf32> to vector<8x16xf32>
    %127 = arith.truncf %126 : vector<8x16xf32> to vector<8x16xbf16>
    %cst_66 = arith.constant dense<0.000000e+00> : vector<8x8xf32>
    %128 = tpu.matmul %127, %124, %cst_66 {dimension_numbers = #tpu.dot_dimension_numbers<[1], [1], [0], [0], [0, 0, 1, 0], [], []>} : vector<8x16xbf16>, vector<8x16xbf16>, vector<8x8xf32> -> vector<8x8xf32>
    %cst_67 = arith.constant 2.500000e-01 : f32
    %129 = vector.broadcast %cst_67 : f32 to vector<8x8xf32>
    %130 = arith.mulf %128, %129 : vector<8x8xf32>
    %cst_68 = arith.constant dense<0xFF800000> : vector<8xf32>
    %131 = vector.multi_reduction <maximumf>, %130, %cst_68 [1] : vector<8x8xf32> to vector<8xf32>
    %132 = vector.shape_cast %131 : vector<8xf32> to vector<8x1xf32>
    %133 = vector.broadcast %132 : vector<8x1xf32> to vector<8x8xf32>
    %134 = arith.subf %130, %133 : vector<8x8xf32>
    %135 = math.exp %134 : vector<8x8xf32>
    %cst_69 = arith.constant dense<0.000000e+00> : vector<8xf32>
    %136 = vector.multi_reduction <add>, %135, %cst_69 [1] : vector<8x8xf32> to vector<8xf32>
    %137 = vector.shape_cast %136 : vector<8xf32> to vector<8x1xf32>
    %138 = tpu.reciprocal %137 : vector<8x1xf32> -> vector<8x1xf32>
    %139 = vector.broadcast %138 : vector<8x1xf32> to vector<8x8xf32>
    %140 = arith.mulf %135, %139 : vector<8x8xf32>
    %141 = arith.truncf %140 : vector<8x8xf32> to vector<8x8xbf16>
    %cst_70 = arith.constant dense<0.000000e+00> : vector<8x16xf32>
    %142 = tpu.matmul %141, %125, %cst_70 {dimension_numbers = #tpu.dot_dimension_numbers<[1], [0], [0], [1], [0, 0, 1, 1], [], []>} : vector<8x8xbf16>, vector<8x16xbf16>, vector<8x16xf32> -> vector<8x16xf32>
    %c0_71 = arith.constant 0 : index
    %c16_72 = arith.constant 16 : index
    %143 = vector.load %arg30[%c0_71, %c16_72] : memref<8x32xf32, #tpu.memory_space<vmem>>, vector<8x16xf32>
    tpu.vector_store %arg30[%c0_71, %c16_72], %142 {strides = array<i32>} : memref<8x32xf32, #tpu.memory_space<vmem>>, vector<8x16xf32>,
    %c0_73 = arith.constant 0 : index
    %c0_74 = arith.constant 0 : index
    %144 = vector.load %arg30[%c0_73, %c0_74] : memref<8x32xf32, #tpu.memory_space<vmem>>, vector<8x32xf32>
    %c0_75 = arith.constant 0 : index
    %c0_76 = arith.constant 0 : index
    %145 = vector.load %arg17[%c0_75, %c0_76] : memref<32x32xbf16, #tpu.memory_space<vmem>>, vector<32x32xbf16>
    %146 = arith.truncf %144 : vector<8x32xf32> to vector<8x32xbf16>
    %cst_77 = arith.constant dense<0.000000e+00> : vector<8x32xf32>
    %147 = tpu.matmul %146, %145, %cst_77 {dimension_numbers = #tpu.dot_dimension_numbers<[1], [0], [0], [1], [0, 0, 1, 1], [], []>} : vector<8x32xbf16>, vector<32x32xbf16>, vector<8x32xf32> -> vector<8x32xf32>
    %148 = arith.addf %97, %147 : vector<8x32xf32>
    %c0_78 = arith.constant 0 : index
    %c0_79 = arith.constant 0 : index
    %149 = vector.load %arg18[%c0_78, %c0_79] : memref<1x32xf32, #tpu.memory_space<vmem>>, vector<1x32xf32>
    %150 = vector.broadcast %149 : vector<1x32xf32> to vector<8x32xf32>
    %151 = arith.addf %148, %150 : vector<8x32xf32>
    %c0_80 = arith.constant 0 : index
    %c0_81 = arith.constant 0 : index
    %152 = vector.load %arg19[%c0_80, %c0_81] : memref<1x32xf32, #tpu.memory_space<vmem>>, vector<1x32xf32>
    %c0_82 = arith.constant 0 : index
    %c0_83 = arith.constant 0 : index
    %153 = vector.load %arg20[%c0_82, %c0_83] : memref<1x32xf32, #tpu.memory_space<vmem>>, vector<1x32xf32>
    %cst_84 = arith.constant dense<0.000000e+00> : vector<8xf32>
    %154 = vector.multi_reduction <add>, %151, %cst_84 [1] : vector<8x32xf32> to vector<8xf32>
    %155 = vector.shape_cast %154 : vector<8xf32> to vector<8x1xf32>
    %cst_85 = arith.constant 3.200000e+01 : f32
    %156 = vector.broadcast %cst_85 : f32 to vector<8x1xf32>
    %157 = arith.divf %155, %156 : vector<8x1xf32>
    %158 = vector.broadcast %157 : vector<8x1xf32> to vector<8x32xf32>
    %159 = arith.subf %151, %158 : vector<8x32xf32>
    %160 = arith.mulf %159, %159 : vector<8x32xf32>
    %cst_86 = arith.constant dense<0.000000e+00> : vector<8xf32>
    %161 = vector.multi_reduction <add>, %160, %cst_86 [1] : vector<8x32xf32> to vector<8xf32>
    %162 = vector.shape_cast %161 : vector<8xf32> to vector<8x1xf32>
    %cst_87 = arith.constant 3.200000e+01 : f32
    %163 = vector.broadcast %cst_87 : f32 to vector<8x1xf32>
    %164 = arith.divf %162, %163 : vector<8x1xf32>
    %cst_88 = arith.constant 9.99999974E-6 : f32
    %165 = vector.broadcast %cst_88 : f32 to vector<8x1xf32>
    %166 = arith.addf %164, %165 : vector<8x1xf32>
    %167 = math.rsqrt %166 : vector<8x1xf32>
    %168 = vector.broadcast %167 : vector<8x1xf32> to vector<8x32xf32>
    %169 = arith.mulf %159, %168 : vector<8x32xf32>
    %170 = vector.broadcast %152 : vector<1x32xf32> to vector<8x32xf32>
    %171 = arith.mulf %169, %170 : vector<8x32xf32>
    %172 = vector.broadcast %153 : vector<1x32xf32> to vector<8x32xf32>
    %173 = arith.addf %171, %172 : vector<8x32xf32>
    %c0_89 = arith.constant 0 : index
    %c0_90 = arith.constant 0 : index
    %174 = vector.load %arg21[%c0_89, %c0_90] : memref<32x64xbf16, #tpu.memory_space<vmem>>, vector<32x64xbf16>
    %175 = arith.truncf %173 : vector<8x32xf32> to vector<8x32xbf16>
    %cst_91 = arith.constant dense<0.000000e+00> : vector<8x64xf32>
    %176 = tpu.matmul %175, %174, %cst_91 {dimension_numbers = #tpu.dot_dimension_numbers<[1], [0], [0], [1], [0, 0, 1, 1], [], []>} : vector<8x32xbf16>, vector<32x64xbf16>, vector<8x64xf32> -> vector<8x64xf32>
    %c0_92 = arith.constant 0 : index
    %c0_93 = arith.constant 0 : index
    %177 = vector.load %arg22[%c0_92, %c0_93] : memref<1x64xf32, #tpu.memory_space<vmem>>, vector<1x64xf32>
    %178 = vector.broadcast %177 : vector<1x64xf32> to vector<8x64xf32>
    %179 = arith.addf %176, %178 : vector<8x64xf32>
    %cst_94 = arith.constant 0.000000e+00 : f32
    %180 = vector.broadcast %cst_94 : f32 to vector<8x64xf32>
    %181 = arith.maximumf %179, %180 : vector<8x64xf32>
    %c0_95 = arith.constant 0 : index
    %c0_96 = arith.constant 0 : index
    %182 = vector.load %arg23[%c0_95, %c0_96] : memref<64x32xbf16, #tpu.memory_space<vmem>>, vector<64x32xbf16>
    %183 = arith.truncf %181 : vector<8x64xf32> to vector<8x64xbf16>
    %cst_97 = arith.constant dense<0.000000e+00> : vector<8x32xf32>
    %184 = tpu.matmul %183, %182, %cst_97 {dimension_numbers = #tpu.dot_dimension_numbers<[1], [0], [0], [1], [0, 0, 1, 1], [], []>} : vector<8x64xbf16>, vector<64x32xbf16>, vector<8x32xf32> -> vector<8x32xf32>
    %185 = arith.addf %173, %184 : vector<8x32xf32>
    %c0_98 = arith.constant 0 : index
    %c0_99 = arith.constant 0 : index
    %186 = vector.load %arg24[%c0_98, %c0_99] : memref<1x32xf32, #tpu.memory_space<vmem>>, vector<1x32xf32>
    %187 = vector.broadcast %186 : vector<1x32xf32> to vector<8x32xf32>
    %188 = arith.addf %185, %187 : vector<8x32xf32>
    %c0_100 = arith.constant 0 : index
    %c0_101 = arith.constant 0 : index
    %189 = vector.load %arg25[%c0_100, %c0_101] : memref<1x32xf32, #tpu.memory_space<vmem>>, vector<1x32xf32>
    %c0_102 = arith.constant 0 : index
    %c0_103 = arith.constant 0 : index
    %190 = vector.load %arg26[%c0_102, %c0_103] : memref<1x32xf32, #tpu.memory_space<vmem>>, vector<1x32xf32>
    %cst_104 = arith.constant dense<0.000000e+00> : vector<8xf32>
    %191 = vector.multi_reduction <add>, %188, %cst_104 [1] : vector<8x32xf32> to vector<8xf32>
    %192 = vector.shape_cast %191 : vector<8xf32> to vector<8x1xf32>
    %cst_105 = arith.constant 3.200000e+01 : f32
    %193 = vector.broadcast %cst_105 : f32 to vector<8x1xf32>
    %194 = arith.divf %192, %193 : vector<8x1xf32>
    %195 = vector.broadcast %194 : vector<8x1xf32> to vector<8x32xf32>
    %196 = arith.subf %188, %195 : vector<8x32xf32>
    %197 = arith.mulf %196, %196 : vector<8x32xf32>
    %cst_106 = arith.constant dense<0.000000e+00> : vector<8xf32>
    %198 = vector.multi_reduction <add>, %197, %cst_106 [1] : vector<8x32xf32> to vector<8xf32>
    %199 = vector.shape_cast %198 : vector<8xf32> to vector<8x1xf32>
    %cst_107 = arith.constant 3.200000e+01 : f32
    %200 = vector.broadcast %cst_107 : f32 to vector<8x1xf32>
    %201 = arith.divf %199, %200 : vector<8x1xf32>
    %cst_108 = arith.constant 9.99999974E-6 : f32
    %202 = vector.broadcast %cst_108 : f32 to vector<8x1xf32>
    %203 = arith.addf %201, %202 : vector<8x1xf32>
    %204 = math.rsqrt %203 : vector<8x1xf32>
    %205 = vector.broadcast %204 : vector<8x1xf32> to vector<8x32xf32>
    %206 = arith.mulf %196, %205 : vector<8x32xf32>
    %207 = vector.broadcast %189 : vector<1x32xf32> to vector<8x32xf32>
    %208 = arith.mulf %206, %207 : vector<8x32xf32>
    %209 = vector.broadcast %190 : vector<1x32xf32> to vector<8x32xf32>
    %210 = arith.addf %208, %209 : vector<8x32xf32>
    %c0_109 = arith.constant 0 : index
    %c0_110 = arith.constant 0 : index
    %c0_111 = arith.constant 0 : index
    %211 = vector.load %arg27[%c0_109, %c0_110, %c0_111] : memref<1x8x32xf32, #tpu.memory_space<vmem>>, vector<1x8x32xf32>
    %212 = vector.shape_cast %211 : vector<1x8x32xf32> to vector<8x32xf32>
    %213 = vector.shape_cast %210 : vector<8x32xf32> to vector<1x8x32xf32>
    tpu.vector_store %arg27[%c0_109, %c0_110, %c0_111], %213 {strides = array<i32>} : memref<1x8x32xf32, #tpu.memory_space<vmem>>, vector<1x8x32xf32>,
    return
  }
  func.func @transform_0(%arg0: i32, %arg1: i32) -> (i32, i32, i32) {
    %c0_i32 = arith.constant 0 : i32
    %c0_i32_0 = arith.constant 0 : i32
    %c0_i32_1 = arith.constant 0 : i32
    return %arg0, %c0_i32, %c0_i32_0 : i32, i32, i32
  }
  func.func @transform_1(%arg0: i32, %arg1: i32) -> (i32, i32, i32) {
    %c0_i32 = arith.constant 0 : i32
    %c0_i32_0 = arith.constant 0 : i32
    %c0_i32_1 = arith.constant 0 : i32
    return %arg0, %c0_i32, %c0_i32_0 : i32, i32, i32
  }
  func.func @transform_2(%arg0: i32, %arg1: i32) -> (i32, i32, i32) {
    %c0_i32 = arith.constant 0 : i32
    %c0_i32_0 = arith.constant 0 : i32
    %c0_i32_1 = arith.constant 0 : i32
    return %arg0, %c0_i32, %c0_i32_0 : i32, i32, i32
  }
  func.func @transform_3(%arg0: i32, %arg1: i32) -> (i32, i32) {
    %c0_i32 = arith.constant 0 : i32
    %c0_i32_0 = arith.constant 0 : i32
    %c0_i32_1 = arith.constant 0 : i32
    return %c0_i32, %c0_i32_0 : i32, i32
  }
  func.func @transform_4(%arg0: i32, %arg1: i32) -> (i32, i32) {
    %c0_i32 = arith.constant 0 : i32
    %c0_i32_0 = arith.constant 0 : i32
    %c0_i32_1 = arith.constant 0 : i32
    return %c0_i32, %c0_i32_0 : i32, i32
  }
  func.func @transform_5(%arg0: i32, %arg1: i32) -> (i32, i32) {
    %c0_i32 = arith.constant 0 : i32
    %c0_i32_0 = arith.constant 0 : i32
    %c0_i32_1 = arith.constant 0 : i32
    return %c0_i32, %c0_i32_0 : i32, i32
  }
  func.func @transform_6(%arg0: i32, %arg1: i32) -> (i32, i32) {
    %c0_i32 = arith.constant 0 : i32
    %c0_i32_0 = arith.constant 0 : i32
    %c0_i32_1 = arith.constant 0 : i32
    return %c0_i32, %c0_i32_0 : i32, i32
  }
  func.func @transform_7(%arg0: i32, %arg1: i32) -> (i32, i32) {
    %c0_i32 = arith.constant 0 : i32
    %c0_i32_0 = arith.constant 0 : i32
    %c0_i32_1 = arith.constant 0 : i32
    return %c0_i32, %c0_i32_0 : i32, i32
  }
  func.func @transform_8(%arg0: i32, %arg1: i32) -> (i32, i32) {
    %c0_i32 = arith.constant 0 : i32
    %c0_i32_0 = arith.constant 0 : i32
    %c0_i32_1 = arith.constant 0 : i32
    return %c0_i32, %c0_i32_0 : i32, i32
  }
  func.func @transform_9(%arg0: i32, %arg1: i32) -> (i32, i32) {
    %c0_i32 = arith.constant 0 : i32
    %c0_i32_0 = arith.constant 0 : i32
    %c0_i32_1 = arith.constant 0 : i32
    return %c0_i32, %c0_i32_0 : i32, i32
  }
  func.func @transform_10(%arg0: i32, %arg1: i32) -> (i32, i32) {
    %c0_i32 = arith.constant 0 : i32
    %c0_i32_0 = arith.constant 0 : i32
    %c0_i32_1 = arith.constant 0 : i32
    return %c0_i32, %c0_i32_0 : i32, i32
  }
  func.func @transform_11(%arg0: i32, %arg1: i32) -> (i32, i32) {
    %c0_i32 = arith.constant 0 : i32
    %c0_i32_0 = arith.constant 0 : i32
    %c0_i32_1 = arith.constant 0 : i32
    return %c0_i32, %c0_i32_0 : i32, i32
  }
  func.func @transform_12(%arg0: i32, %arg1: i32) -> (i32, i32) {
    %c0_i32 = arith.constant 0 : i32
    %c0_i32_0 = arith.constant 0 : i32
    %c0_i32_1 = arith.constant 0 : i32
    return %c0_i32, %c0_i32_0 : i32, i32
  }
  func.func @transform_13(%arg0: i32, %arg1: i32) -> (i32, i32) {
    %c0_i32 = arith.constant 0 : i32
    %c0_i32_0 = arith.constant 0 : i32
    %c0_i32_1 = arith.constant 0 : i32
    return %c0_i32, %c0_i32_0 : i32, i32
  }
  func.func @transform_14(%arg0: i32, %arg1: i32) -> (i32, i32) {
    %c0_i32 = arith.constant 0 : i32
    %c0_i32_0 = arith.constant 0 : i32
    %c0_i32_1 = arith.constant 0 : i32
    return %c0_i32, %c0_i32_0 : i32, i32
  }
  func.func @transform_15(%arg0: i32, %arg1: i32) -> (i32, i32) {
    %c0_i32 = arith.constant 0 : i32
    %c0_i32_0 = arith.constant 0 : i32
    %c0_i32_1 = arith.constant 0 : i32
    return %c0_i32, %c0_i32_0 : i32, i32
  }
  func.func @transform_16(%arg0: i32, %arg1: i32) -> (i32, i32) {
    %c0_i32 = arith.constant 0 : i32
    %c0_i32_0 = arith.constant 0 : i32
    %c0_i32_1 = arith.constant 0 : i32
    return %c0_i32, %c0_i32_0 : i32, i32
  }
  func.func @transform_17(%arg0: i32, %arg1: i32) -> (i32, i32) {
    %c0_i32 = arith.constant 0 : i32
    %c0_i32_0 = arith.constant 0 : i32
    %c0_i32_1 = arith.constant 0 : i32
    return %c0_i32, %c0_i32_0 : i32, i32
  }
  func.func @transform_18(%arg0: i32, %arg1: i32) -> (i32, i32) {
    %c0_i32 = arith.constant 0 : i32
    %c0_i32_0 = arith.constant 0 : i32
    %c0_i32_1 = arith.constant 0 : i32
    return %c0_i32, %c0_i32_0 : i32, i32
  }
  func.func @transform_19(%arg0: i32, %arg1: i32) -> (i32, i32) {
    %c0_i32 = arith.constant 0 : i32
    %c0_i32_0 = arith.constant 0 : i32
    %c0_i32_1 = arith.constant 0 : i32
    return %c0_i32, %c0_i32_0 : i32, i32
  }
  func.func @transform_20(%arg0: i32, %arg1: i32) -> (i32, i32) {
    %c0_i32 = arith.constant 0 : i32
    %c0_i32_0 = arith.constant 0 : i32
    %c0_i32_1 = arith.constant 0 : i32
    return %c0_i32, %c0_i32_0 : i32, i32
  }
  func.func @transform_21(%arg0: i32, %arg1: i32) -> (i32, i32) {
    %c0_i32 = arith.constant 0 : i32
    %c0_i32_0 = arith.constant 0 : i32
    %c0_i32_1 = arith.constant 0 : i32
    return %c0_i32, %c0_i32_0 : i32, i32
  }
  func.func @transform_22(%arg0: i32, %arg1: i32) -> (i32, i32) {
    %c0_i32 = arith.constant 0 : i32
    %c0_i32_0 = arith.constant 0 : i32
    %c0_i32_1 = arith.constant 0 : i32
    return %c0_i32, %c0_i32_0 : i32, i32
  }
  func.func @transform_23(%arg0: i32, %arg1: i32) -> (i32, i32) {
    %c0_i32 = arith.constant 0 : i32
    %c0_i32_0 = arith.constant 0 : i32
    %c0_i32_1 = arith.constant 0 : i32
    return %c0_i32, %c0_i32_0 : i32, i32
  }
  func.func @transform_24(%arg0: i32, %arg1: i32) -> (i32, i32) {
    %c0_i32 = arith.constant 0 : i32
    %c0_i32_0 = arith.constant 0 : i32
    %c0_i32_1 = arith.constant 0 : i32
    return %c0_i32, %c0_i32_0 : i32, i32
  }
  func.func @transform_25(%arg0: i32, %arg1: i32) -> (i32, i32, i32) {
    %c0_i32 = arith.constant 0 : i32
    %c0_i32_0 = arith.constant 0 : i32
    return %arg0, %arg1, %c0_i32 : i32, i32, i32
  }
}

</mosaic_0001>

<llo_original>
// kernel: key_emotions_forward.4
$region0: #{key_emotions_forward.4}
  #allocation0 [shape = 'u32[]', space=smem, size = 0x4, offset = 0x4, fixed_abs, tag = 'smem constant byte address 0x4 - core index']
  #allocation1 [shape = 'u32[144,128]{1,0:T(1,128)}', space=vmem, size = 0x12000, scoped, tag = 'internal scratch']
  %s0 = inlined_call_operand.vmem [shape: f32[2,8,32], index: 0, kind: input, shape index: {}]
  %s1 = inlined_call_operand.vmem [shape: f32[8,32], index: 1, kind: input, shape index: {}]
  %s2 = inlined_call_operand.vmem [shape: f32[1,32], index: 2, kind: input, shape index: {}]
  %s3 = inlined_call_operand.vmem [shape: f32[1,32], index: 3, kind: input, shape index: {}]
  %s4 = inlined_call_operand.vmem [shape: f32[2,8,32], index: 4, kind: output, shape index: {}]
  %s5 = sld [smem:[#allocation0]]
  $region49: #{key_emotions_forward.4} parent=0
    _
  %s7 = ssub.s32 1, %s5
  %s8 = scalar_select 0, %s7, %s5
  loop: start=0, step=1, limit=4
  $region2: #{key_emotions_forward.4} parent=0 // loop_pre_header
    _
  $region3: #{key_emotions_forward.4} parent=0 // loop_header
    %s10 = sphi 0, %s14
    %p11 = scmp.ge.s32.totalorder %s10, 4
    %s20 = sphi 0, %s22
    %s23 = sphi 0, %s20
    %s24 = sphi 0, %s23
    %s40 = sphi 0, %s24
    %s44 = sphi 0, %s44
    %s46 = sphi 0, %s44
    %s47 = sphi 0, %s46
    %s61 = sphi 0, %s47
    %s65 = sphi 0, %s65
    %s67 = sphi 0, %s65
    %s68 = sphi 0, %s67
    %s82 = sphi 0, %s68
    %s86 = sphi 0, %s86
    %s88 = sphi 0, %s86
    %s89 = sphi 0, %s88
    %s103 = sphi 0, %s89
    %s109 = sphi 0, %s111
    %s112 = sphi 0, %s109
    %s113 = sphi 0, %s112
    %s129 = sphi 0, %s113
  $region4: #{key_emotions_forward.4} parent=0 // loop_header_branch
    %13 = sbr.rel (%p11) target = $region8
  $region5: #{key_emotions_forward.4} parent=0 // loop_body
    %s15 = ssub.s32 %s10, 1
    %s16 = ssub.s32 %s10, 2
    %s17 = sadd.s32 %s10, 1
    %s18 = ssub.s32 %s10, %s17
    %p19 = scmp.eq.s32.totalorder %s18, 0
    %s21 = sadd.s32 %s20, 1
    %s22 = scalar_select %p19, %s20, %s21
    %p25 = pneg %p19
    %p26 = scmp.eq.s32.totalorder %s10, 1
    %p27 = por %p25, %p26
    %p28 = scmp.ne.s32.totalorder %s20, %s23
    %p29 = scmp.eq.s32.totalorder %s10, 0
    %p30 = por %p28, %p29
    %p31 = scmp.ne.s32.totalorder %s20, %s23
    %p32 = scmp.eq.s32.totalorder %s15, 1
    %p33 = por %p31, %p32
    %p34 = scmp.ne.s32.totalorder %s23, %s24
    %p35 = scmp.eq.s32.totalorder %s15, 0
    %p36 = por %p34, %p35
    %p37 = scmp.ne.s32.totalorder %s23, %s24
    %p38 = scmp.eq.s32.totalorder %s16, 1
    %p39 = por %p37, %p38
    %p41 = scmp.ne.s32.totalorder %s24, %s40
    %p42 = scmp.eq.s32.totalorder %s16, 0
    %p43 = por %p41, %p42
    %s45 = sadd.s32 %s44, 1
    %p48 = scmp.eq.s32.totalorder %s10, 1
    %p49 = scmp.ne.s32.totalorder %s44, %s46
    %p50 = scmp.eq.s32.totalorder %s10, 0
    %p51 = por %p49, %p50
    %p52 = scmp.ne.s32.totalorder %s44, %s46
    %p53 = scmp.eq.s32.totalorder %s15, 1
    %p54 = por %p52, %p53
    %p55 = scmp.ne.s32.totalorder %s46, %s47
    %p56 = scmp.eq.s32.totalorder %s15, 0
    %p57 = por %p55, %p56
    %p58 = scmp.ne.s32.totalorder %s46, %s47
    %p59 = scmp.eq.s32.totalorder %s16, 1
    %p60 = por %p58, %p59
    %p62 = scmp.ne.s32.totalorder %s47, %s61
    %p63 = scmp.eq.s32.totalorder %s16, 0
    %p64 = por %p62, %p63
    %s66 = sadd.s32 %s65, 1
    %p69 = scmp.eq.s32.totalorder %s10, 1
    %p70 = scmp.ne.s32.totalorder %s65, %s67
    %p71 = scmp.eq.s32.totalorder %s10, 0
    %p72 = por %p70, %p71
    %p73 = scmp.ne.s32.totalorder %s65, %s67
    %p74 = scmp.eq.s32.totalorder %s15, 1
    %p75 = por %p73, %p74
    %p76 = scmp.ne.s32.totalorder %s67, %s68
    %p77 = scmp.eq.s32.totalorder %s15, 0
    %p78 = por %p76, %p77
    %p79 = scmp.ne.s32.totalorder %s67, %s68
    %p80 = scmp.eq.s32.totalorder %s16, 1
    %p81 = por %p79, %p80
    %p83 = scmp.ne.s32.totalorder %s68, %s82
    %p84 = scmp.eq.s32.totalorder %s16, 0
    %p85 = por %p83, %p84
    %s87 = sadd.s32 %s86, 1
    %p90 = scmp.eq.s32.totalorder %s10, 1
    %p91 = scmp.ne.s32.totalorder %s86, %s88
    %p92 = scmp.eq.s32.totalorder %s10, 0
    %p93 = por %p91, %p92
    %p94 = scmp.ne.s32.totalorder %s86, %s88
    %p95 = scmp.eq.s32.totalorder %s15, 1
    %p96 = por %p94, %p95
    %p97 = scmp.ne.s32.totalorder %s88, %s89
    %p98 = scmp.eq.s32.totalorder %s15, 0
    %p99 = por %p97, %p98
    %p100 = scmp.ne.s32.totalorder %s88, %s89
    %p101 = scmp.eq.s32.totalorder %s16, 1
    %p102 = por %p100, %p101
    %p104 = scmp.ne.s32.totalorder %s89, %s103
    %p105 = scmp.eq.s32.totalorder %s16, 0
    %p106 = por %p104, %p105
    %s107 = ssub.s32 %s10, %s17
    %p108 = scmp.eq.s32.totalorder %s107, 0
    %s110 = sadd.s32 %s109, 1
    %s111 = scalar_select %p108, %s109, %s110
    %p114 = pneg %p108
    %p115 = scmp.eq.s32.totalorder %s10, 1
    %p116 = por %p114, %p115
    %p117 = scmp.ne.s32.totalorder %s109, %s112
    %p118 = scmp.eq.s32.totalorder %s10, 0
    %p119 = por %p117, %p118
    %p120 = scmp.ne.s32.totalorder %s109, %s112
    %p121 = scmp.eq.s32.totalorder %s15, 1
    %p122 = por %p120, %p121
    %p123 = scmp.ne.s32.totalorder %s112, %s113
    %p124 = scmp.eq.s32.totalorder %s15, 0
    %p125 = por %p123, %p124
    %p126 = scmp.ne.s32.totalorder %s112, %s113
    %p127 = scmp.eq.s32.totalorder %s16, 1
    %p128 = por %p126, %p127
    %p130 = scmp.ne.s32.totalorder %s113, %s129
    %p131 = scmp.eq.s32.totalorder %s16, 0
    %p132 = por %p130, %p131
    %p133 = scmp.le.s32.totalorder 1, %s10
    %p134 = scmp.lt.s32.totalorder %s10, 3
    %p135 = pnand %p133, %p134
    %p136 = pneg %p135
    // Predicated region
    $region9: #{key_emotions_forward.4} parent=5 // pred_check
      _
    $region10: #{key_emotions_forward.4} parent=5 // pred_check_branch
      %138 = sbr.rel (%p135) target = $region12
    $region11: #{key_emotions_forward.4} parent=5 // pred_region
      %s139 = ssub.s32 %s10, 1
      // Predicated region
      $region13: #{key_emotions_forward.4} parent=11 // pred_check
        %p140 = pneg %p57
      $region14: #{key_emotions_forward.4} parent=11 // pred_check_branch
        %142 = sbr.rel (%p140) target = $region16
      $region15: #{key_emotions_forward.4} parent=11 // pred_region
        _
      $region16: #{key_emotions_forward.4} parent=11 // pred_fallthru
        _
      // Predicated region
      $region17: #{key_emotions_forward.4} parent=11 // pred_check
        %p143 = pneg %p78
      $region18: #{key_emotions_forward.4} parent=11 // pred_check_branch
        %145 = sbr.rel (%p143) target = $region20
      $region19: #{key_emotions_forward.4} parent=11 // pred_region
        _
      $region20: #{key_emotions_forward.4} parent=11 // pred_fallthru
        _
      // Predicated region
      $region21: #{key_emotions_forward.4} parent=11 // pred_check
        %p146 = pneg %p99
      $region22: #{key_emotions_forward.4} parent=11 // pred_check_branch
        %148 = sbr.rel (%p146) target = $region24
      $region23: #{key_emotions_forward.4} parent=11 // pred_region
        _
      $region24: #{key_emotions_forward.4} parent=11 // pred_fallthru
        _
    $region12: #{key_emotions_forward.4} parent=5 // pred_fallthru
      _
    %p149 = scmp.lt.s32.totalorder %s10, 2
    // Predicated region
    $region25: #{key_emotions_forward.4} parent=5 // pred_check
      %p150 = pneg %p149
    $region26: #{key_emotions_forward.4} parent=5 // pred_check_branch
      %152 = sbr.rel (%p150) target = $region28
    $region27: #{key_emotions_forward.4} parent=5 // pred_region
      // Predicated region
      $region29: #{key_emotions_forward.4} parent=27 // pred_check
        %p153 = pneg %p30
      $region30: #{key_emotions_forward.4} parent=27 // pred_check_branch
        %155 = sbr.rel (%p153) target = $region32
      $region31: #{key_emotions_forward.4} parent=27 // pred_region
        %p156 = scmp.lt.s32.totalorder %s10, 1
        %s157 = scalar_select %p156, %s10, 1
        %s158 = smul.addr %s157, 8
        %s159 = scalar_lea.vmem %s0, %s158
      $region32: #{key_emotions_forward.4} parent=27 // pred_fallthru
        _
    $region28: #{key_emotions_forward.4} parent=5 // pred_fallthru
      _
    %p160 = scmp.le.s32.totalorder 1, %s10
    %p161 = scmp.lt.s32.totalorder %s10, 3
    %p162 = pnand %p160, %p161
    %p163 = pneg %p162
    // Predicated region
    $region33: #{key_emotions_forward.4} parent=5 // pred_check
      _
    $region34: #{key_emotions_forward.4} parent=5 // pred_check_branch
      %165 = sbr.rel (%p162) target = $region36
    $region35: #{key_emotions_forward.4} parent=5 // pred_region
      %s166 = ssub.s32 %s10, 1
      %p167 = scmp.lt.s32.totalorder %s15, 1
      %s168 = scalar_select %p167, %s15, 1
      %s169 = smul.addr %s168, 8
      %s170 = scalar_lea.vmem %s0, %s169
      %p171 = pneg %p36
      %p172 = pneg %p33
      %p173 = pneg %p57
      %p174 = pneg %p54
      %p175 = pneg %p78
      %p176 = pneg %p75
      %p177 = pneg %p99
      %p178 = pneg %p96
      %p179 = pneg %p125
      %p180 = pneg %p122
      %p181 = scmp.lt.s32.totalorder %s15, 1
      %s182 = scalar_select %p181, %s15, 1
      %s183 = smul.addr %s182, 8
      %s184 = scalar_lea.vmem %s4, %s183
      %p185 = scmp.lt.s32.totalorder %s15, 1
      %s186 = scalar_select %p185, %s15, 1
      %s187 = smul.addr %s186, 8
      %s188 = scalar_lea.vmem %s0, %s187
      %p189 = scmp.lt.s32.totalorder %s15, 1
      %s190 = scalar_select %p189, %s15, 1
      %s191 = smul.addr %s190, 8
      %s192 = scalar_lea.vmem %s4, %s191
      %v193 = vld [vmem:[%s188] sm:$0xff]
      %v194 = vld [vmem:[%s1] sm:$0xff]
      %v195 = vadd.f32 %v193, %v194
      %v196 = vld [vmem:[%s2] sm:$0x1]
      %v197 = vld [vmem:[%s3] sm:$0x1]
      %vm198 = vcmask 261120
      %v199 = vsel %vm198, %v195, 0.0
      %200 = vadd.xlane.f32.xlu0 %v199
      %v201 = vpop.xlane.xlu0 %200
      %v202 = vrcp.pop 32.0
      %v203 = vmul.f32 %v201, %v202
      %v204 = vsub.f32 %v195, %v203
      %v205 = vmul.f32 %v204, %v204
      %v206 = vsel %vm198, %v205, 0.0
      %207 = vadd.xlane.f32.xlu0 %v206
      %v208 = vpop.xlane.xlu0 %207
      %v209 = vmul.f32 %v208, %v202
      %v210 = vadd.f32 %v209, 1e-05
      %v211 = vrsqrt.pop %v210
      %v212 = vmul.f32 %v204, %v211
      %v214 = vlaneseq
      %v215 = vshrl.u32 %v214, 7
      %v216 = vsub.s32 0, %v215
      %v217 = vrot.slane %v196, %v216
      %v219 = vmul.f32 %v212, %v217
      %v221 = vlaneseq
      %v222 = vshrl.u32 %v221, 7
      %v223 = vsub.s32 0, %v222
      %v224 = vrot.slane %v197, %v223
      %v226 = vadd.f32 %v219, %v224
      %227 = vst.msk [vmem:[%s192] sm:$0xff] %vm198, %v226
      %p228 = scmp.lt.s32.totalorder %s15, 1
      %s229 = scalar_select %p228, %s15, 1
      %s230 = smul.addr %s229, 8
      %s231 = scalar_lea.vmem %s4, %s230
      // Predicated region
      $region37: #{key_emotions_forward.4} parent=35 // pred_check
        %p232 = pneg %p122
      $region38: #{key_emotions_forward.4} parent=35 // pred_check_branch
        %234 = sbr.rel (%p232) target = $region40
      $region39: #{key_emotions_forward.4} parent=35 // pred_region
        _
      $region40: #{key_emotions_forward.4} parent=35 // pred_fallthru
        _
    $region36: #{key_emotions_forward.4} parent=5 // pred_fallthru
      _
    %p235 = scmp.le.s32.totalorder 2, %s10
    // Predicated region
    $region41: #{key_emotions_forward.4} parent=5 // pred_check
      %p236 = pneg %p235
    $region42: #{key_emotions_forward.4} parent=5 // pred_check_branch
      %238 = sbr.rel (%p236) target = $region44
    $region43: #{key_emotions_forward.4} parent=5 // pred_region
      %s239 = ssub.s32 %s10, 2
      // Predicated region
      $region45: #{key_emotions_forward.4} parent=43 // pred_check
        %p240 = pneg %p128
      $region46: #{key_emotions_forward.4} parent=43 // pred_check_branch
        %242 = sbr.rel (%p240) target = $region48
      $region47: #{key_emotions_forward.4} parent=43 // pred_region
        %p243 = scmp.lt.s32.totalorder %s16, 1
        %s244 = scalar_select %p243, %s16, 1
        %s245 = smul.addr %s244, 8
        %s246 = scalar_lea.vmem %s4, %s245
      $region48: #{key_emotions_forward.4} parent=43 // pred_fallthru
        _
    $region44: #{key_emotions_forward.4} parent=5 // pred_fallthru
      _
  $region6: #{key_emotions_forward.4} parent=0 // loop_footer
    %s14 = sadd.s32 1, %s10
  $region7: #{key_emotions_forward.4} parent=0 // loop_footer_branch
    %9 = sbr.rel target = $region3
  $region8: #{key_emotions_forward.4} parent=0 // loop_exit
    _

// kernel: key_emotions_forward.7
$region0: #{key_emotions_forward.7}
  #allocation0 [shape = 'u32[]', space=smem, size = 0x4, offset = 0x4, fixed_abs, tag = 'smem constant byte address 0x4 - core index']
  #allocation1 [shape = 'u32[144,128]{1,0:T(1,128)}', space=vmem, size = 0x12000, scoped, tag = 'internal scratch']
  %s0 = inlined_call_operand.vmem [shape: f32[16,32], index: 0, kind: input, shape index: {}]
  %s1 = inlined_call_operand.vmem [shape: bf16[32,32], index: 1, kind: input, shape index: {}]
  %s2 = inlined_call_operand.vmem [shape: f32[1,32], index: 2, kind: input, shape index: {}]
  %s3 = inlined_call_operand.hbm [shape: f32[16,32], index: 3, kind: output, shape index: {}]
  %s4 = sld [smem:[#allocation0]]
  $region22: #{key_emotions_forward.7} parent=0
    _
  %s6 = ssub.s32 1, %s4
  %s7 = scalar_select 0, %s6, %s4
  $region1: #{key_emotions_forward.7} parent=0
    #allocation2 [shape = 'u8[8192]{0}', space=vmem, size = 0x2000, scoped, tag = 'output window, operand 0, single buffered']
    #allocation3 [shape = 's32[1]{0}', space=sflag, size = 0x4, scoped, tag = 'scoped memory for key_emotions_forward.7']
    %8 = vsyncpa [#allocation3], 0
    // Predicated region
    $region2: #{key_emotions_forward.7} parent=1 // pred_check
      _
    $region3: #{key_emotions_forward.7} parent=1 // pred_check_branch
      %10 = sbr.rel (0) target = $region5
    $region4: #{key_emotions_forward.7} parent=1 // pred_region
      _
    $region5: #{key_emotions_forward.7} parent=1 // pred_fallthru
      _
    // Predicated region
    $region6: #{key_emotions_forward.7} parent=1 // pred_check
      _
    $region7: #{key_emotions_forward.7} parent=1 // pred_check_branch
      %12 = sbr.rel (0) target = $region9
    $region8: #{key_emotions_forward.7} parent=1 // pred_region
      _
    $region9: #{key_emotions_forward.7} parent=1 // pred_fallthru
      _
    // Predicated region
    $region10: #{key_emotions_forward.7} parent=1 // pred_check
      _
    $region11: #{key_emotions_forward.7} parent=1 // pred_check_branch
      %14 = sbr.rel (0) target = $region13
    $region12: #{key_emotions_forward.7} parent=1 // pred_region
      _
    $region13: #{key_emotions_forward.7} parent=1 // pred_fallthru
      _
    %v16 = vld [vmem:[%s0] sm:$0xff]
    %v17 = vld [vmem:[%s0 + $0x8] sm:$0xff]
    %v18 = vld [vmem:[%s1] sm:$0xf]
    %v19 = vld [vmem:[%s1 + $0x4] sm:$0xf]
    %v20 = vld [vmem:[%s1 + $0x8] sm:$0xf]
    %v21 = vld [vmem:[%s1 + $0xc] sm:$0xf]
    %v22 = vpack.c.bf16 %v17, %v16
    %v23 = vld [vmem:[%s2] sm:$0x1]
    %v25 = vlaneseq
    %v26 = vshrl.u32 %v25, 7
    %v27 = vsub.s32 0, %v26
    %v28 = vrot.slane %v23, %v27
    %v34 = vunpack.c.l.b16 %v18
    %v35 = vunpack.c.l.b16 %v19
    %v36 = vunpack.c.l.b16 %v20
    %v37 = vunpack.c.l.b16 %v21
    %v38 = vpack.c.b16 %v35, %v34
    %v39 = vpack.c.b16 %v37, %v36
    %vm42 = vcmask 261120
    %v44 = vsel %vm42, %v22, 0
    %46 = vmatprep.subr.bf16.mxu0 0
    %47 = vmatpush1.bf16.msra.mxu0 %v38
    %48 = vmatprep.subr.bf16.mxu0 0
    %49 = vmatpush1.bf16.msra.mxu0 %v39
    %50 = vmatprep.subr.bf16.mxu0 0
    %51 = vmatpush1.bf16.msra.mxu0 0
    %52 = vmatprep.subr.bf16.mxu0 0
    %53 = vmatpush1.bf16.msra.mxu0 0
    %54 = vmatprep.subr.bf16.mxu0 0
    %55 = vmatpush1.bf16.msra.mxu0 0
    %56 = vmatprep.subr.bf16.mxu0 0
    %57 = vmatpush1.bf16.msra.mxu0 0
    %58 = vmatprep.subr.bf16.mxu0 0
    %59 = vmatpush1.bf16.msra.mxu0 0
    %60 = vmatprep.subr.bf16.mxu0 0
    %61 = vmatpush1.bf16.msra.mxu0 0
    %62 = vmatprep.subr.bf16.mxu0 0
    %63 = vmatpush1.bf16.msra.mxu0 0
    %64 = vmatprep.subr.bf16.mxu0 0
    %65 = vmatpush1.bf16.msra.mxu0 0
    %66 = vmatprep.subr.bf16.mxu0 0
    %67 = vmatpush1.bf16.msra.mxu0 0
    %68 = vmatprep.subr.bf16.mxu0 0
    %69 = vmatpush1.bf16.msra.mxu0 0
    %70 = vmatprep.subr.bf16.mxu0 0
    %71 = vmatpush1.bf16.msra.mxu0 0
    %72 = vmatprep.subr.bf16.mxu0 0
    %73 = vmatpush1.bf16.msra.mxu0 0
    %74 = vmatprep.subr.bf16.mxu0 0
    %75 = vmatpush1.bf16.msra.mxu0 0
    %76 = vmatprep.subr.bf16.mxu0 0
    %77 = vmatpush1.bf16.msra.mxu0 0
    %78 = vmatprep.mubr.bf16.mxu0 0
    %79 = vmatmul.mubr.bf16.gmra.mrb[0].mxu0 %v44
    %v80 = vpop.f32.mrb[0].mxu0
    %v81 = vadd.f32 %v28, %v80
    %v82 = vpop.f32.mrb[0].mxu0
    %v83 = vpop.f32.mrb[0].mxu0
    %v84 = vadd.f32 %v28, %v83
    %v85 = vpop.f32.mrb[0].mxu0
    %86 = vdwg.mxu0
    %87 = vst.msk [vmem:[#allocation2] sm:$0xff] %vm42, %v81
    %88 = vst.msk [vmem:[#allocation2 + $0x8] sm:$0xff] %vm42, %v84
    // Predicated region
    $region14: #{key_emotions_forward.7} parent=1 // pred_check
      _
    $region15: #{key_emotions_forward.7} parent=1 // pred_check_branch
      %90 = sbr.rel (0) target = $region17
    $region16: #{key_emotions_forward.7} parent=1 // pred_region
      %s92 = ssub.s32 256, 256
      %93 = vsyncadd [#allocation3], %s92
      %s94 = sshll.u32 [#allocation2], 4
      %s95 = int_to_ptr.vmem [resolvable:$true] %s94
      %100 = dma.vmem_to_hbm [thread:$0]  %s95, 256, %s3, [#allocation3], 128, 128, 8
    $region17: #{key_emotions_forward.7} parent=1 // pred_fallthru
      _
    // Predicated region
    $region18: #{key_emotions_forward.7} parent=1 // pred_check
      _
    $region19: #{key_emotions_forward.7} parent=1 // pred_check_branch
      %102 = sbr.rel (0) target = $region21
    $region20: #{key_emotions_forward.7} parent=1 // pred_region
      %103 = dma.done [#allocation3], 256
    $region21: #{key_emotions_forward.7} parent=1 // pred_fallthru
      _
    %104 = vsyncpa [#allocation3], 1

// kernel: key_emotions_forward.5
$region0: #{key_emotions_forward.5}
  #allocation0 [shape = 'u32[]', space=smem, size = 0x4, offset = 0x4, fixed_abs, tag = 'smem constant byte address 0x4 - core index']
  #allocation1 [shape = 'u32[144,128]{1,0:T(1,128)}', space=vmem, size = 0x12000, scoped, tag = 'internal scratch']
  #allocation2 [shape = 'bf16[8,64]{1,0:T(8,128)(2,1)}', space=vmem, size = 0x800, scoped, tag = 'scratch operand']
  #allocation3 [shape = 'bf16[8,64]{1,0:T(8,128)(2,1)}', space=vmem, size = 0x800, scoped, tag = 'scratch operand']
  #allocation4 [shape = 'f32[8,32]{1,0:T(8,128)}', space=vmem, size = 0x1000, scoped, tag = 'scratch operand']
  %s0 = inlined_call_operand.vmem [shape: f32[2,8,32], index: 0, kind: input, shape index: {}, may-alias: {0,1}]
  %s1 = inlined_call_operand.vmem [shape: f32[2,8,32], index: 1, kind: input, shape index: {}, may-alias: {0,1}]
  %s2 = inlined_call_operand.vmem [shape: f32[2,1,8], index: 2, kind: input, shape index: {}]
  %s3 = inlined_call_operand.vmem [shape: bf16[32,32], index: 3, kind: input, shape index: {}]
  %s4 = inlined_call_operand.vmem [shape: f32[1,32], index: 4, kind: input, shape index: {}]
  %s5 = inlined_call_operand.vmem [shape: bf16[32,64], index: 5, kind: input, shape index: {}]
  %s6 = inlined_call_operand.vmem [shape: f32[1,64], index: 6, kind: input, shape index: {}]
  %s7 = inlined_call_operand.vmem [shape: bf16[32,32], index: 7, kind: input, shape index: {}]
  %s8 = inlined_call_operand.vmem [shape: f32[1,32], index: 8, kind: input, shape index: {}]
  %s9 = inlined_call_operand.vmem [shape: f32[1,32], index: 9, kind: input, shape index: {}]
  %s10 = inlined_call_operand.vmem [shape: f32[1,32], index: 10, kind: input, shape index: {}]
  %s11 = inlined_call_operand.vmem [shape: bf16[32,32], index: 11, kind: input, shape index: {}]
  %s12 = inlined_call_operand.vmem [shape: f32[1,32], index: 12, kind: input, shape index: {}]
  %s13 = inlined_call_operand.vmem [shape: bf16[32,64], index: 13, kind: input, shape index: {}]
  %s14 = inlined_call_operand.vmem [shape: f32[1,64], index: 14, kind: input, shape index: {}]
  %s15 = inlined_call_operand.vmem [shape: bf16[32,32], index: 15, kind: input, shape index: {}]
  %s16 = inlined_call_operand.vmem [shape: f32[1,32], index: 16, kind: input, shape index: {}]
  %s17 = inlined_call_operand.vmem [shape: f32[1,32], index: 17, kind: input, shape index: {}]
  %s18 = inlined_call_operand.vmem [shape: f32[1,32], index: 18, kind: input, shape index: {}]
  %s19 = inlined_call_operand.vmem [shape: bf16[32,64], index: 19, kind: input, shape index: {}]
  %s20 = inlined_call_operand.vmem [shape: f32[1,64], index: 20, kind: input, shape index: {}]
  %s21 = inlined_call_operand.vmem [shape: bf16[64,32], index: 21, kind: input, shape index: {}]
  %s22 = inlined_call_operand.vmem [shape: f32[1,32], index: 22, kind: input, shape index: {}]
  %s23 = inlined_call_operand.vmem [shape: f32[1,32], index: 23, kind: input, shape index: {}]
  %s24 = inlined_call_operand.vmem [shape: f32[1,32], index: 24, kind: input, shape index: {}]
  %s25 = inlined_call_operand.vmem [shape: f32[2,8,32], index: 25, kind: output, shape index: {}]
  %s26 = sld [smem:[#allocation0]]
  $region137: #{key_emotions_forward.5} parent=0
    _
  %s28 = ssub.s32 1, %s26
  %s29 = scalar_select 0, %s28, %s26
  loop: start=0, step=1, limit=4
  $region2: #{key_emotions_forward.5} parent=0 // loop_pre_header
    _
  $region3: #{key_emotions_forward.5} parent=0 // loop_header
    %s31 = sphi 0, %s35
    %p32 = scmp.ge.s32.totalorder %s31, 4
    %s38 = sphi 0, %s50
    %s39 = sphi 0, %s46
    %s40 = sphi 0, %s38
    %s41 = sphi 0, %s39
    %s42 = sphi 0, %s40
    %s43 = sphi 0, %s41
    %s53 = sphi 0, %s55
    %s56 = sphi 0, %s53
    %s57 = sphi 0, %s56
    %s73 = sphi 0, %s57
    %s79 = sphi 0, %s81
    %s82 = sphi 0, %s79
    %s83 = sphi 0, %s82
    %s99 = sphi 0, %s83
    %s105 = sphi 0, %s107
    %s108 = sphi 0, %s105
    %s109 = sphi 0, %s108
    %s125 = sphi 0, %s109
    %s129 = sphi 0, %s129
    %s131 = sphi 0, %s129
    %s132 = sphi 0, %s131
    %s146 = sphi 0, %s132
    %s150 = sphi 0, %s150
    %s152 = sphi 0, %s150
    %s153 = sphi 0, %s152
    %s167 = sphi 0, %s153
    %s171 = sphi 0, %s171
    %s173 = sphi 0, %s171
    %s174 = sphi 0, %s173
    %s188 = sphi 0, %s174
    %s192 = sphi 0, %s192
    %s194 = sphi 0, %s192
    %s195 = sphi 0, %s194
    %s209 = sphi 0, %s195
    %s213 = sphi 0, %s213
    %s215 = sphi 0, %s213
    %s216 = sphi 0, %s215
    %s230 = sphi 0, %s216
    %s234 = sphi 0, %s234
    %s236 = sphi 0, %s234
    %s237 = sphi 0, %s236
    %s251 = sphi 0, %s237
    %s255 = sphi 0, %s255
    %s257 = sphi 0, %s255
    %s258 = sphi 0, %s257
    %s272 = sphi 0, %s258
    %s276 = sphi 0, %s276
    %s278 = sphi 0, %s276
    %s279 = sphi 0, %s278
    %s293 = sphi 0, %s279
    %s297 = sphi 0, %s297
    %s299 = sphi 0, %s297
    %s300 = sphi 0, %s299
    %s314 = sphi 0, %s300
    %s318 = sphi 0, %s318
    %s320 = sphi 0, %s318
    %s321 = sphi 0, %s320
    %s335 = sphi 0, %s321
    %s339 = sphi 0, %s339
    %s341 = sphi 0, %s339
    %s342 = sphi 0, %s341
    %s356 = sphi 0, %s342
    %s360 = sphi 0, %s360
    %s362 = sphi 0, %s360
    %s363 = sphi 0, %s362
    %s377 = sphi 0, %s363
    %s381 = sphi 0, %s381
    %s383 = sphi 0, %s381
    %s384 = sphi 0, %s383
    %s398 = sphi 0, %s384
    %s402 = sphi 0, %s402
    %s404 = sphi 0, %s402
    %s405 = sphi 0, %s404
    %s419 = sphi 0, %s405
    %s423 = sphi 0, %s423
    %s425 = sphi 0, %s423
    %s426 = sphi 0, %s425
    %s440 = sphi 0, %s426
    %s444 = sphi 0, %s444
    %s446 = sphi 0, %s444
    %s447 = sphi 0, %s446
    %s461 = sphi 0, %s447
    %s465 = sphi 0, %s465
    %s467 = sphi 0, %s465
    %s468 = sphi 0, %s467
    %s482 = sphi 0, %s468
    %s486 = sphi 0, %s486
    %s488 = sphi 0, %s486
    %s489 = sphi 0, %s488
    %s503 = sphi 0, %s489
    %s507 = sphi 0, %s507
    %s509 = sphi 0, %s507
    %s510 = sphi 0, %s509
    %s524 = sphi 0, %s510
    %s528 = sphi 0, %s528
    %s530 = sphi 0, %s528
    %s531 = sphi 0, %s530
    %s545 = sphi 0, %s531
    %s549 = sphi 0, %s549
    %s551 = sphi 0, %s549
    %s552 = sphi 0, %s551
    %s566 = sphi 0, %s552
    %s570 = sphi 0, %s570
    %s572 = sphi 0, %s570
    %s573 = sphi 0, %s572
    %s587 = sphi 0, %s573
    %s595 = sphi 0, %s597
    %s598 = sphi 0, %s595
    %s599 = sphi 0, %s598
    %s615 = sphi 0, %s599
  $region4: #{key_emotions_forward.5} parent=0 // loop_header_branch
    %34 = sbr.rel (%p32) target = $region8
  $region5: #{key_emotions_forward.5} parent=0 // loop_body
    %s36 = ssub.s32 %s31, 1
    %s37 = ssub.s32 %s31, 2
    %s44 = sadd.s32 1, %s39
    %p45 = scmp.ge.s32.totalorder %s44, 1
    %s46 = scalar_select %p45, 0, %s44
    %s47 = sadd.s32 1, %s38
    %s48 = scalar_select %p45, %s47, %s38
    %p49 = scmp.ge.s32.totalorder %s48, 2
    %s50 = scalar_select %p49, 0, %s48
    %s51 = ssub.s32 %s38, %s50
    %p52 = scmp.eq.s32.totalorder %s51, 0
    %s54 = sadd.s32 %s53, 1
    %s55 = scalar_select %p52, %s53, %s54
    %p58 = pneg %p52
    %p59 = scmp.eq.s32.totalorder %s31, 1
    %p60 = por %p58, %p59
    %p61 = scmp.ne.s32.totalorder %s53, %s56
    %p62 = scmp.eq.s32.totalorder %s31, 0
    %p63 = por %p61, %p62
    %p64 = scmp.ne.s32.totalorder %s53, %s56
    %p65 = scmp.eq.s32.totalorder %s36, 1
    %p66 = por %p64, %p65
    %p67 = scmp.ne.s32.totalorder %s56, %s57
    %p68 = scmp.eq.s32.totalorder %s36, 0
    %p69 = por %p67, %p68
    %p70 = scmp.ne.s32.totalorder %s56, %s57
    %p71 = scmp.eq.s32.totalorder %s37, 1
    %p72 = por %p70, %p71
    %p74 = scmp.ne.s32.totalorder %s57, %s73
    %p75 = scmp.eq.s32.totalorder %s37, 0
    %p76 = por %p74, %p75
    %s77 = ssub.s32 %s38, %s50
    %p78 = scmp.eq.s32.totalorder %s77, 0
    %s80 = sadd.s32 %s79, 1
    %s81 = scalar_select %p78, %s79, %s80
    %p84 = pneg %p78
    %p85 = scmp.eq.s32.totalorder %s31, 1
    %p86 = por %p84, %p85
    %p87 = scmp.ne.s32.totalorder %s79, %s82
    %p88 = scmp.eq.s32.totalorder %s31, 0
    %p89 = por %p87, %p88
    %p90 = scmp.ne.s32.totalorder %s79, %s82
    %p91 = scmp.eq.s32.totalorder %s36, 1
    %p92 = por %p90, %p91
    %p93 = scmp.ne.s32.totalorder %s82, %s83
    %p94 = scmp.eq.s32.totalorder %s36, 0
    %p95 = por %p93, %p94
    %p96 = scmp.ne.s32.totalorder %s82, %s83
    %p97 = scmp.eq.s32.totalorder %s37, 1
    %p98 = por %p96, %p97
    %p100 = scmp.ne.s32.totalorder %s83, %s99
    %p101 = scmp.eq.s32.totalorder %s37, 0
    %p102 = por %p100, %p101
    %s103 = ssub.s32 %s38, %s50
    %p104 = scmp.eq.s32.totalorder %s103, 0
    %s106 = sadd.s32 %s105, 1
    %s107 = scalar_select %p104, %s105, %s106
    %p110 = pneg %p104
    %p111 = scmp.eq.s32.totalorder %s31, 1
    %p112 = por %p110, %p111
    %p113 = scmp.ne.s32.totalorder %s105, %s108
    %p114 = scmp.eq.s32.totalorder %s31, 0
    %p115 = por %p113, %p114
    %p116 = scmp.ne.s32.totalorder %s105, %s108
    %p117 = scmp.eq.s32.totalorder %s36, 1
    %p118 = por %p116, %p117
    %p119 = scmp.ne.s32.totalorder %s108, %s109
    %p120 = scmp.eq.s32.totalorder %s36, 0
    %p121 = por %p119, %p120
    %p122 = scmp.ne.s32.totalorder %s108, %s109
    %p123 = scmp.eq.s32.totalorder %s37, 1
    %p124 = por %p122, %p123
    %p126 = scmp.ne.s32.totalorder %s109, %s125
    %p127 = scmp.eq.s32.totalorder %s37, 0
    %p128 = por %p126, %p127
    %s130 = sadd.s32 %s129, 1
    %p133 = scmp.eq.s32.totalorder %s31, 1
    %p134 = scmp.ne.s32.totalorder %s129, %s131
    %p135 = scmp.eq.s32.totalorder %s31, 0
    %p136 = por %p134, %p135
    %p137 = scmp.ne.s32.totalorder %s129, %s131
    %p138 = scmp.eq.s32.totalorder %s36, 1
    %p139 = por %p137, %p138
    %p140 = scmp.ne.s32.totalorder %s131, %s132
    %p141 = scmp.eq.s32.totalorder %s36, 0
    %p142 = por %p140, %p141
    %p143 = scmp.ne.s32.totalorder %s131, %s132
    %p144 = scmp.eq.s32.totalorder %s37, 1
    %p145 = por %p143, %p144
    %p147 = scmp.ne.s32.totalorder %s132, %s146
    %p148 = scmp.eq.s32.totalorder %s37, 0
    %p149 = por %p147, %p148
    %s151 = sadd.s32 %s150, 1
    %p154 = scmp.eq.s32.totalorder %s31, 1
    %p155 = scmp.ne.s32.totalorder %s150, %s152
    %p156 = scmp.eq.s32.totalorder %s31, 0
    %p157 = por %p155, %p156
    %p158 = scmp.ne.s32.totalorder %s150, %s152
    %p159 = scmp.eq.s32.totalorder %s36, 1
    %p160 = por %p158, %p159
    %p161 = scmp.ne.s32.totalorder %s152, %s153
    %p162 = scmp.eq.s32.totalorder %s36, 0
    %p163 = por %p161, %p162
    %p164 = scmp.ne.s32.totalorder %s152, %s153
    %p165 = scmp.eq.s32.totalorder %s37, 1
    %p166 = por %p164, %p165
    %p168 = scmp.ne.s32.totalorder %s153, %s167
    %p169 = scmp.eq.s32.totalorder %s37, 0
    %p170 = por %p168, %p169
    %s172 = sadd.s32 %s171, 1
    %p175 = scmp.eq.s32.totalorder %s31, 1
    %p176 = scmp.ne.s32.totalorder %s171, %s173
    %p177 = scmp.eq.s32.totalorder %s31, 0
    %p178 = por %p176, %p177
    %p179 = scmp.ne.s32.totalorder %s171, %s173
    %p180 = scmp.eq.s32.totalorder %s36, 1
    %p181 = por %p179, %p180
    %p182 = scmp.ne.s32.totalorder %s173, %s174
    %p183 = scmp.eq.s32.totalorder %s36, 0
    %p184 = por %p182, %p183
    %p185 = scmp.ne.s32.totalorder %s173, %s174
    %p186 = scmp.eq.s32.totalorder %s37, 1
    %p187 = por %p185, %p186
    %p189 = scmp.ne.s32.totalorder %s174, %s188
    %p190 = scmp.eq.s32.totalorder %s37, 0
    %p191 = por %p189, %p190
    %s193 = sadd.s32 %s192, 1
    %p196 = scmp.eq.s32.totalorder %s31, 1
    %p197 = scmp.ne.s32.totalorder %s192, %s194
    %p198 = scmp.eq.s32.totalorder %s31, 0
    %p199 = por %p197, %p198
    %p200 = scmp.ne.s32.totalorder %s192, %s194
    %p201 = scmp.eq.s32.totalorder %s36, 1
    %p202 = por %p200, %p201
    %p203 = scmp.ne.s32.totalorder %s194, %s195
    %p204 = scmp.eq.s32.totalorder %s36, 0
    %p205 = por %p203, %p204
    %p206 = scmp.ne.s32.totalorder %s194, %s195
    %p207 = scmp.eq.s32.totalorder %s37, 1
    %p208 = por %p206, %p207
    %p210 = scmp.ne.s32.totalorder %s195, %s209
    %p211 = scmp.eq.s32.totalorder %s37, 0
    %p212 = por %p210, %p211
    %s214 = sadd.s32 %s213, 1
    %p217 = scmp.eq.s32.totalorder %s31, 1
    %p218 = scmp.ne.s32.totalorder %s213, %s215
    %p219 = scmp.eq.s32.totalorder %s31, 0
    %p220 = por %p218, %p219
    %p221 = scmp.ne.s32.totalorder %s213, %s215
    %p222 = scmp.eq.s32.totalorder %s36, 1
    %p223 = por %p221, %p222
    %p224 = scmp.ne.s32.totalorder %s215, %s216
    %p225 = scmp.eq.s32.totalorder %s36, 0
    %p226 = por %p224, %p225
    %p227 = scmp.ne.s32.totalorder %s215, %s216
    %p228 = scmp.eq.s32.totalorder %s37, 1
    %p229 = por %p227, %p228
    %p231 = scmp.ne.s32.totalorder %s216, %s230
    %p232 = scmp.eq.s32.totalorder %s37, 0
    %p233 = por %p231, %p232
    %s235 = sadd.s32 %s234, 1
    %p238 = scmp.eq.s32.totalorder %s31, 1
    %p239 = scmp.ne.s32.totalorder %s234, %s236
    %p240 = scmp.eq.s32.totalorder %s31, 0
    %p241 = por %p239, %p240
    %p242 = scmp.ne.s32.totalorder %s234, %s236
    %p243 = scmp.eq.s32.totalorder %s36, 1
    %p244 = por %p242, %p243
    %p245 = scmp.ne.s32.totalorder %s236, %s237
    %p246 = scmp.eq.s32.totalorder %s36, 0
    %p247 = por %p245, %p246
    %p248 = scmp.ne.s32.totalorder %s236, %s237
    %p249 = scmp.eq.s32.totalorder %s37, 1
    %p250 = por %p248, %p249
    %p252 = scmp.ne.s32.totalorder %s237, %s251
    %p253 = scmp.eq.s32.totalorder %s37, 0
    %p254 = por %p252, %p253
    %s256 = sadd.s32 %s255, 1
    %p259 = scmp.eq.s32.totalorder %s31, 1
    %p260 = scmp.ne.s32.totalorder %s255, %s257
    %p261 = scmp.eq.s32.totalorder %s31, 0
    %p262 = por %p260, %p261
    %p263 = scmp.ne.s32.totalorder %s255, %s257
    %p264 = scmp.eq.s32.totalorder %s36, 1
    %p265 = por %p263, %p264
    %p266 = scmp.ne.s32.totalorder %s257, %s258
    %p267 = scmp.eq.s32.totalorder %s36, 0
    %p268 = por %p266, %p267
    %p269 = scmp.ne.s32.totalorder %s257, %s258
    %p270 = scmp.eq.s32.totalorder %s37, 1
    %p271 = por %p269, %p270
    %p273 = scmp.ne.s32.totalorder %s258, %s272
    %p274 = scmp.eq.s32.totalorder %s37, 0
    %p275 = por %p273, %p274
    %s277 = sadd.s32 %s276, 1
    %p280 = scmp.eq.s32.totalorder %s31, 1
    %p281 = scmp.ne.s32.totalorder %s276, %s278
    %p282 = scmp.eq.s32.totalorder %s31, 0
    %p283 = por %p281, %p282
    %p284 = scmp.ne.s32.totalorder %s276, %s278
    %p285 = scmp.eq.s32.totalorder %s36, 1
    %p286 = por %p284, %p285
    %p287 = scmp.ne.s32.totalorder %s278, %s279
    %p288 = scmp.eq.s32.totalorder %s36, 0
    %p289 = por %p287, %p288
    %p290 = scmp.ne.s32.totalorder %s278, %s279
    %p291 = scmp.eq.s32.totalorder %s37, 1
    %p292 = por %p290, %p291
    %p294 = scmp.ne.s32.totalorder %s279, %s293
    %p295 = scmp.eq.s32.totalorder %s37, 0
    %p296 = por %p294, %p295
    %s298 = sadd.s32 %s297, 1
    %p301 = scmp.eq.s32.totalorder %s31, 1
    %p302 = scmp.ne.s32.totalorder %s297, %s299
    %p303 = scmp.eq.s32.totalorder %s31, 0
    %p304 = por %p302, %p303
    %p305 = scmp.ne.s32.totalorder %s297, %s299
    %p306 = scmp.eq.s32.totalorder %s36, 1
    %p307 = por %p305, %p306
    %p308 = scmp.ne.s32.totalorder %s299, %s300
    %p309 = scmp.eq.s32.totalorder %s36, 0
    %p310 = por %p308, %p309
    %p311 = scmp.ne.s32.totalorder %s299, %s300
    %p312 = scmp.eq.s32.totalorder %s37, 1
    %p313 = por %p311, %p312
    %p315 = scmp.ne.s32.totalorder %s300, %s314
    %p316 = scmp.eq.s32.totalorder %s37, 0
    %p317 = por %p315, %p316
    %s319 = sadd.s32 %s318, 1
    %p322 = scmp.eq.s32.totalorder %s31, 1
    %p323 = scmp.ne.s32.totalorder %s318, %s320
    %p324 = scmp.eq.s32.totalorder %s31, 0
    %p325 = por %p323, %p324
    %p326 = scmp.ne.s32.totalorder %s318, %s320
    %p327 = scmp.eq.s32.totalorder %s36, 1
    %p328 = por %p326, %p327
    %p329 = scmp.ne.s32.totalorder %s320, %s321
    %p330 = scmp.eq.s32.totalorder %s36, 0
    %p331 = por %p329, %p330
    %p332 = scmp.ne.s32.totalorder %s320, %s321
    %p333 = scmp.eq.s32.totalorder %s37, 1
    %p334 = por %p332, %p333
    %p336 = scmp.ne.s32.totalorder %s321, %s335
    %p337 = scmp.eq.s32.totalorder %s37, 0
    %p338 = por %p336, %p337
    %s340 = sadd.s32 %s339, 1
    %p343 = scmp.eq.s32.totalorder %s31, 1
    %p344 = scmp.ne.s32.totalorder %s339, %s341
    %p345 = scmp.eq.s32.totalorder %s31, 0
    %p346 = por %p344, %p345
    %p347 = scmp.ne.s32.totalorder %s339, %s341
    %p348 = scmp.eq.s32.totalorder %s36, 1
    %p349 = por %p347, %p348
    %p350 = scmp.ne.s32.totalorder %s341, %s342
    %p351 = scmp.eq.s32.totalorder %s36, 0
    %p352 = por %p350, %p351
    %p353 = scmp.ne.s32.totalorder %s341, %s342
    %p354 = scmp.eq.s32.totalorder %s37, 1
    %p355 = por %p353, %p354
    %p357 = scmp.ne.s32.totalorder %s342, %s356
    %p358 = scmp.eq.s32.totalorder %s37, 0
    %p359 = por %p357, %p358
    %s361 = sadd.s32 %s360, 1
    %p364 = scmp.eq.s32.totalorder %s31, 1
    %p365 = scmp.ne.s32.totalorder %s360, %s362
    %p366 = scmp.eq.s32.totalorder %s31, 0
    %p367 = por %p365, %p366
    %p368 = scmp.ne.s32.totalorder %s360, %s362
    %p369 = scmp.eq.s32.totalorder %s36, 1
    %p370 = por %p368, %p369
    %p371 = scmp.ne.s32.totalorder %s362, %s363
    %p372 = scmp.eq.s32.totalorder %s36, 0
    %p373 = por %p371, %p372
    %p374 = scmp.ne.s32.totalorder %s362, %s363
    %p375 = scmp.eq.s32.totalorder %s37, 1
    %p376 = por %p374, %p375
    %p378 = scmp.ne.s32.totalorder %s363, %s377
    %p379 = scmp.eq.s32.totalorder %s37, 0
    %p380 = por %p378, %p379
    %s382 = sadd.s32 %s381, 1
    %p385 = scmp.eq.s32.totalorder %s31, 1
    %p386 = scmp.ne.s32.totalorder %s381, %s383
    %p387 = scmp.eq.s32.totalorder %s31, 0
    %p388 = por %p386, %p387
    %p389 = scmp.ne.s32.totalorder %s381, %s383
    %p390 = scmp.eq.s32.totalorder %s36, 1
    %p391 = por %p389, %p390
    %p392 = scmp.ne.s32.totalorder %s383, %s384
    %p393 = scmp.eq.s32.totalorder %s36, 0
    %p394 = por %p392, %p393
    %p395 = scmp.ne.s32.totalorder %s383, %s384
    %p396 = scmp.eq.s32.totalorder %s37, 1
    %p397 = por %p395, %p396
    %p399 = scmp.ne.s32.totalorder %s384, %s398
    %p400 = scmp.eq.s32.totalorder %s37, 0
    %p401 = por %p399, %p400
    %s403 = sadd.s32 %s402, 1
    %p406 = scmp.eq.s32.totalorder %s31, 1
    %p407 = scmp.ne.s32.totalorder %s402, %s404
    %p408 = scmp.eq.s32.totalorder %s31, 0
    %p409 = por %p407, %p408
    %p410 = scmp.ne.s32.totalorder %s402, %s404
    %p411 = scmp.eq.s32.totalorder %s36, 1
    %p412 = por %p410, %p411
    %p413 = scmp.ne.s32.totalorder %s404, %s405
    %p414 = scmp.eq.s32.totalorder %s36, 0
    %p415 = por %p413, %p414
    %p416 = scmp.ne.s32.totalorder %s404, %s405
    %p417 = scmp.eq.s32.totalorder %s37, 1
    %p418 = por %p416, %p417
    %p420 = scmp.ne.s32.totalorder %s405, %s419
    %p421 = scmp.eq.s32.totalorder %s37, 0
    %p422 = por %p420, %p421
    %s424 = sadd.s32 %s423, 1
    %p427 = scmp.eq.s32.totalorder %s31, 1
    %p428 = scmp.ne.s32.totalorder %s423, %s425
    %p429 = scmp.eq.s32.totalorder %s31, 0
    %p430 = por %p428, %p429
    %p431 = scmp.ne.s32.totalorder %s423, %s425
    %p432 = scmp.eq.s32.totalorder %s36, 1
    %p433 = por %p431, %p432
    %p434 = scmp.ne.s32.totalorder %s425, %s426
    %p435 = scmp.eq.s32.totalorder %s36, 0
    %p436 = por %p434, %p435
    %p437 = scmp.ne.s32.totalorder %s425, %s426
    %p438 = scmp.eq.s32.totalorder %s37, 1
    %p439 = por %p437, %p438
    %p441 = scmp.ne.s32.totalorder %s426, %s440
    %p442 = scmp.eq.s32.totalorder %s37, 0
    %p443 = por %p441, %p442
    %s445 = sadd.s32 %s444, 1
    %p448 = scmp.eq.s32.totalorder %s31, 1
    %p449 = scmp.ne.s32.totalorder %s444, %s446
    %p450 = scmp.eq.s32.totalorder %s31, 0
    %p451 = por %p449, %p450
    %p452 = scmp.ne.s32.totalorder %s444, %s446
    %p453 = scmp.eq.s32.totalorder %s36, 1
    %p454 = por %p452, %p453
    %p455 = scmp.ne.s32.totalorder %s446, %s447
    %p456 = scmp.eq.s32.totalorder %s36, 0
    %p457 = por %p455, %p456
    %p458 = scmp.ne.s32.totalorder %s446, %s447
    %p459 = scmp.eq.s32.totalorder %s37, 1
    %p460 = por %p458, %p459
    %p462 = scmp.ne.s32.totalorder %s447, %s461
    %p463 = scmp.eq.s32.totalorder %s37, 0
    %p464 = por %p462, %p463
    %s466 = sadd.s32 %s465, 1
    %p469 = scmp.eq.s32.totalorder %s31, 1
    %p470 = scmp.ne.s32.totalorder %s465, %s467
    %p471 = scmp.eq.s32.totalorder %s31, 0
    %p472 = por %p470, %p471
    %p473 = scmp.ne.s32.totalorder %s465, %s467
    %p474 = scmp.eq.s32.totalorder %s36, 1
    %p475 = por %p473, %p474
    %p476 = scmp.ne.s32.totalorder %s467, %s468
    %p477 = scmp.eq.s32.totalorder %s36, 0
    %p478 = por %p476, %p477
    %p479 = scmp.ne.s32.totalorder %s467, %s468
    %p480 = scmp.eq.s32.totalorder %s37, 1
    %p481 = por %p479, %p480
    %p483 = scmp.ne.s32.totalorder %s468, %s482
    %p484 = scmp.eq.s32.totalorder %s37, 0
    %p485 = por %p483, %p484
    %s487 = sadd.s32 %s486, 1
    %p490 = scmp.eq.s32.totalorder %s31, 1
    %p491 = scmp.ne.s32.totalorder %s486, %s488
    %p492 = scmp.eq.s32.totalorder %s31, 0
    %p493 = por %p491, %p492
    %p494 = scmp.ne.s32.totalorder %s486, %s488
    %p495 = scmp.eq.s32.totalorder %s36, 1
    %p496 = por %p494, %p495
    %p497 = scmp.ne.s32.totalorder %s488, %s489
    %p498 = scmp.eq.s32.totalorder %s36, 0
    %p499 = por %p497, %p498
    %p500 = scmp.ne.s32.totalorder %s488, %s489
    %p501 = scmp.eq.s32.totalorder %s37, 1
    %p502 = por %p500, %p501
    %p504 = scmp.ne.s32.totalorder %s489, %s503
    %p505 = scmp.eq.s32.totalorder %s37, 0
    %p506 = por %p504, %p505
    %s508 = sadd.s32 %s507, 1
    %p511 = scmp.eq.s32.totalorder %s31, 1
    %p512 = scmp.ne.s32.totalorder %s507, %s509
    %p513 = scmp.eq.s32.totalorder %s31, 0
    %p514 = por %p512, %p513
    %p515 = scmp.ne.s32.totalorder %s507, %s509
    %p516 = scmp.eq.s32.totalorder %s36, 1
    %p517 = por %p515, %p516
    %p518 = scmp.ne.s32.totalorder %s509, %s510
    %p519 = scmp.eq.s32.totalorder %s36, 0
    %p520 = por %p518, %p519
    %p521 = scmp.ne.s32.totalorder %s509, %s510
    %p522 = scmp.eq.s32.totalorder %s37, 1
    %p523 = por %p521, %p522
    %p525 = scmp.ne.s32.totalorder %s510, %s524
    %p526 = scmp.eq.s32.totalorder %s37, 0
    %p527 = por %p525, %p526
    %s529 = sadd.s32 %s528, 1
    %p532 = scmp.eq.s32.totalorder %s31, 1
    %p533 = scmp.ne.s32.totalorder %s528, %s530
    %p534 = scmp.eq.s32.totalorder %s31, 0
    %p535 = por %p533, %p534
    %p536 = scmp.ne.s32.totalorder %s528, %s530
    %p537 = scmp.eq.s32.totalorder %s36, 1
    %p538 = por %p536, %p537
    %p539 = scmp.ne.s32.totalorder %s530, %s531
    %p540 = scmp.eq.s32.totalorder %s36, 0
    %p541 = por %p539, %p540
    %p542 = scmp.ne.s32.totalorder %s530, %s531
    %p543 = scmp.eq.s32.totalorder %s37, 1
    %p544 = por %p542, %p543
    %p546 = scmp.ne.s32.totalorder %s531, %s545
    %p547 = scmp.eq.s32.totalorder %s37, 0
    %p548 = por %p546, %p547
    %s550 = sadd.s32 %s549, 1
    %p553 = scmp.eq.s32.totalorder %s31, 1
    %p554 = scmp.ne.s32.totalorder %s549, %s551
    %p555 = scmp.eq.s32.totalorder %s31, 0
    %p556 = por %p554, %p555
    %p557 = scmp.ne.s32.totalorder %s549, %s551
    %p558 = scmp.eq.s32.totalorder %s36, 1
    %p559 = por %p557, %p558
    %p560 = scmp.ne.s32.totalorder %s551, %s552
    %p561 = scmp.eq.s32.totalorder %s36, 0
    %p562 = por %p560, %p561
    %p563 = scmp.ne.s32.totalorder %s551, %s552
    %p564 = scmp.eq.s32.totalorder %s37, 1
    %p565 = por %p563, %p564
    %p567 = scmp.ne.s32.totalorder %s552, %s566
    %p568 = scmp.eq.s32.totalorder %s37, 0
    %p569 = por %p567, %p568
    %s571 = sadd.s32 %s570, 1
    %p574 = scmp.eq.s32.totalorder %s31, 1
    %p575 = scmp.ne.s32.totalorder %s570, %s572
    %p576 = scmp.eq.s32.totalorder %s31, 0
    %p577 = por %p575, %p576
    %p578 = scmp.ne.s32.totalorder %s570, %s572
    %p579 = scmp.eq.s32.totalorder %s36, 1
    %p580 = por %p578, %p579
    %p581 = scmp.ne.s32.totalorder %s572, %s573
    %p582 = scmp.eq.s32.totalorder %s36, 0
    %p583 = por %p581, %p582
    %p584 = scmp.ne.s32.totalorder %s572, %s573
    %p585 = scmp.eq.s32.totalorder %s37, 1
    %p586 = por %p584, %p585
    %p588 = scmp.ne.s32.totalorder %s573, %s587
    %p589 = scmp.eq.s32.totalorder %s37, 0
    %p590 = por %p588, %p589
    %s591 = ssub.s32 %s38, %s50
    %s592 = ssub.s32 %s39, %s46
    %s593 = sor.u32 %s591, %s592
    %p594 = scmp.eq.s32.totalorder %s593, 0
    %s596 = sadd.s32 %s595, 1
    %s597 = scalar_select %p594, %s595, %s596
    %p600 = pneg %p594
    %p601 = scmp.eq.s32.totalorder %s31, 1
    %p602 = por %p600, %p601
    %p603 = scmp.ne.s32.totalorder %s595, %s598
    %p604 = scmp.eq.s32.totalorder %s31, 0
    %p605 = por %p603, %p604
    %p606 = scmp.ne.s32.totalorder %s595, %s598
    %p607 = scmp.eq.s32.totalorder %s36, 1
    %p608 = por %p606, %p607
    %p609 = scmp.ne.s32.totalorder %s598, %s599
    %p610 = scmp.eq.s32.totalorder %s36, 0
    %p611 = por %p609, %p610
    %p612 = scmp.ne.s32.totalorder %s598, %s599
    %p613 = scmp.eq.s32.totalorder %s37, 1
    %p614 = por %p612, %p613
    %p616 = scmp.ne.s32.totalorder %s599, %s615
    %p617 = scmp.eq.s32.totalorder %s37, 0
    %p618 = por %p616, %p617
    %p619 = scmp.le.s32.totalorder 1, %s31
    %p620 = scmp.lt.s32.totalorder %s31, 3
    %p621 = pnand %p619, %p620
    %p622 = pneg %p621
    // Predicated region
    $region9: #{key_emotions_forward.5} parent=5 // pred_check
      _
    $region10: #{key_emotions_forward.5} parent=5 // pred_check_branch
      %624 = sbr.rel (%p621) target = $region12
    $region11: #{key_emotions_forward.5} parent=5 // pred_region
      %s625 = ssub.s32 %s31, 1
      // Predicated region
      $region13: #{key_emotions_forward.5} parent=11 // pred_check
        %p626 = pneg %p142
      $region14: #{key_emotions_forward.5} parent=11 // pred_check_branch
        %628 = sbr.rel (%p626) target = $region16
      $region15: #{key_emotions_forward.5} parent=11 // pred_region
        _
      $region16: #{key_emotions_forward.5} parent=11 // pred_fallthru
        _
      // Predicated region
      $region17: #{key_emotions_forward.5} parent=11 // pred_check
        %p629 = pneg %p163
      $region18: #{key_emotions_forward.5} parent=11 // pred_check_branch
        %631 = sbr.rel (%p629) target = $region20
      $region19: #{key_emotions_forward.5} parent=11 // pred_region
        _
      $region20: #{key_emotions_forward.5} parent=11 // pred_fallthru
        _
      // Predicated region
      $region21: #{key_emotions_forward.5} parent=11 // pred_check
        %p632 = pneg %p184
      $region22: #{key_emotions_forward.5} parent=11 // pred_check_branch
        %634 = sbr.rel (%p632) target = $region24
      $region23: #{key_emotions_forward.5} parent=11 // pred_region
        _
      $region24: #{key_emotions_forward.5} parent=11 // pred_fallthru
        _
      // Predicated region
      $region25: #{key_emotions_forward.5} parent=11 // pred_check
        %p635 = pneg %p205
      $region26: #{key_emotions_forward.5} parent=11 // pred_check_branch
        %637 = sbr.rel (%p635) target = $region28
      $region27: #{key_emotions_forward.5} parent=11 // pred_region
        _
      $region28: #{key_emotions_forward.5} parent=11 // pred_fallthru
        _
      // Predicated region
      $region29: #{key_emotions_forward.5} parent=11 // pred_check
        %p638 = pneg %p226
      $region30: #{key_emotions_forward.5} parent=11 // pred_check_branch
        %640 = sbr.rel (%p638) target = $region32
      $region31: #{key_emotions_forward.5} parent=11 // pred_region
        _
      $region32: #{key_emotions_forward.5} parent=11 // pred_fallthru
        _
      // Predicated region
      $region33: #{key_emotions_forward.5} parent=11 // pred_check
        %p641 = pneg %p247
      $region34: #{key_emotions_forward.5} parent=11 // pred_check_branch
        %643 = sbr.rel (%p641) target = $region36
      $region35: #{key_emotions_forward.5} parent=11 // pred_region
        _
      $region36: #{key_emotions_forward.5} parent=11 // pred_fallthru
        _
      // Predicated region
      $region37: #{key_emotions_forward.5} parent=11 // pred_check
        %p644 = pneg %p268
      $region38: #{key_emotions_forward.5} parent=11 // pred_check_branch
        %646 = sbr.rel (%p644) target = $region40
      $region39: #{key_emotions_forward.5} parent=11 // pred_region
        _
      $region40: #{key_emotions_forward.5} parent=11 // pred_fallthru
        _
      // Predicated region
      $region41: #{key_emotions_forward.5} parent=11 // pred_check
        %p647 = pneg %p289
      $region42: #{key_emotions_forward.5} parent=11 // pred_check_branch
        %649 = sbr.rel (%p647) target = $region44
      $region43: #{key_emotions_forward.5} parent=11 // pred_region
        _
      $region44: #{key_emotions_forward.5} parent=11 // pred_fallthru
        _
      // Predicated region
      $region45: #{key_emotions_forward.5} parent=11 // pred_check
        %p650 = pneg %p310
      $region46: #{key_emotions_forward.5} parent=11 // pred_check_branch
        %652 = sbr.rel (%p650) target = $region48
      $region47: #{key_emotions_forward.5} parent=11 // pred_region
        _
      $region48: #{key_emotions_forward.5} parent=11 // pred_fallthru
        _
      // Predicated region
      $region49: #{key_emotions_forward.5} parent=11 // pred_check
        %p653 = pneg %p331
      $region50: #{key_emotions_forward.5} parent=11 // pred_check_branch
        %655 = sbr.rel (%p653) target = $region52
      $region51: #{key_emotions_forward.5} parent=11 // pred_region
        _
      $region52: #{key_emotions_forward.5} parent=11 // pred_fallthru
        _
      // Predicated region
      $region53: #{key_emotions_forward.5} parent=11 // pred_check
        %p656 = pneg %p352
      $region54: #{key_emotions_forward.5} parent=11 // pred_check_branch
        %658 = sbr.rel (%p656) target = $region56
      $region55: #{key_emotions_forward.5} parent=11 // pred_region
        _
      $region56: #{key_emotions_forward.5} parent=11 // pred_fallthru
        _
      // Predicated region
      $region57: #{key_emotions_forward.5} parent=11 // pred_check
        %p659 = pneg %p373
      $region58: #{key_emotions_forward.5} parent=11 // pred_check_branch
        %661 = sbr.rel (%p659) target = $region60
      $region59: #{key_emotions_forward.5} parent=11 // pred_region
        _
      $region60: #{key_emotions_forward.5} parent=11 // pred_fallthru
        _
      // Predicated region
      $region61: #{key_emotions_forward.5} parent=11 // pred_check
        %p662 = pneg %p394
      $region62: #{key_emotions_forward.5} parent=11 // pred_check_branch
        %664 = sbr.rel (%p662) target = $region64
      $region63: #{key_emotions_forward.5} parent=11 // pred_region
        _
      $region64: #{key_emotions_forward.5} parent=11 // pred_fallthru
        _
      // Predicated region
      $region65: #{key_emotions_forward.5} parent=11 // pred_check
        %p665 = pneg %p415
      $region66: #{key_emotions_forward.5} parent=11 // pred_check_branch
        %667 = sbr.rel (%p665) target = $region68
      $region67: #{key_emotions_forward.5} parent=11 // pred_region
        _
      $region68: #{key_emotions_forward.5} parent=11 // pred_fallthru
        _
      // Predicated region
      $region69: #{key_emotions_forward.5} parent=11 // pred_check
        %p668 = pneg %p436
      $region70: #{key_emotions_forward.5} parent=11 // pred_check_branch
        %670 = sbr.rel (%p668) target = $region72
      $region71: #{key_emotions_forward.5} parent=11 // pred_region
        _
      $region72: #{key_emotions_forward.5} parent=11 // pred_fallthru
        _
      // Predicated region
      $region73: #{key_emotions_forward.5} parent=11 // pred_check
        %p671 = pneg %p457
      $region74: #{key_emotions_forward.5} parent=11 // pred_check_branch
        %673 = sbr.rel (%p671) target = $region76
      $region75: #{key_emotions_forward.5} parent=11 // pred_region
        _
      $region76: #{key_emotions_forward.5} parent=11 // pred_fallthru
        _
      // Predicated region
      $region77: #{key_emotions_forward.5} parent=11 // pred_check
        %p674 = pneg %p478
      $region78: #{key_emotions_forward.5} parent=11 // pred_check_branch
        %676 = sbr.rel (%p674) target = $region80
      $region79: #{key_emotions_forward.5} parent=11 // pred_region
        _
      $region80: #{key_emotions_forward.5} parent=11 // pred_fallthru
        _
      // Predicated region
      $region81: #{key_emotions_forward.5} parent=11 // pred_check
        %p677 = pneg %p499
      $region82: #{key_emotions_forward.5} parent=11 // pred_check_branch
        %679 = sbr.rel (%p677) target = $region84
      $region83: #{key_emotions_forward.5} parent=11 // pred_region
        _
      $region84: #{key_emotions_forward.5} parent=11 // pred_fallthru
        _
      // Predicated region
      $region85: #{key_emotions_forward.5} parent=11 // pred_check
        %p680 = pneg %p520
      $region86: #{key_emotions_forward.5} parent=11 // pred_check_branch
        %682 = sbr.rel (%p680) target = $region88
      $region87: #{key_emotions_forward.5} parent=11 // pred_region
        _
      $region88: #{key_emotions_forward.5} parent=11 // pred_fallthru
        _
      // Predicated region
      $region89: #{key_emotions_forward.5} parent=11 // pred_check
        %p683 = pneg %p541
      $region90: #{key_emotions_forward.5} parent=11 // pred_check_branch
        %685 = sbr.rel (%p683) target = $region92
      $region91: #{key_emotions_forward.5} parent=11 // pred_region
        _
      $region92: #{key_emotions_forward.5} parent=11 // pred_fallthru
        _
      // Predicated region
      $region93: #{key_emotions_forward.5} parent=11 // pred_check
        %p686 = pneg %p562
      $region94: #{key_emotions_forward.5} parent=11 // pred_check_branch
        %688 = sbr.rel (%p686) target = $region96
      $region95: #{key_emotions_forward.5} parent=11 // pred_region
        _
      $region96: #{key_emotions_forward.5} parent=11 // pred_fallthru
        _
      // Predicated region
      $region97: #{key_emotions_forward.5} parent=11 // pred_check
        %p689 = pneg %p583
      $region98: #{key_emotions_forward.5} parent=11 // pred_check_branch
        %691 = sbr.rel (%p689) target = $region100
      $region99: #{key_emotions_forward.5} parent=11 // pred_region
        _
      $region100: #{key_emotions_forward.5} parent=11 // pred_fallthru
        _
    $region12: #{key_emotions_forward.5} parent=5 // pred_fallthru
      _
    %p692 = scmp.lt.s32.totalorder %s31, 2
    // Predicated region
    $region101: #{key_emotions_forward.5} parent=5 // pred_check
      %p693 = pneg %p692
    $region102: #{key_emotions_forward.5} parent=5 // pred_check_branch
      %695 = sbr.rel (%p693) target = $region104
    $region103: #{key_emotions_forward.5} parent=5 // pred_region
      // Predicated region
      $region105: #{key_emotions_forward.5} parent=103 // pred_check
        %p696 = pneg %p63
      $region106: #{key_emotions_forward.5} parent=103 // pred_check_branch
        %698 = sbr.rel (%p696) target = $region108
      $region107: #{key_emotions_forward.5} parent=103 // pred_region
        %p699 = scmp.lt.s32.totalorder %s38, 1
        %s700 = scalar_select %p699, %s38, 1
        %s701 = smul.addr %s700, 8
        %s702 = scalar_lea.vmem %s0, %s701
      $region108: #{key_emotions_forward.5} parent=103 // pred_fallthru
        _
      // Predicated region
      $region109: #{key_emotions_forward.5} parent=103 // pred_check
        %p703 = pneg %p89
      $region110: #{key_emotions_forward.5} parent=103 // pred_check_branch
        %705 = sbr.rel (%p703) target = $region112
      $region111: #{key_emotions_forward.5} parent=103 // pred_region
        %p706 = scmp.lt.s32.totalorder %s38, 1
        %s707 = scalar_select %p706, %s38, 1
        %s708 = smul.addr %s707, 8
        %s709 = scalar_lea.vmem %s1, %s708
      $region112: #{key_emotions_forward.5} parent=103 // pred_fallthru
        _
      // Predicated region
      $region113: #{key_emotions_forward.5} parent=103 // pred_check
        %p710 = pneg %p115
      $region114: #{key_emotions_forward.5} parent=103 // pred_check_branch
        %712 = sbr.rel (%p710) target = $region116
      $region115: #{key_emotions_forward.5} parent=103 // pred_region
        %p713 = scmp.lt.s32.totalorder %s38, 1
        %s714 = scalar_select %p713, %s38, 1
        %s715 = scalar_lea.vmem %s2, %s714
      $region116: #{key_emotions_forward.5} parent=103 // pred_fallthru
        _
    $region104: #{key_emotions_forward.5} parent=5 // pred_fallthru
      _
    %p716 = scmp.le.s32.totalorder 1, %s31
    %p717 = scmp.lt.s32.totalorder %s31, 3
    %p718 = pnand %p716, %p717
    %p719 = pneg %p718
    // Predicated region
    $region117: #{key_emotions_forward.5} parent=5 // pred_check
      _
    $region118: #{key_emotions_forward.5} parent=5 // pred_check_branch
      %721 = sbr.rel (%p718) target = $region120
    $region119: #{key_emotions_forward.5} parent=5 // pred_region
      %s722 = ssub.s32 %s31, 1
      %p723 = scmp.lt.s32.totalorder %s40, 1
      %s724 = scalar_select %p723, %s40, 1
      %s725 = smul.addr %s724, 8
      %s726 = scalar_lea.vmem %s0, %s725
      %p727 = pneg %p69
      %p728 = pneg %p66
      %p729 = scmp.lt.s32.totalorder %s40, 1
      %s730 = scalar_select %p729, %s40, 1
      %s731 = smul.addr %s730, 8
      %s732 = scalar_lea.vmem %s1, %s731
      %p733 = pneg %p95
      %p734 = pneg %p92
      %p735 = scmp.lt.s32.totalorder %s40, 1
      %s736 = scalar_select %p735, %s40, 1
      %s737 = scalar_lea.vmem %s2, %s736
      %p738 = pneg %p121
      %p739 = pneg %p118
      %p740 = pneg %p142
      %p741 = pneg %p139
      %p742 = pneg %p163
      %p743 = pneg %p160
      %p744 = pneg %p184
      %p745 = pneg %p181
      %p746 = pneg %p205
      %p747 = pneg %p202
      %p748 = pneg %p226
      %p749 = pneg %p223
      %p750 = pneg %p247
      %p751 = pneg %p244
      %p752 = pneg %p268
      %p753 = pneg %p265
      %p754 = pneg %p289
      %p755 = pneg %p286
      %p756 = pneg %p310
      %p757 = pneg %p307
      %p758 = pneg %p331
      %p759 = pneg %p328
      %p760 = pneg %p352
      %p761 = pneg %p349
      %p762 = pneg %p373
      %p763 = pneg %p370
      %p764 = pneg %p394
      %p765 = pneg %p391
      %p766 = pneg %p415
      %p767 = pneg %p412
      %p768 = pneg %p436
      %p769 = pneg %p433
      %p770 = pneg %p457
      %p771 = pneg %p454
      %p772 = pneg %p478
      %p773 = pneg %p475
      %p774 = pneg %p499
      %p775 = pneg %p496
      %p776 = pneg %p520
      %p777 = pneg %p517
      %p778 = pneg %p541
      %p779 = pneg %p538
      %p780 = pneg %p562
      %p781 = pneg %p559
      %p782 = pneg %p583
      %p783 = pneg %p580
      %p784 = pneg %p611
      %p785 = pneg %p608
      %p786 = scmp.lt.s32.totalorder %s40, 1
      %s787 = scalar_select %p786, %s40, 1
      %p788 = scmp.lt.s32.totalorder %s41, 0
      %s789 = scalar_select %p788, %s41, 0
      %s790 = sadd.s32 %s789, %s787
      %s791 = smul.addr %s790, 8
      %s792 = scalar_lea.vmem %s25, %s791
      %p793 = scmp.lt.s32.totalorder %s40, 1
      %s794 = scalar_select %p793, %s40, 1
      %s795 = smul.addr %s794, 8
      %s796 = scalar_lea.vmem %s0, %s795
      %p797 = scmp.lt.s32.totalorder %s40, 1
      %s798 = scalar_select %p797, %s40, 1
      %s799 = smul.addr %s798, 8
      %s800 = scalar_lea.vmem %s1, %s799
      %p801 = scmp.lt.s32.totalorder %s40, 1
      %s802 = scalar_select %p801, %s40, 1
      %s803 = scalar_lea.vmem %s2, %s802
      %p804 = scmp.lt.s32.totalorder %s40, 1
      %s805 = scalar_select %p804, %s40, 1
      %p806 = scmp.lt.s32.totalorder %s41, 0
      %s807 = scalar_select %p806, %s41, 0
      %s808 = sadd.s32 %s807, %s805
      %s809 = smul.addr %s808, 8
      %s810 = scalar_lea.vmem %s25, %s809
      %p812 = scmp.eq.s32.totalorder %s41, 0
      // Predicated region
      $region121: #{key_emotions_forward.5} parent=119 // pred_check
        %p813 = pneg %p812
      $region122: #{key_emotions_forward.5} parent=119 // pred_check_branch
        %815 = sbr.rel (%p813) target = $region124
      $region123: #{key_emotions_forward.5} parent=119 // pred_region
        %v816 = vld [vmem:[%s796] sm:$0xff]
        %v817 = vld [vmem:[%s5] sm:$0xf]
        %v818 = vld [vmem:[%s5 + $0x4] sm:$0xf]
        %v819 = vld [vmem:[%s5 + $0x8] sm:$0xf]
        %v820 = vld [vmem:[%s5 + $0xc] sm:$0xf]
        %v821 = vpack.c.bf16 %v816, %v816
        %v822 = vld [vmem:[%s6] sm:$0x1]
        %v824 = vlaneseq
        %v825 = vshrl.u32 %v824, 7
        %v826 = vsub.s32 0, %v825
        %v827 = vrot.slane %v822, %v826
        %v833 = vunpack.c.l.b16 %v817
        %v834 = vunpack.c.l.b16 %v818
        %v835 = vunpack.c.l.b16 %v819
        %v836 = vunpack.c.l.b16 %v820
        %v837 = vpack.c.b16 %v834, %v833
        %v838 = vpack.c.b16 %v836, %v835
        %vm841 = vcmask 261120
        %v843 = vsel %vm841, %v821, 0
        %845 = vmatprep.subr.bf16.mxu0 0
        %846 = vmatpush1.bf16.msra.mxu0 %v837
        %847 = vmatprep.subr.bf16.mxu0 0
        %848 = vmatpush1.bf16.msra.mxu0 %v838
        %849 = vmatprep.subr.bf16.mxu0 0
        %850 = vmatpush1.bf16.msra.mxu0 0
        %851 = vmatprep.subr.bf16.mxu0 0
        %852 = vmatpush1.bf16.msra.mxu0 0
        %853 = vmatprep.subr.bf16.mxu0 0
        %854 = vmatpush1.bf16.msra.mxu0 0
        %855 = vmatprep.subr.bf16.mxu0 0
        %856 = vmatpush1.bf16.msra.mxu0 0
        %857 = vmatprep.subr.bf16.mxu0 0
        %858 = vmatpush1.bf16.msra.mxu0 0
        %859 = vmatprep.subr.bf16.mxu0 0
        %860 = vmatpush1.bf16.msra.mxu0 0
        %861 = vmatprep.subr.bf16.mxu0 0
        %862 = vmatpush1.bf16.msra.mxu0 0
        %863 = vmatprep.subr.bf16.mxu0 0
        %864 = vmatpush1.bf16.msra.mxu0 0
        %865 = vmatprep.subr.bf16.mxu0 0
        %866 = vmatpush1.bf16.msra.mxu0 0
        %867 = vmatprep.subr.bf16.mxu0 0
        %868 = vmatpush1.bf16.msra.mxu0 0
        %869 = vmatprep.subr.bf16.mxu0 0
        %870 = vmatpush1.bf16.msra.mxu0 0
        %871 = vmatprep.subr.bf16.mxu0 0
        %872 = vmatpush1.bf16.msra.mxu0 0
        %873 = vmatprep.subr.bf16.mxu0 0
        %874 = vmatpush1.bf16.msra.mxu0 0
        %875 = vmatprep.subr.bf16.mxu0 0
        %876 = vmatpush1.bf16.msra.mxu0 0
        %877 = vmatprep.mubr.bf16.mxu0 0
        %878 = vmatmul.mubr.bf16.gmra.mrb[0].mxu0 %v843
        %v879 = vpop.f32.mrb[0].mxu0
        %v880 = vadd.f32 %v827, %v879
        %v881 = vpop.f32.mrb[0].mxu0
        %v882 = vpop.f32.mrb[0].mxu0
        %v883 = vpop.f32.mrb[0].mxu0
        %884 = vdwg.mxu0
        %v885 = vpack.c.bf16 %v880, %v880
        %vm886 = vcmask 519168
        %887 = vst.msk [vmem:[#allocation2] sm:$0xf] %vm886, %v885
        %v888 = vld [vmem:[%s800] sm:$0xff]
        %v889 = vld [vmem:[%s13] sm:$0xf]
        %v890 = vld [vmem:[%s13 + $0x4] sm:$0xf]
        %v891 = vld [vmem:[%s13 + $0x8] sm:$0xf]
        %v892 = vld [vmem:[%s13 + $0xc] sm:$0xf]
        %v893 = vpack.c.bf16 %v888, %v888
        %v894 = vld [vmem:[%s14] sm:$0x1]
        %v896 = vlaneseq
        %v897 = vshrl.u32 %v896, 7
        %v898 = vsub.s32 0, %v897
        %v899 = vrot.slane %v894, %v898
        %v905 = vunpack.c.l.b16 %v889
        %v906 = vunpack.c.l.b16 %v890
        %v907 = vunpack.c.l.b16 %v891
        %v908 = vunpack.c.l.b16 %v892
        %v909 = vpack.c.b16 %v906, %v905
        %v910 = vpack.c.b16 %v908, %v907
        %v914 = vsel %vm841, %v893, 0
        %916 = vmatprep.subr.bf16.mxu0 0
        %917 = vmatpush1.bf16.msra.mxu0 %v909
        %918 = vmatprep.subr.bf16.mxu0 0
        %919 = vmatpush1.bf16.msra.mxu0 %v910
        %920 = vmatprep.subr.bf16.mxu0 0
        %921 = vmatpush1.bf16.msra.mxu0 0
        %922 = vmatprep.subr.bf16.mxu0 0
        %923 = vmatpush1.bf16.msra.mxu0 0
        %924 = vmatprep.subr.bf16.mxu0 0
        %925 = vmatpush1.bf16.msra.mxu0 0
        %926 = vmatprep.subr.bf16.mxu0 0
        %927 = vmatpush1.bf16.msra.mxu0 0
        %928 = vmatprep.subr.bf16.mxu0 0
        %929 = vmatpush1.bf16.msra.mxu0 0
        %930 = vmatprep.subr.bf16.mxu0 0
        %931 = vmatpush1.bf16.msra.mxu0 0
        %932 = vmatprep.subr.bf16.mxu0 0
        %933 = vmatpush1.bf16.msra.mxu0 0
        %934 = vmatprep.subr.bf16.mxu0 0
        %935 = vmatpush1.bf16.msra.mxu0 0
        %936 = vmatprep.subr.bf16.mxu0 0
        %937 = vmatpush1.bf16.msra.mxu0 0
        %938 = vmatprep.subr.bf16.mxu0 0
        %939 = vmatpush1.bf16.msra.mxu0 0
        %940 = vmatprep.subr.bf16.mxu0 0
        %941 = vmatpush1.bf16.msra.mxu0 0
        %942 = vmatprep.subr.bf16.mxu0 0
        %943 = vmatpush1.bf16.msra.mxu0 0
        %944 = vmatprep.subr.bf16.mxu0 0
        %945 = vmatpush1.bf16.msra.mxu0 0
        %946 = vmatprep.subr.bf16.mxu0 0
        %947 = vmatpush1.bf16.msra.mxu0 0
        %948 = vmatprep.mubr.bf16.mxu0 0
        %949 = vmatmul.mubr.bf16.gmra.mrb[0].mxu0 %v914
        %v950 = vpop.f32.mrb[0].mxu0
        %v951 = vadd.f32 %v899, %v950
        %v952 = vpop.f32.mrb[0].mxu0
        %v953 = vpop.f32.mrb[0].mxu0
        %v954 = vpop.f32.mrb[0].mxu0
        %955 = vdwg.mxu0
        %v956 = vpack.c.bf16 %v951, %v951
        %957 = vst.msk [vmem:[#allocation3] sm:$0xf] %vm886, %v956
      $region124: #{key_emotions_forward.5} parent=119 // pred_fallthru
        _
      %s958 = smul.u32 %s41, 8
      %s959 = scalar_lea.vmem %s796, %s958
      %v960 = vld [vmem:[%s959] sm:$0xff]
      %v961 = vlaneseq
      %v962 = vshrl.u32 %v961, 7
      %v963 = vstv %s958
      %v964 = vadd.s32 %v963, %v962
      %v965 = vlaneseq
      %v966 = vand.u32 %v965, 127
      %vm967 = vcmp.gt.s32.totalorder %v966, %v964
      %v968 = vsel %vm967, -1e+09, 0.0
      %v969 = vld [vmem:[%s803] sm:$0x1]
      %v971 = vlaneseq
      %v972 = vshrl.u32 %v971, 7
      %v973 = vsub.s32 0, %v972
      %v974 = vrot.slane %v969, %v973
      %v976 = vadd.f32 %v968, %v974
      %v977 = vld [vmem:[%s3] sm:$0xf]
      %v978 = vld [vmem:[%s3 + $0x4] sm:$0xf]
      %v979 = vld [vmem:[%s3 + $0x8] sm:$0xf]
      %v980 = vld [vmem:[%s3 + $0xc] sm:$0xf]
      %v981 = vpack.c.bf16 %v960, %v960
      %v982 = vld [vmem:[%s4] sm:$0x1]
      %v984 = vlaneseq
      %v985 = vshrl.u32 %v984, 7
      %v986 = vsub.s32 0, %v985
      %v987 = vrot.slane %v982, %v986
      %v993 = vunpack.c.l.b16 %v977
      %v994 = vunpack.c.l.b16 %v978
      %v995 = vunpack.c.l.b16 %v979
      %v996 = vunpack.c.l.b16 %v980
      %v997 = vpack.c.b16 %v994, %v993
      %v998 = vpack.c.b16 %v996, %v995
      %vm1001 = vcmask 261120
      %v1003 = vsel %vm1001, %v981, 0
      %1005 = vmatprep.subr.bf16.mxu0 0
      %1006 = vmatpush1.bf16.msra.mxu0 %v997
      %1007 = vmatprep.subr.bf16.mxu0 0
      %1008 = vmatpush1.bf16.msra.mxu0 %v998
      %1009 = vmatprep.subr.bf16.mxu0 0
      %1010 = vmatpush1.bf16.msra.mxu0 0
      %1011 = vmatprep.subr.bf16.mxu0 0
      %1012 = vmatpush1.bf16.msra.mxu0 0
      %1013 = vmatprep.subr.bf16.mxu0 0
      %1014 = vmatpush1.bf16.msra.mxu0 0
      %1015 = vmatprep.subr.bf16.mxu0 0
      %1016 = vmatpush1.bf16.msra.mxu0 0
      %1017 = vmatprep.subr.bf16.mxu0 0
      %1018 = vmatpush1.bf16.msra.mxu0 0
      %1019 = vmatprep.subr.bf16.mxu0 0
      %1020 = vmatpush1.bf16.msra.mxu0 0
      %1021 = vmatprep.subr.bf16.mxu0 0
      %1022 = vmatpush1.bf16.msra.mxu0 0
      %1023 = vmatprep.subr.bf16.mxu0 0
      %1024 = vmatpush1.bf16.msra.mxu0 0
      %1025 = vmatprep.subr.bf16.mxu0 0
      %1026 = vmatpush1.bf16.msra.mxu0 0
      %1027 = vmatprep.subr.bf16.mxu0 0
      %1028 = vmatpush1.bf16.msra.mxu0 0
      %1029 = vmatprep.subr.bf16.mxu0 0
      %1030 = vmatpush1.bf16.msra.mxu0 0
      %1031 = vmatprep.subr.bf16.mxu0 0
      %1032 = vmatpush1.bf16.msra.mxu0 0
      %1033 = vmatprep.subr.bf16.mxu0 0
      %1034 = vmatpush1.bf16.msra.mxu0 0
      %1035 = vmatprep.subr.bf16.mxu0 0
      %1036 = vmatpush1.bf16.msra.mxu0 0
      %1037 = vmatprep.mubr.bf16.mxu0 0
      %1038 = vmatmul.mubr.bf16.gmra.mrb[0].mxu0 %v1003
      %v1039 = vpop.f32.mrb[0].mxu0
      %v1040 = vadd.f32 %v987, %v1039
      %v1041 = vpop.f32.mrb[0].mxu0
      %v1042 = vpop.f32.mrb[0].mxu0
      %v1043 = vpop.f32.mrb[0].mxu0
      %1044 = vdwg.mxu0
      %v1045 = vld [vmem:[#allocation2] sm:$0xf]
      %v1046 = vpack.c.bf16 %v1040, %v1040
      %vm1047 = vcmask 130048
      %v1049 = vsel %vm1047, %v1046, 0
      %v1052 = vsel %vm1047, %v1045, 0
      %1054 = vmatprep.subr.bf16.mxu0 0
      %1055 = vmatpush1.bf16.xpose.msra.mxu0 %v1052
      %1056 = vmatprep.subr.bf16.mxu0 0
      %1057 = vmatpush1.bf16.xpose.msra.mxu0 0
      %1058 = vmatprep.subr.bf16.mxu0 0
      %1059 = vmatpush1.bf16.xpose.msra.mxu0 0
      %1060 = vmatprep.subr.bf16.mxu0 0
      %1061 = vmatpush1.bf16.xpose.msra.mxu0 0
      %1062 = vmatprep.subr.bf16.mxu0 0
      %1063 = vmatpush1.bf16.xpose.msra.mxu0 0
      %1064 = vmatprep.subr.bf16.mxu0 0
      %1065 = vmatpush1.bf16.xpose.msra.mxu0 0
      %1066 = vmatprep.subr.bf16.mxu0 0
      %1067 = vmatpush1.bf16.xpose.msra.mxu0 0
      %1068 = vmatprep.subr.bf16.mxu0 0
      %1069 = vmatpush1.bf16.xpose.msra.mxu0 0
      %1070 = vmatprep.subr.bf16.mxu0 0
      %1071 = vmatpush1.bf16.xpose.msra.mxu0 0
      %1072 = vmatprep.subr.bf16.mxu0 0
      %1073 = vmatpush1.bf16.xpose.msra.mxu0 0
      %1074 = vmatprep.subr.bf16.mxu0 0
      %1075 = vmatpush1.bf16.xpose.msra.mxu0 0
      %1076 = vmatprep.subr.bf16.mxu0 0
      %1077 = vmatpush1.bf16.xpose.msra.mxu0 0
      %1078 = vmatprep.subr.bf16.mxu0 0
      %1079 = vmatpush1.bf16.xpose.msra.mxu0 0
      %1080 = vmatprep.subr.bf16.mxu0 0
      %1081 = vmatpush1.bf16.xpose.msra.mxu0 0
      %1082 = vmatprep.subr.bf16.mxu0 0
      %1083 = vmatpush1.bf16.xpose.msra.mxu0 0
      %1084 = vmatprep.subr.bf16.mxu0 0
      %1085 = vmatpush1.bf16.xpose.msra.mxu0 0
      %1086 = vmatprep.mubr.bf16.mxu0 0
      %1087 = vmatmul.mubr.bf16.gmra.mrb[0].mxu0 %v1049
      %v1088 = vpop.f32.mrb[0].mxu0
      %v1089 = vadd.f32 0.0, %v1088
      %v1090 = vpop.f32.mrb[0].mxu0
      %v1091 = vpop.f32.mrb[0].mxu0
      %v1092 = vpop.f32.mrb[0].mxu0
      %1093 = vdwg.mxu0
      %v1094 = vmul.f32 %v1089, 0.25
      %v1095 = vadd.f32 %v1094, %v976
      %vm1096 = vcmask 64512
      %v1097 = vsel %vm1096, %v1095, -inf
      %1098 = vmax.xlane.f32.xlu0 %v1097
      %v1099 = vpop.xlane.xlu0 %1098
      %v1100 = vsub.f32 %v1095, %v1099
      %v1101 = vmul.f32 %v1100, 1.442695
      %v1102 = vpow.pop %v1101
      %v1103 = vsel %vm1096, %v1102, 0.0
      %1104 = vadd.xlane.f32.xlu0 %v1103
      %v1105 = vpop.xlane.xlu0 %1104
      %v1106 = vrcp.pop %v1105
      %v1107 = vmul.f32 %v1102, %v1106
      %v1108 = vpack.c.bf16 %v1107, %v1107
      %v1110 = vunpack.c.l.b16 %v1045
      %v1111 = vpack.c.b16 %v1110, %v1110
      %1112 = vrot.lane.b32.xlu0 %v1111, 96
      %v1113 = vpop.permute.xlu0 %1112
      %v1115 = vsel %vm1096, %v1108, 0
      %vm1117 = vcmask 1043456
      %v1119 = vsel %vm1117, %v1113, 0
      %1121 = vmatprep.subr.bf16.mxu0 0
      %1122 = vmatpush1.bf16.msra.mxu0 %v1119
      %1123 = vmatprep.subr.bf16.mxu0 0
      %1124 = vmatpush1.bf16.msra.mxu0 0
      %1125 = vmatprep.subr.bf16.mxu0 0
      %1126 = vmatpush1.bf16.msra.mxu0 0
      %1127 = vmatprep.subr.bf16.mxu0 0
      %1128 = vmatpush1.bf16.msra.mxu0 0
      %1129 = vmatprep.subr.bf16.mxu0 0
      %1130 = vmatpush1.bf16.msra.mxu0 0
      %1131 = vmatprep.subr.bf16.mxu0 0
      %1132 = vmatpush1.bf16.msra.mxu0 0
      %1133 = vmatprep.subr.bf16.mxu0 0
      %1134 = vmatpush1.bf16.msra.mxu0 0
      %1135 = vmatprep.subr.bf16.mxu0 0
      %1136 = vmatpush1.bf16.msra.mxu0 0
      %1137 = vmatprep.subr.bf16.mxu0 0
      %1138 = vmatpush1.bf16.msra.mxu0 0
      %1139 = vmatprep.subr.bf16.mxu0 0
      %1140 = vmatpush1.bf16.msra.mxu0 0
      %1141 = vmatprep.subr.bf16.mxu0 0
      %1142 = vmatpush1.bf16.msra.mxu0 0
      %1143 = vmatprep.subr.bf16.mxu0 0
      %1144 = vmatpush1.bf16.msra.mxu0 0
      %1145 = vmatprep.subr.bf16.mxu0 0
      %1146 = vmatpush1.bf16.msra.mxu0 0
      %1147 = vmatprep.subr.bf16.mxu0 0
      %1148 = vmatpush1.bf16.msra.mxu0 0
      %1149 = vmatprep.subr.bf16.mxu0 0
      %1150 = vmatpush1.bf16.msra.mxu0 0
      %1151 = vmatprep.subr.bf16.mxu0 0
      %1152 = vmatpush1.bf16.msra.mxu0 0
      %1153 = vmatprep.mubr.bf16.mxu0 0
      %1154 = vmatmul.mubr.bf16.gmra.mrb[0].mxu0 %v1115
      %v1155 = vpop.f32.mrb[0].mxu0
      %v1156 = vadd.f32 0.0, %v1155
      %v1157 = vpop.f32.mrb[0].mxu0
      %v1158 = vpop.f32.mrb[0].mxu0
      %v1159 = vpop.f32.mrb[0].mxu0
      %1160 = vdwg.mxu0
      %1161 = vst.msk [vmem:[#allocation4] sm:$0xff] %vm1047, %v1156
      %v1162 = vld [vmem:[#allocation2] sm:$0xf]
      %1164 = vrot.lane.b32.xlu0 %v1046, 112
      %v1165 = vpop.permute.xlu0 %1164
      %v1167 = vunpack.c.l.b16 %v1162
      %v1168 = vpack.c.b16 %v1167, %v1167
      %1169 = vrot.lane.b32.xlu0 %v1168, 112
      %v1170 = vpop.permute.xlu0 %1169
      %v1172 = vsel %vm1047, %v1165, 0
      %v1175 = vsel %vm1047, %v1170, 0
      %1177 = vmatprep.subr.bf16.mxu0 0
      %1178 = vmatpush1.bf16.xpose.msra.mxu0 %v1175
      %1179 = vmatprep.subr.bf16.mxu0 0
      %1180 = vmatpush1.bf16.xpose.msra.mxu0 0
      %1181 = vmatprep.subr.bf16.mxu0 0
      %1182 = vmatpush1.bf16.xpose.msra.mxu0 0
      %1183 = vmatprep.subr.bf16.mxu0 0
      %1184 = vmatpush1.bf16.xpose.msra.mxu0 0
      %1185 = vmatprep.subr.bf16.mxu0 0
      %1186 = vmatpush1.bf16.xpose.msra.mxu0 0
      %1187 = vmatprep.subr.bf16.mxu0 0
      %1188 = vmatpush1.bf16.xpose.msra.mxu0 0
      %1189 = vmatprep.subr.bf16.mxu0 0
      %1190 = vmatpush1.bf16.xpose.msra.mxu0 0
      %1191 = vmatprep.subr.bf16.mxu0 0
      %1192 = vmatpush1.bf16.xpose.msra.mxu0 0
      %1193 = vmatprep.subr.bf16.mxu0 0
      %1194 = vmatpush1.bf16.xpose.msra.mxu0 0
      %1195 = vmatprep.subr.bf16.mxu0 0
      %1196 = vmatpush1.bf16.xpose.msra.mxu0 0
      %1197 = vmatprep.subr.bf16.mxu0 0
      %1198 = vmatpush1.bf16.xpose.msra.mxu0 0
      %1199 = vmatprep.subr.bf16.mxu0 0
      %1200 = vmatpush1.bf16.xpose.msra.mxu0 0
      %1201 = vmatprep.subr.bf16.mxu0 0
      %1202 = vmatpush1.bf16.xpose.msra.mxu0 0
      %1203 = vmatprep.subr.bf16.mxu0 0
      %1204 = vmatpush1.bf16.xpose.msra.mxu0 0
      %1205 = vmatprep.subr.bf16.mxu0 0
      %1206 = vmatpush1.bf16.xpose.msra.mxu0 0
      %1207 = vmatprep.subr.bf16.mxu0 0
      %1208 = vmatpush1.bf16.xpose.msra.mxu0 0
      %1209 = vmatprep.mubr.bf16.mxu0 0
      %1210 = vmatmul.mubr.bf16.gmra.mrb[0].mxu0 %v1172
      %v1211 = vpop.f32.mrb[0].mxu0
      %v1212 = vadd.f32 0.0, %v1211
      %v1213 = vpop.f32.mrb[0].mxu0
      %v1214 = vpop.f32.mrb[0].mxu0
      %v1215 = vpop.f32.mrb[0].mxu0
      %1216 = vdwg.mxu0
      %v1217 = vmul.f32 %v1212, 0.25
      %v1218 = vadd.f32 %v1217, %v976
      %v1219 = vsel %vm1096, %v1218, -inf
      %1220 = vmax.xlane.f32.xlu0 %v1219
      %v1221 = vpop.xlane.xlu0 %1220
      %v1222 = vsub.f32 %v1218, %v1221
      %v1223 = vmul.f32 %v1222, 1.442695
      %v1224 = vpow.pop %v1223
      %v1225 = vsel %vm1096, %v1224, 0.0
      %1226 = vadd.xlane.f32.xlu0 %v1225
      %v1227 = vpop.xlane.xlu0 %1226
      %v1228 = vrcp.pop %v1227
      %v1229 = vmul.f32 %v1224, %v1228
      %v1230 = vpack.c.bf16 %v1229, %v1229
      %1231 = vrot.lane.b32.xlu0 %v1168, 80
      %v1232 = vpop.permute.xlu0 %1231
      %v1234 = vsel %vm1096, %v1230, 0
      %v1237 = vsel %vm1117, %v1232, 0
      %1239 = vmatprep.subr.bf16.mxu0 0
      %1240 = vmatpush1.bf16.msra.mxu0 %v1237
      %1241 = vmatprep.subr.bf16.mxu0 0
      %1242 = vmatpush1.bf16.msra.mxu0 0
      %1243 = vmatprep.subr.bf16.mxu0 0
      %1244 = vmatpush1.bf16.msra.mxu0 0
      %1245 = vmatprep.subr.bf16.mxu0 0
      %1246 = vmatpush1.bf16.msra.mxu0 0
      %1247 = vmatprep.subr.bf16.mxu0 0
      %1248 = vmatpush1.bf16.msra.mxu0 0
      %1249 = vmatprep.subr.bf16.mxu0 0
      %1250 = vmatpush1.bf16.msra.mxu0 0
      %1251 = vmatprep.subr.bf16.mxu0 0
      %1252 = vmatpush1.bf16.msra.mxu0 0
      %1253 = vmatprep.subr.bf16.mxu0 0
      %1254 = vmatpush1.bf16.msra.mxu0 0
      %1255 = vmatprep.subr.bf16.mxu0 0
      %1256 = vmatpush1.bf16.msra.mxu0 0
      %1257 = vmatprep.subr.bf16.mxu0 0
      %1258 = vmatpush1.bf16.msra.mxu0 0
      %1259 = vmatprep.subr.bf16.mxu0 0
      %1260 = vmatpush1.bf16.msra.mxu0 0
      %1261 = vmatprep.subr.bf16.mxu0 0
      %1262 = vmatpush1.bf16.msra.mxu0 0
      %1263 = vmatprep.subr.bf16.mxu0 0
      %1264 = vmatpush1.bf16.msra.mxu0 0
      %1265 = vmatprep.subr.bf16.mxu0 0
      %1266 = vmatpush1.bf16.msra.mxu0 0
      %1267 = vmatprep.subr.bf16.mxu0 0
      %1268 = vmatpush1.bf16.msra.mxu0 0
      %1269 = vmatprep.subr.bf16.mxu0 0
      %1270 = vmatpush1.bf16.msra.mxu0 0
      %1271 = vmatprep.mubr.bf16.mxu0 0
      %1272 = vmatmul.mubr.bf16.gmra.mrb[0].mxu0 %v1234
      %v1273 = vpop.f32.mrb[0].mxu0
      %v1274 = vadd.f32 0.0, %v1273
      %v1275 = vpop.f32.mrb[0].mxu0
      %v1276 = vpop.f32.mrb[0].mxu0
      %v1277 = vpop.f32.mrb[0].mxu0
      %1278 = vdwg.mxu0
      %1280 = vrot.lane.b32.xlu0 %v1274, 16
      %v1281 = vpop.permute.xlu0 %1280
      %vm1283 = vcmask 261248
      %1284 = vst.msk [vmem:[#allocation4] sm:$0xff] %vm1283, %v1281
      %v1285 = vld [vmem:[#allocation4] sm:$0xff]
      %v1286 = vld [vmem:[%s7] sm:$0xf]
      %v1287 = vld [vmem:[%s7 + $0x4] sm:$0xf]
      %v1288 = vld [vmem:[%s7 + $0x8] sm:$0xf]
      %v1289 = vld [vmem:[%s7 + $0xc] sm:$0xf]
      %v1290 = vpack.c.bf16 %v1285, %v1285
      %v1295 = vunpack.c.l.b16 %v1286
      %v1296 = vunpack.c.l.b16 %v1287
      %v1297 = vunpack.c.l.b16 %v1288
      %v1298 = vunpack.c.l.b16 %v1289
      %v1299 = vpack.c.b16 %v1296, %v1295
      %v1300 = vpack.c.b16 %v1298, %v1297
      %v1304 = vsel %vm1001, %v1290, 0
      %1306 = vmatprep.subr.bf16.mxu0 0
      %1307 = vmatpush1.bf16.msra.mxu0 %v1299
      %1308 = vmatprep.subr.bf16.mxu0 0
      %1309 = vmatpush1.bf16.msra.mxu0 %v1300
      %1310 = vmatprep.subr.bf16.mxu0 0
      %1311 = vmatpush1.bf16.msra.mxu0 0
      %1312 = vmatprep.subr.bf16.mxu0 0
      %1313 = vmatpush1.bf16.msra.mxu0 0
      %1314 = vmatprep.subr.bf16.mxu0 0
      %1315 = vmatpush1.bf16.msra.mxu0 0
      %1316 = vmatprep.subr.bf16.mxu0 0
      %1317 = vmatpush1.bf16.msra.mxu0 0
      %1318 = vmatprep.subr.bf16.mxu0 0
      %1319 = vmatpush1.bf16.msra.mxu0 0
      %1320 = vmatprep.subr.bf16.mxu0 0
      %1321 = vmatpush1.bf16.msra.mxu0 0
      %1322 = vmatprep.subr.bf16.mxu0 0
      %1323 = vmatpush1.bf16.msra.mxu0 0
      %1324 = vmatprep.subr.bf16.mxu0 0
      %1325 = vmatpush1.bf16.msra.mxu0 0
      %1326 = vmatprep.subr.bf16.mxu0 0
      %1327 = vmatpush1.bf16.msra.mxu0 0
      %1328 = vmatprep.subr.bf16.mxu0 0
      %1329 = vmatpush1.bf16.msra.mxu0 0
      %1330 = vmatprep.subr.bf16.mxu0 0
      %1331 = vmatpush1.bf16.msra.mxu0 0
      %1332 = vmatprep.subr.bf16.mxu0 0
      %1333 = vmatpush1.bf16.msra.mxu0 0
      %1334 = vmatprep.subr.bf16.mxu0 0
      %1335 = vmatpush1.bf16.msra.mxu0 0
      %1336 = vmatprep.subr.bf16.mxu0 0
      %1337 = vmatpush1.bf16.msra.mxu0 0
      %1338 = vmatprep.mubr.bf16.mxu0 0
      %1339 = vmatmul.mubr.bf16.gmra.mrb[0].mxu0 %v1304
      %v1340 = vpop.f32.mrb[0].mxu0
      %v1341 = vadd.f32 0.0, %v1340
      %v1342 = vpop.f32.mrb[0].mxu0
      %v1343 = vpop.f32.mrb[0].mxu0
      %v1344 = vpop.f32.mrb[0].mxu0
      %1345 = vdwg.mxu0
      %v1346 = vadd.f32 %v960, %v1341
      %v1347 = vld [vmem:[%s8] sm:$0x1]
      %v1349 = vlaneseq
      %v1350 = vshrl.u32 %v1349, 7
      %v1351 = vsub.s32 0, %v1350
      %v1352 = vrot.slane %v1347, %v1351
      %v1354 = vadd.f32 %v1346, %v1352
      %v1355 = vld [vmem:[%s9] sm:$0x1]
      %v1356 = vld [vmem:[%s10] sm:$0x1]
      %v1357 = vsel %vm1001, %v1354, 0.0
      %1358 = vadd.xlane.f32.xlu0 %v1357
      %v1359 = vpop.xlane.xlu0 %1358
      %v1360 = vrcp.pop 32.0
      %v1361 = vmul.f32 %v1359, %v1360
      %v1362 = vsub.f32 %v1354, %v1361
      %v1363 = vmul.f32 %v1362, %v1362
      %v1364 = vsel %vm1001, %v1363, 0.0
      %1365 = vadd.xlane.f32.xlu0 %v1364
      %v1366 = vpop.xlane.xlu0 %1365
      %v1367 = vmul.f32 %v1366, %v1360
      %v1368 = vadd.f32 %v1367, 1e-05
      %v1369 = vrsqrt.pop %v1368
      %v1370 = vmul.f32 %v1362, %v1369
      %v1372 = vlaneseq
      %v1373 = vshrl.u32 %v1372, 7
      %v1374 = vsub.s32 0, %v1373
      %v1375 = vrot.slane %v1355, %v1374
      %v1377 = vmul.f32 %v1370, %v1375
      %v1379 = vlaneseq
      %v1380 = vshrl.u32 %v1379, 7
      %v1381 = vsub.s32 0, %v1380
      %v1382 = vrot.slane %v1356, %v1381
      %v1384 = vadd.f32 %v1377, %v1382
      %v1385 = vld [vmem:[%s11] sm:$0xf]
      %v1386 = vld [vmem:[%s11 + $0x4] sm:$0xf]
      %v1387 = vld [vmem:[%s11 + $0x8] sm:$0xf]
      %v1388 = vld [vmem:[%s11 + $0xc] sm:$0xf]
      %v1389 = vpack.c.bf16 %v1384, %v1384
      %v1390 = vld [vmem:[%s12] sm:$0x1]
      %v1392 = vlaneseq
      %v1393 = vshrl.u32 %v1392, 7
      %v1394 = vsub.s32 0, %v1393
      %v1395 = vrot.slane %v1390, %v1394
      %v1401 = vunpack.c.l.b16 %v1385
      %v1402 = vunpack.c.l.b16 %v1386
      %v1403 = vunpack.c.l.b16 %v1387
      %v1404 = vunpack.c.l.b16 %v1388
      %v1405 = vpack.c.b16 %v1402, %v1401
      %v1406 = vpack.c.b16 %v1404, %v1403
      %v1410 = vsel %vm1001, %v1389, 0
      %1412 = vmatprep.subr.bf16.mxu0 0
      %1413 = vmatpush1.bf16.msra.mxu0 %v1405
      %1414 = vmatprep.subr.bf16.mxu0 0
      %1415 = vmatpush1.bf16.msra.mxu0 %v1406
      %1416 = vmatprep.subr.bf16.mxu0 0
      %1417 = vmatpush1.bf16.msra.mxu0 0
      %1418 = vmatprep.subr.bf16.mxu0 0
      %1419 = vmatpush1.bf16.msra.mxu0 0
      %1420 = vmatprep.subr.bf16.mxu0 0
      %1421 = vmatpush1.bf16.msra.mxu0 0
      %1422 = vmatprep.subr.bf16.mxu0 0
      %1423 = vmatpush1.bf16.msra.mxu0 0
      %1424 = vmatprep.subr.bf16.mxu0 0
      %1425 = vmatpush1.bf16.msra.mxu0 0
      %1426 = vmatprep.subr.bf16.mxu0 0
      %1427 = vmatpush1.bf16.msra.mxu0 0
      %1428 = vmatprep.subr.bf16.mxu0 0
      %1429 = vmatpush1.bf16.msra.mxu0 0
      %1430 = vmatprep.subr.bf16.mxu0 0
      %1431 = vmatpush1.bf16.msra.mxu0 0
      %1432 = vmatprep.subr.bf16.mxu0 0
      %1433 = vmatpush1.bf16.msra.mxu0 0
      %1434 = vmatprep.subr.bf16.mxu0 0
      %1435 = vmatpush1.bf16.msra.mxu0 0
      %1436 = vmatprep.subr.bf16.mxu0 0
      %1437 = vmatpush1.bf16.msra.mxu0 0
      %1438 = vmatprep.subr.bf16.mxu0 0
      %1439 = vmatpush1.bf16.msra.mxu0 0
      %1440 = vmatprep.subr.bf16.mxu0 0
      %1441 = vmatpush1.bf16.msra.mxu0 0
      %1442 = vmatprep.subr.bf16.mxu0 0
      %1443 = vmatpush1.bf16.msra.mxu0 0
      %1444 = vmatprep.mubr.bf16.mxu0 0
      %1445 = vmatmul.mubr.bf16.gmra.mrb[0].mxu0 %v1410
      %v1446 = vpop.f32.mrb[0].mxu0
      %v1447 = vadd.f32 %v1395, %v1446
      %v1448 = vpop.f32.mrb[0].mxu0
      %v1449 = vpop.f32.mrb[0].mxu0
      %v1450 = vpop.f32.mrb[0].mxu0
      %1451 = vdwg.mxu0
      %v1452 = vld [vmem:[#allocation3] sm:$0xf]
      %v1453 = vpack.c.bf16 %v1447, %v1447
      %v1455 = vsel %vm1047, %v1453, 0
      %v1458 = vsel %vm1047, %v1452, 0
      %1460 = vmatprep.subr.bf16.mxu0 0
      %1461 = vmatpush1.bf16.xpose.msra.mxu0 %v1458
      %1462 = vmatprep.subr.bf16.mxu0 0
      %1463 = vmatpush1.bf16.xpose.msra.mxu0 0
      %1464 = vmatprep.subr.bf16.mxu0 0
      %1465 = vmatpush1.bf16.xpose.msra.mxu0 0
      %1466 = vmatprep.subr.bf16.mxu0 0
      %1467 = vmatpush1.bf16.xpose.msra.mxu0 0
      %1468 = vmatprep.subr.bf16.mxu0 0
      %1469 = vmatpush1.bf16.xpose.msra.mxu0 0
      %1470 = vmatprep.subr.bf16.mxu0 0
      %1471 = vmatpush1.bf16.xpose.msra.mxu0 0
      %1472 = vmatprep.subr.bf16.mxu0 0
      %1473 = vmatpush1.bf16.xpose.msra.mxu0 0
      %1474 = vmatprep.subr.bf16.mxu0 0
      %1475 = vmatpush1.bf16.xpose.msra.mxu0 0
      %1476 = vmatprep.subr.bf16.mxu0 0
      %1477 = vmatpush1.bf16.xpose.msra.mxu0 0
      %1478 = vmatprep.subr.bf16.mxu0 0
      %1479 = vmatpush1.bf16.xpose.msra.mxu0 0
      %1480 = vmatprep.subr.bf16.mxu0 0
      %1481 = vmatpush1.bf16.xpose.msra.mxu0 0
      %1482 = vmatprep.subr.bf16.mxu0 0
      %1483 = vmatpush1.bf16.xpose.msra.mxu0 0
      %1484 = vmatprep.subr.bf16.mxu0 0
      %1485 = vmatpush1.bf16.xpose.msra.mxu0 0
      %1486 = vmatprep.subr.bf16.mxu0 0
      %1487 = vmatpush1.bf16.xpose.msra.mxu0 0
      %1488 = vmatprep.subr.bf16.mxu0 0
      %1489 = vmatpush1.bf16.xpose.msra.mxu0 0
      %1490 = vmatprep.subr.bf16.mxu0 0
      %1491 = vmatpush1.bf16.xpose.msra.mxu0 0
      %1492 = vmatprep.mubr.bf16.mxu0 0
      %1493 = vmatmul.mubr.bf16.gmra.mrb[0].mxu0 %v1455
      %v1494 = vpop.f32.mrb[0].mxu0
      %v1495 = vadd.f32 0.0, %v1494
      %v1496 = vpop.f32.mrb[0].mxu0
      %v1497 = vpop.f32.mrb[0].mxu0
      %v1498 = vpop.f32.mrb[0].mxu0
      %1499 = vdwg.mxu0
      %v1500 = vmul.f32 %v1495, 0.25
      %v1501 = vsel %vm1096, %v1500, -inf
      %1502 = vmax.xlane.f32.xlu0 %v1501
      %v1503 = vpop.xlane.xlu0 %1502
      %v1504 = vsub.f32 %v1500, %v1503
      %v1505 = vmul.f32 %v1504, 1.442695
      %v1506 = vpow.pop %v1505
      %v1507 = vsel %vm1096, %v1506, 0.0
      %1508 = vadd.xlane.f32.xlu0 %v1507
      %v1509 = vpop.xlane.xlu0 %1508
      %v1510 = vrcp.pop %v1509
      %v1511 = vmul.f32 %v1506, %v1510
      %v1512 = vpack.c.bf16 %v1511, %v1511
      %v1514 = vunpack.c.l.b16 %v1452
      %v1515 = vpack.c.b16 %v1514, %v1514
      %1516 = vrot.lane.b32.xlu0 %v1515, 96
      %v1517 = vpop.permute.xlu0 %1516
      %v1519 = vsel %vm1096, %v1512, 0
      %v1522 = vsel %vm1117, %v1517, 0
      %1524 = vmatprep.subr.bf16.mxu0 0
      %1525 = vmatpush1.bf16.msra.mxu0 %v1522
      %1526 = vmatprep.subr.bf16.mxu0 0
      %1527 = vmatpush1.bf16.msra.mxu0 0
      %1528 = vmatprep.subr.bf16.mxu0 0
      %1529 = vmatpush1.bf16.msra.mxu0 0
      %1530 = vmatprep.subr.bf16.mxu0 0
      %1531 = vmatpush1.bf16.msra.mxu0 0
      %1532 = vmatprep.subr.bf16.mxu0 0
      %1533 = vmatpush1.bf16.msra.mxu0 0
      %1534 = vmatprep.subr.bf16.mxu0 0
      %1535 = vmatpush1.bf16.msra.mxu0 0
      %1536 = vmatprep.subr.bf16.mxu0 0
      %1537 = vmatpush1.bf16.msra.mxu0 0
      %1538 = vmatprep.subr.bf16.mxu0 0
      %1539 = vmatpush1.bf16.msra.mxu0 0
      %1540 = vmatprep.subr.bf16.mxu0 0
      %1541 = vmatpush1.bf16.msra.mxu0 0
      %1542 = vmatprep.subr.bf16.mxu0 0
      %1543 = vmatpush1.bf16.msra.mxu0 0
      %1544 = vmatprep.subr.bf16.mxu0 0
      %1545 = vmatpush1.bf16.msra.mxu0 0
      %1546 = vmatprep.subr.bf16.mxu0 0
      %1547 = vmatpush1.bf16.msra.mxu0 0
      %1548 = vmatprep.subr.bf16.mxu0 0
      %1549 = vmatpush1.bf16.msra.mxu0 0
      %1550 = vmatprep.subr.bf16.mxu0 0
      %1551 = vmatpush1.bf16.msra.mxu0 0
      %1552 = vmatprep.subr.bf16.mxu0 0
      %1553 = vmatpush1.bf16.msra.mxu0 0
      %1554 = vmatprep.subr.bf16.mxu0 0
      %1555 = vmatpush1.bf16.msra.mxu0 0
      %1556 = vmatprep.mubr.bf16.mxu0 0
      %1557 = vmatmul.mubr.bf16.gmra.mrb[0].mxu0 %v1519
      %v1558 = vpop.f32.mrb[0].mxu0
      %v1559 = vadd.f32 0.0, %v1558
      %v1560 = vpop.f32.mrb[0].mxu0
      %v1561 = vpop.f32.mrb[0].mxu0
      %v1562 = vpop.f32.mrb[0].mxu0
      %1563 = vdwg.mxu0
      %1564 = vst.msk [vmem:[#allocation4] sm:$0xff] %vm1047, %v1559
      %v1565 = vld [vmem:[#allocation3] sm:$0xf]
      %1567 = vrot.lane.b32.xlu0 %v1453, 112
      %v1568 = vpop.permute.xlu0 %1567
      %v1570 = vunpack.c.l.b16 %v1565
      %v1571 = vpack.c.b16 %v1570, %v1570
      %1572 = vrot.lane.b32.xlu0 %v1571, 112
      %v1573 = vpop.permute.xlu0 %1572
      %v1575 = vsel %vm1047, %v1568, 0
      %v1578 = vsel %vm1047, %v1573, 0
      %1580 = vmatprep.subr.bf16.mxu0 0
      %1581 = vmatpush1.bf16.xpose.msra.mxu0 %v1578
      %1582 = vmatprep.subr.bf16.mxu0 0
      %1583 = vmatpush1.bf16.xpose.msra.mxu0 0
      %1584 = vmatprep.subr.bf16.mxu0 0
      %1585 = vmatpush1.bf16.xpose.msra.mxu0 0
      %1586 = vmatprep.subr.bf16.mxu0 0
      %1587 = vmatpush1.bf16.xpose.msra.mxu0 0
      %1588 = vmatprep.subr.bf16.mxu0 0
      %1589 = vmatpush1.bf16.xpose.msra.mxu0 0
      %1590 = vmatprep.subr.bf16.mxu0 0
      %1591 = vmatpush1.bf16.xpose.msra.mxu0 0
      %1592 = vmatprep.subr.bf16.mxu0 0
      %1593 = vmatpush1.bf16.xpose.msra.mxu0 0
      %1594 = vmatprep.subr.bf16.mxu0 0
      %1595 = vmatpush1.bf16.xpose.msra.mxu0 0
      %1596 = vmatprep.subr.bf16.mxu0 0
      %1597 = vmatpush1.bf16.xpose.msra.mxu0 0
      %1598 = vmatprep.subr.bf16.mxu0 0
      %1599 = vmatpush1.bf16.xpose.msra.mxu0 0
      %1600 = vmatprep.subr.bf16.mxu0 0
      %1601 = vmatpush1.bf16.xpose.msra.mxu0 0
      %1602 = vmatprep.subr.bf16.mxu0 0
      %1603 = vmatpush1.bf16.xpose.msra.mxu0 0
      %1604 = vmatprep.subr.bf16.mxu0 0
      %1605 = vmatpush1.bf16.xpose.msra.mxu0 0
      %1606 = vmatprep.subr.bf16.mxu0 0
      %1607 = vmatpush1.bf16.xpose.msra.mxu0 0
      %1608 = vmatprep.subr.bf16.mxu0 0
      %1609 = vmatpush1.bf16.xpose.msra.mxu0 0
      %1610 = vmatprep.subr.bf16.mxu0 0
      %1611 = vmatpush1.bf16.xpose.msra.mxu0 0
      %1612 = vmatprep.mubr.bf16.mxu0 0
      %1613 = vmatmul.mubr.bf16.gmra.mrb[0].mxu0 %v1575
      %v1614 = vpop.f32.mrb[0].mxu0
      %v1615 = vadd.f32 0.0, %v1614
      %v1616 = vpop.f32.mrb[0].mxu0
      %v1617 = vpop.f32.mrb[0].mxu0
      %v1618 = vpop.f32.mrb[0].mxu0
      %1619 = vdwg.mxu0
      %v1620 = vmul.f32 %v1615, 0.25
      %v1621 = vsel %vm1096, %v1620, -inf
      %1622 = vmax.xlane.f32.xlu0 %v1621
      %v1623 = vpop.xlane.xlu0 %1622
      %v1624 = vsub.f32 %v1620, %v1623
      %v1625 = vmul.f32 %v1624, 1.442695
      %v1626 = vpow.pop %v1625
      %v1627 = vsel %vm1096, %v1626, 0.0
      %1628 = vadd.xlane.f32.xlu0 %v1627
      %v1629 = vpop.xlane.xlu0 %1628
      %v1630 = vrcp.pop %v1629
      %v1631 = vmul.f32 %v1626, %v1630
      %v1632 = vpack.c.bf16 %v1631, %v1631
      %1633 = vrot.lane.b32.xlu0 %v1571, 80
      %v1634 = vpop.permute.xlu0 %1633
      %v1636 = vsel %vm1096, %v1632, 0
      %v1639 = vsel %vm1117, %v1634, 0
      %1641 = vmatprep.subr.bf16.mxu0 0
      %1642 = vmatpush1.bf16.msra.mxu0 %v1639
      %1643 = vmatprep.subr.bf16.mxu0 0
      %1644 = vmatpush1.bf16.msra.mxu0 0
      %1645 = vmatprep.subr.bf16.mxu0 0
      %1646 = vmatpush1.bf16.msra.mxu0 0
      %1647 = vmatprep.subr.bf16.mxu0 0
      %1648 = vmatpush1.bf16.msra.mxu0 0
      %1649 = vmatprep.subr.bf16.mxu0 0
      %1650 = vmatpush1.bf16.msra.mxu0 0
      %1651 = vmatprep.subr.bf16.mxu0 0
      %1652 = vmatpush1.bf16.msra.mxu0 0
      %1653 = vmatprep.subr.bf16.mxu0 0
      %1654 = vmatpush1.bf16.msra.mxu0 0
      %1655 = vmatprep.subr.bf16.mxu0 0
      %1656 = vmatpush1.bf16.msra.mxu0 0
      %1657 = vmatprep.subr.bf16.mxu0 0
      %1658 = vmatpush1.bf16.msra.mxu0 0
      %1659 = vmatprep.subr.bf16.mxu0 0
      %1660 = vmatpush1.bf16.msra.mxu0 0
      %1661 = vmatprep.subr.bf16.mxu0 0
      %1662 = vmatpush1.bf16.msra.mxu0 0
      %1663 = vmatprep.subr.bf16.mxu0 0
      %1664 = vmatpush1.bf16.msra.mxu0 0
      %1665 = vmatprep.subr.bf16.mxu0 0
      %1666 = vmatpush1.bf16.msra.mxu0 0
      %1667 = vmatprep.subr.bf16.mxu0 0
      %1668 = vmatpush1.bf16.msra.mxu0 0
      %1669 = vmatprep.subr.bf16.mxu0 0
      %1670 = vmatpush1.bf16.msra.mxu0 0
      %1671 = vmatprep.subr.bf16.mxu0 0
      %1672 = vmatpush1.bf16.msra.mxu0 0
      %1673 = vmatprep.mubr.bf16.mxu0 0
      %1674 = vmatmul.mubr.bf16.gmra.mrb[0].mxu0 %v1636
      %v1675 = vpop.f32.mrb[0].mxu0
      %v1676 = vadd.f32 0.0, %v1675
      %v1677 = vpop.f32.mrb[0].mxu0
      %v1678 = vpop.f32.mrb[0].mxu0
      %v1679 = vpop.f32.mrb[0].mxu0
      %1680 = vdwg.mxu0
      %1682 = vrot.lane.b32.xlu0 %v1676, 16
      %v1683 = vpop.permute.xlu0 %1682
      %1685 = vst.msk [vmem:[#allocation4] sm:$0xff] %vm1283, %v1683
      %v1686 = vld [vmem:[#allocation4] sm:$0xff]
      %v1687 = vld [vmem:[%s15] sm:$0xf]
      %v1688 = vld [vmem:[%s15 + $0x4] sm:$0xf]
      %v1689 = vld [vmem:[%s15 + $0x8] sm:$0xf]
      %v1690 = vld [vmem:[%s15 + $0xc] sm:$0xf]
      %v1691 = vpack.c.bf16 %v1686, %v1686
      %v1696 = vunpack.c.l.b16 %v1687
      %v1697 = vunpack.c.l.b16 %v1688
      %v1698 = vunpack.c.l.b16 %v1689
      %v1699 = vunpack.c.l.b16 %v1690
      %v1700 = vpack.c.b16 %v1697, %v1696
      %v1701 = vpack.c.b16 %v1699, %v1698
      %v1705 = vsel %vm1001, %v1691, 0
      %1707 = vmatprep.subr.bf16.mxu0 0
      %1708 = vmatpush1.bf16.msra.mxu0 %v1700
      %1709 = vmatprep.subr.bf16.mxu0 0
      %1710 = vmatpush1.bf16.msra.mxu0 %v1701
      %1711 = vmatprep.subr.bf16.mxu0 0
      %1712 = vmatpush1.bf16.msra.mxu0 0
      %1713 = vmatprep.subr.bf16.mxu0 0
      %1714 = vmatpush1.bf16.msra.mxu0 0
      %1715 = vmatprep.subr.bf16.mxu0 0
      %1716 = vmatpush1.bf16.msra.mxu0 0
      %1717 = vmatprep.subr.bf16.mxu0 0
      %1718 = vmatpush1.bf16.msra.mxu0 0
      %1719 = vmatprep.subr.bf16.mxu0 0
      %1720 = vmatpush1.bf16.msra.mxu0 0
      %1721 = vmatprep.subr.bf16.mxu0 0
      %1722 = vmatpush1.bf16.msra.mxu0 0
      %1723 = vmatprep.subr.bf16.mxu0 0
      %1724 = vmatpush1.bf16.msra.mxu0 0
      %1725 = vmatprep.subr.bf16.mxu0 0
      %1726 = vmatpush1.bf16.msra.mxu0 0
      %1727 = vmatprep.subr.bf16.mxu0 0
      %1728 = vmatpush1.bf16.msra.mxu0 0
      %1729 = vmatprep.subr.bf16.mxu0 0
      %1730 = vmatpush1.bf16.msra.mxu0 0
      %1731 = vmatprep.subr.bf16.mxu0 0
      %1732 = vmatpush1.bf16.msra.mxu0 0
      %1733 = vmatprep.subr.bf16.mxu0 0
      %1734 = vmatpush1.bf16.msra.mxu0 0
      %1735 = vmatprep.subr.bf16.mxu0 0
      %1736 = vmatpush1.bf16.msra.mxu0 0
      %1737 = vmatprep.subr.bf16.mxu0 0
      %1738 = vmatpush1.bf16.msra.mxu0 0
      %1739 = vmatprep.mubr.bf16.mxu0 0
      %1740 = vmatmul.mubr.bf16.gmra.mrb[0].mxu0 %v1705
      %v1741 = vpop.f32.mrb[0].mxu0
      %v1742 = vadd.f32 0.0, %v1741
      %v1743 = vpop.f32.mrb[0].mxu0
      %v1744 = vpop.f32.mrb[0].mxu0
      %v1745 = vpop.f32.mrb[0].mxu0
      %1746 = vdwg.mxu0
      %v1747 = vadd.f32 %v1384, %v1742
      %v1748 = vld [vmem:[%s16] sm:$0x1]
      %v1750 = vlaneseq
      %v1751 = vshrl.u32 %v1750, 7
      %v1752 = vsub.s32 0, %v1751
      %v1753 = vrot.slane %v1748, %v1752
      %v1755 = vadd.f32 %v1747, %v1753
      %v1756 = vld [vmem:[%s17] sm:$0x1]
      %v1757 = vld [vmem:[%s18] sm:$0x1]
      %v1758 = vsel %vm1001, %v1755, 0.0
      %1759 = vadd.xlane.f32.xlu0 %v1758
      %v1760 = vpop.xlane.xlu0 %1759
      %v1761 = vmul.f32 %v1760, %v1360
      %v1762 = vsub.f32 %v1755, %v1761
      %v1763 = vmul.f32 %v1762, %v1762
      %v1764 = vsel %vm1001, %v1763, 0.0
      %1765 = vadd.xlane.f32.xlu0 %v1764
      %v1766 = vpop.xlane.xlu0 %1765
      %v1767 = vmul.f32 %v1766, %v1360
      %v1768 = vadd.f32 %v1767, 1e-05
      %v1769 = vrsqrt.pop %v1768
      %v1770 = vmul.f32 %v1762, %v1769
      %v1772 = vlaneseq
      %v1773 = vshrl.u32 %v1772, 7
      %v1774 = vsub.s32 0, %v1773
      %v1775 = vrot.slane %v1756, %v1774
      %v1777 = vmul.f32 %v1770, %v1775
      %v1779 = vlaneseq
      %v1780 = vshrl.u32 %v1779, 7
      %v1781 = vsub.s32 0, %v1780
      %v1782 = vrot.slane %v1757, %v1781
      %v1784 = vadd.f32 %v1777, %v1782
      %v1785 = vld [vmem:[%s19] sm:$0xf]
      %v1786 = vld [vmem:[%s19 + $0x4] sm:$0xf]
      %v1787 = vld [vmem:[%s19 + $0x8] sm:$0xf]
      %v1788 = vld [vmem:[%s19 + $0xc] sm:$0xf]
      %v1789 = vpack.c.bf16 %v1784, %v1784
      %v1790 = vld [vmem:[%s20] sm:$0x1]
      %v1792 = vlaneseq
      %v1793 = vshrl.u32 %v1792, 7
      %v1794 = vsub.s32 0, %v1793
      %v1795 = vrot.slane %v1790, %v1794
      %v1801 = vunpack.c.l.b16 %v1785
      %v1802 = vunpack.c.l.b16 %v1786
      %v1803 = vunpack.c.l.b16 %v1787
      %v1804 = vunpack.c.l.b16 %v1788
      %v1805 = vpack.c.b16 %v1802, %v1801
      %v1806 = vpack.c.b16 %v1804, %v1803
      %v1810 = vsel %vm1001, %v1789, 0
      %1812 = vmatprep.subr.bf16.mxu0 0
      %1813 = vmatpush1.bf16.msra.mxu0 %v1805
      %1814 = vmatprep.subr.bf16.mxu0 0
      %1815 = vmatpush1.bf16.msra.mxu0 %v1806
      %1816 = vmatprep.subr.bf16.mxu0 0
      %1817 = vmatpush1.bf16.msra.mxu0 0
      %1818 = vmatprep.subr.bf16.mxu0 0
      %1819 = vmatpush1.bf16.msra.mxu0 0
      %1820 = vmatprep.subr.bf16.mxu0 0
      %1821 = vmatpush1.bf16.msra.mxu0 0
      %1822 = vmatprep.subr.bf16.mxu0 0
      %1823 = vmatpush1.bf16.msra.mxu0 0
      %1824 = vmatprep.subr.bf16.mxu0 0
      %1825 = vmatpush1.bf16.msra.mxu0 0
      %1826 = vmatprep.subr.bf16.mxu0 0
      %1827 = vmatpush1.bf16.msra.mxu0 0
      %1828 = vmatprep.subr.bf16.mxu0 0
      %1829 = vmatpush1.bf16.msra.mxu0 0
      %1830 = vmatprep.subr.bf16.mxu0 0
      %1831 = vmatpush1.bf16.msra.mxu0 0
      %1832 = vmatprep.subr.bf16.mxu0 0
      %1833 = vmatpush1.bf16.msra.mxu0 0
      %1834 = vmatprep.subr.bf16.mxu0 0
      %1835 = vmatpush1.bf16.msra.mxu0 0
      %1836 = vmatprep.subr.bf16.mxu0 0
      %1837 = vmatpush1.bf16.msra.mxu0 0
      %1838 = vmatprep.subr.bf16.mxu0 0
      %1839 = vmatpush1.bf16.msra.mxu0 0
      %1840 = vmatprep.subr.bf16.mxu0 0
      %1841 = vmatpush1.bf16.msra.mxu0 0
      %1842 = vmatprep.subr.bf16.mxu0 0
      %1843 = vmatpush1.bf16.msra.mxu0 0
      %1844 = vmatprep.mubr.bf16.mxu0 0
      %1845 = vmatmul.mubr.bf16.gmra.mrb[0].mxu0 %v1810
      %v1846 = vpop.f32.mrb[0].mxu0
      %v1847 = vadd.f32 %v1795, %v1846
      %v1848 = vpop.f32.mrb[0].mxu0
      %v1849 = vpop.f32.mrb[0].mxu0
      %v1850 = vpop.f32.mrb[0].mxu0
      %1851 = vdwg.mxu0
      %v1852 = vmax.f32 %v1847, 0.0
      %v1853 = vld [vmem:[%s21] sm:$0xf]
      %v1854 = vld [vmem:[%s21 + $0x4] sm:$0xf]
      %v1855 = vld [vmem:[%s21 + $0x8] sm:$0xf]
      %v1856 = vld [vmem:[%s21 + $0xc] sm:$0xf]
      %v1857 = vld [vmem:[%s21 + $0x10] sm:$0xf]
      %v1858 = vld [vmem:[%s21 + $0x14] sm:$0xf]
      %v1859 = vld [vmem:[%s21 + $0x18] sm:$0xf]
      %v1860 = vld [vmem:[%s21 + $0x1c] sm:$0xf]
      %v1861 = vpack.c.bf16 %v1852, %v1852
      %v1870 = vunpack.c.l.b16 %v1853
      %v1871 = vunpack.c.l.b16 %v1854
      %v1872 = vunpack.c.l.b16 %v1855
      %v1873 = vunpack.c.l.b16 %v1856
      %v1874 = vunpack.c.l.b16 %v1857
      %v1875 = vunpack.c.l.b16 %v1858
      %v1876 = vunpack.c.l.b16 %v1859
      %v1877 = vunpack.c.l.b16 %v1860
      %v1878 = vpack.c.b16 %v1871, %v1870
      %v1879 = vpack.c.b16 %v1873, %v1872
      %v1880 = vpack.c.b16 %v1875, %v1874
      %v1881 = vpack.c.b16 %v1877, %v1876
      %vm1886 = vcmask 523264
      %v1888 = vsel %vm1886, %v1861, 0
      %1890 = vmatprep.subr.bf16.mxu0 0
      %1891 = vmatpush1.bf16.msra.mxu0 %v1878
      %1892 = vmatprep.subr.bf16.mxu0 0
      %1893 = vmatpush1.bf16.msra.mxu0 %v1879
      %1894 = vmatprep.subr.bf16.mxu0 0
      %1895 = vmatpush1.bf16.msra.mxu0 %v1880
      %1896 = vmatprep.subr.bf16.mxu0 0
      %1897 = vmatpush1.bf16.msra.mxu0 %v1881
      %1898 = vmatprep.subr.bf16.mxu0 0
      %1899 = vmatpush1.bf16.msra.mxu0 0
      %1900 = vmatprep.subr.bf16.mxu0 0
      %1901 = vmatpush1.bf16.msra.mxu0 0
      %1902 = vmatprep.subr.bf16.mxu0 0
      %1903 = vmatpush1.bf16.msra.mxu0 0
      %1904 = vmatprep.subr.bf16.mxu0 0
      %1905 = vmatpush1.bf16.msra.mxu0 0
      %1906 = vmatprep.subr.bf16.mxu0 0
      %1907 = vmatpush1.bf16.msra.mxu0 0
      %1908 = vmatprep.subr.bf16.mxu0 0
      %1909 = vmatpush1.bf16.msra.mxu0 0
      %1910 = vmatprep.subr.bf16.mxu0 0
      %1911 = vmatpush1.bf16.msra.mxu0 0
      %1912 = vmatprep.subr.bf16.mxu0 0
      %1913 = vmatpush1.bf16.msra.mxu0 0
      %1914 = vmatprep.subr.bf16.mxu0 0
      %1915 = vmatpush1.bf16.msra.mxu0 0
      %1916 = vmatprep.subr.bf16.mxu0 0
      %1917 = vmatpush1.bf16.msra.mxu0 0
      %1918 = vmatprep.subr.bf16.mxu0 0
      %1919 = vmatpush1.bf16.msra.mxu0 0
      %1920 = vmatprep.subr.bf16.mxu0 0
      %1921 = vmatpush1.bf16.msra.mxu0 0
      %1922 = vmatprep.mubr.bf16.mxu0 0
      %1923 = vmatmul.mubr.bf16.gmra.mrb[0].mxu0 %v1888
      %v1924 = vpop.f32.mrb[0].mxu0
      %v1925 = vadd.f32 0.0, %v1924
      %v1926 = vpop.f32.mrb[0].mxu0
      %v1927 = vpop.f32.mrb[0].mxu0
      %v1928 = vpop.f32.mrb[0].mxu0
      %1929 = vdwg.mxu0
      %v1930 = vadd.f32 %v1784, %v1925
      %v1931 = vld [vmem:[%s22] sm:$0x1]
      %v1933 = vlaneseq
      %v1934 = vshrl.u32 %v1933, 7
      %v1935 = vsub.s32 0, %v1934
      %v1936 = vrot.slane %v1931, %v1935
      %v1938 = vadd.f32 %v1930, %v1936
      %v1939 = vld [vmem:[%s23] sm:$0x1]
      %v1940 = vld [vmem:[%s24] sm:$0x1]
      %v1941 = vsel %vm1001, %v1938, 0.0
      %1942 = vadd.xlane.f32.xlu0 %v1941
      %v1943 = vpop.xlane.xlu0 %1942
      %v1944 = vmul.f32 %v1943, %v1360
      %v1945 = vsub.f32 %v1938, %v1944
      %v1946 = vmul.f32 %v1945, %v1945
      %v1947 = vsel %vm1001, %v1946, 0.0
      %1948 = vadd.xlane.f32.xlu0 %v1947
      %v1949 = vpop.xlane.xlu0 %1948
      %v1950 = vmul.f32 %v1949, %v1360
      %v1951 = vadd.f32 %v1950, 1e-05
      %v1952 = vrsqrt.pop %v1951
      %v1953 = vmul.f32 %v1945, %v1952
      %v1955 = vlaneseq
      %v1956 = vshrl.u32 %v1955, 7
      %v1957 = vsub.s32 0, %v1956
      %v1958 = vrot.slane %v1939, %v1957
      %v1960 = vmul.f32 %v1953, %v1958
      %v1962 = vlaneseq
      %v1963 = vshrl.u32 %v1962, 7
      %v1964 = vsub.s32 0, %v1963
      %v1965 = vrot.slane %v1940, %v1964
      %v1967 = vadd.f32 %v1960, %v1965
      %1968 = vst.msk [vmem:[%s810] sm:$0xff] %vm1001, %v1967
      %p1969 = scmp.lt.s32.totalorder %s40, 1
      %s1970 = scalar_select %p1969, %s40, 1
      %p1971 = scmp.lt.s32.totalorder %s41, 0
      %s1972 = scalar_select %p1971, %s41, 0
      %s1973 = sadd.s32 %s1972, %s1970
      %s1974 = smul.addr %s1973, 8
      %s1975 = scalar_lea.vmem %s25, %s1974
      // Predicated region
      $region125: #{key_emotions_forward.5} parent=119 // pred_check
        %p1976 = pneg %p608
      $region126: #{key_emotions_forward.5} parent=119 // pred_check_branch
        %1978 = sbr.rel (%p1976) target = $region128
      $region127: #{key_emotions_forward.5} parent=119 // pred_region
        _
      $region128: #{key_emotions_forward.5} parent=119 // pred_fallthru
        _
    $region120: #{key_emotions_forward.5} parent=5 // pred_fallthru
      _
    %p1979 = scmp.le.s32.totalorder 2, %s31
    // Predicated region
    $region129: #{key_emotions_forward.5} parent=5 // pred_check
      %p1980 = pneg %p1979
    $region130: #{key_emotions_forward.5} parent=5 // pred_check_branch
      %1982 = sbr.rel (%p1980) target = $region132
    $region131: #{key_emotions_forward.5} parent=5 // pred_region
      %s1983 = ssub.s32 %s31, 2
      // Predicated region
      $region133: #{key_emotions_forward.5} parent=131 // pred_check
        %p1984 = pneg %p614
      $region134: #{key_emotions_forward.5} parent=131 // pred_check_branch
        %1986 = sbr.rel (%p1984) target = $region136
      $region135: #{key_emotions_forward.5} parent=131 // pred_region
        %p1987 = scmp.lt.s32.totalorder %s42, 1
        %s1988 = scalar_select %p1987, %s42, 1
        %p1989 = scmp.lt.s32.totalorder %s43, 0
        %s1990 = scalar_select %p1989, %s43, 0
        %s1991 = sadd.s32 %s1990, %s1988
        %s1992 = smul.addr %s1991, 8
        %s1993 = scalar_lea.vmem %s25, %s1992
      $region136: #{key_emotions_forward.5} parent=131 // pred_fallthru
        _
    $region132: #{key_emotions_forward.5} parent=5 // pred_fallthru
      _
  $region6: #{key_emotions_forward.5} parent=0 // loop_footer
    %s35 = sadd.s32 1, %s31
  $region7: #{key_emotions_forward.5} parent=0 // loop_footer_branch
    %30 = sbr.rel target = $region3
  $region8: #{key_emotions_forward.5} parent=0 // loop_exit
    _

// kernel: key_emotions_forward.6
$region0: #{key_emotions_forward.6}
  #allocation0 [shape = 'u32[]', space=smem, size = 0x4, offset = 0x4, fixed_abs, tag = 'smem constant byte address 0x4 - core index']
  #allocation1 [shape = 'u32[144,128]{1,0:T(1,128)}', space=vmem, size = 0x12000, scoped, tag = 'internal scratch']
  #allocation2 [shape = 'bf16[8,64]{1,0:T(8,128)(2,1)}', space=vmem, size = 0x800, scoped, tag = 'scratch operand']
  #allocation3 [shape = 'bf16[8,64]{1,0:T(8,128)(2,1)}', space=vmem, size = 0x800, scoped, tag = 'scratch operand']
  #allocation4 [shape = 'f32[8,32]{1,0:T(8,128)}', space=vmem, size = 0x1000, scoped, tag = 'scratch operand']
  %s0 = inlined_call_operand.vmem [shape: f32[2,8,32], index: 0, kind: input, shape index: {}]
  %s1 = inlined_call_operand.vmem [shape: f32[2,8,32], index: 1, kind: input, shape index: {}]
  %s2 = inlined_call_operand.vmem [shape: f32[2,1,8], index: 2, kind: input, shape index: {}]
  %s3 = inlined_call_operand.vmem [shape: bf16[32,32], index: 3, kind: input, shape index: {}]
  %s4 = inlined_call_operand.vmem [shape: f32[1,32], index: 4, kind: input, shape index: {}]
  %s5 = inlined_call_operand.vmem [shape: bf16[32,64], index: 5, kind: input, shape index: {}]
  %s6 = inlined_call_operand.vmem [shape: f32[1,64], index: 6, kind: input, shape index: {}]
  %s7 = inlined_call_operand.vmem [shape: bf16[32,32], index: 7, kind: input, shape index: {}]
  %s8 = inlined_call_operand.vmem [shape: f32[1,32], index: 8, kind: input, shape index: {}]
  %s9 = inlined_call_operand.vmem [shape: f32[1,32], index: 9, kind: input, shape index: {}]
  %s10 = inlined_call_operand.vmem [shape: f32[1,32], index: 10, kind: input, shape index: {}]
  %s11 = inlined_call_operand.vmem [shape: bf16[32,32], index: 11, kind: input, shape index: {}]
  %s12 = inlined_call_operand.vmem [shape: f32[1,32], index: 12, kind: input, shape index: {}]
  %s13 = inlined_call_operand.vmem [shape: bf16[32,64], index: 13, kind: input, shape index: {}]
  %s14 = inlined_call_operand.vmem [shape: f32[1,64], index: 14, kind: input, shape index: {}]
  %s15 = inlined_call_operand.vmem [shape: bf16[32,32], index: 15, kind: input, shape index: {}]
  %s16 = inlined_call_operand.vmem [shape: f32[1,32], index: 16, kind: input, shape index: {}]
  %s17 = inlined_call_operand.vmem [shape: f32[1,32], index: 17, kind: input, shape index: {}]
  %s18 = inlined_call_operand.vmem [shape: f32[1,32], index: 18, kind: input, shape index: {}]
  %s19 = inlined_call_operand.vmem [shape: bf16[32,64], index: 19, kind: input, shape index: {}]
  %s20 = inlined_call_operand.hbm [shape: f32[1,64], index: 20, kind: input, shape index: {}]
  %s21 = inlined_call_operand.vmem [shape: bf16[64,32], index: 21, kind: input, shape index: {}]
  %s22 = inlined_call_operand.hbm [shape: f32[1,32], index: 22, kind: input, shape index: {}]
  %s23 = inlined_call_operand.hbm [shape: f32[1,32], index: 23, kind: input, shape index: {}]
  %s24 = inlined_call_operand.hbm [shape: f32[1,32], index: 24, kind: input, shape index: {}]
  %s25 = inlined_call_operand.vmem [shape: f32[2,8,32], index: 25, kind: output, shape index: {}]
  %s26 = sld [smem:[#allocation0]]
  $region153: #{key_emotions_forward.6} parent=0
    _
  %s28 = ssub.s32 1, %s26
  %s29 = scalar_select 0, %s28, %s26
  $region1: #{key_emotions_forward.6} parent=0
    #allocation5 [shape = 'u8[512]{0}', space=vmem, size = 0x400, scoped, tag = 'input window, operand 20, single buffered']
    #allocation6 [shape = 's32[2]{0}', space=sflag, size = 0x8, scoped, tag = 'scoped memory for key_emotions_forward.6']
    #allocation7 [shape = 'u8[512]{0}', space=vmem, size = 0x400, scoped, tag = 'input window, operand 22, single buffered']
    #allocation8 [shape = 's32[1]{0}', space=sflag, size = 0x4, scoped, tag = 'scoped memory for key_emotions_forward.6']
    #allocation9 [shape = 'u8[512]{0}', space=vmem, size = 0x400, scoped, tag = 'input window, operand 23, single buffered']
    #allocation10 [shape = 'u8[512]{0}', space=vmem, size = 0x400, scoped, tag = 'input window, operand 24, single buffered']
    #allocation11 [shape = 's32[1]{0}', space=sflag, size = 0x4, scoped, tag = 'scoped memory for key_emotions_forward.6']
    %30 = vsyncpa [#allocation6], 0
    %31 = vsyncpa [#allocation8], 0
    %32 = vsyncpa [#allocation11], 0
    loop: start=0, step=1, limit=4
    $region2: #{key_emotions_forward.6} parent=1 // loop_pre_header
      _
    $region3: #{key_emotions_forward.6} parent=1 // loop_header
      %s34 = sphi 0, %s38
      %p35 = scmp.ge.s32.totalorder %s34, 4
      %s41 = sphi 0, %s53
      %s42 = sphi 0, %s49
      %s43 = sphi 0, %s41
      %s44 = sphi 0, %s42
      %s45 = sphi 0, %s43
      %s46 = sphi 0, %s44
      %s56 = sphi 0, %s58
      %s59 = sphi 0, %s56
      %s60 = sphi 0, %s59
      %s76 = sphi 0, %s60
      %s82 = sphi 0, %s84
      %s85 = sphi 0, %s82
      %s86 = sphi 0, %s85
      %s102 = sphi 0, %s86
      %s108 = sphi 0, %s110
      %s111 = sphi 0, %s108
      %s112 = sphi 0, %s111
      %s128 = sphi 0, %s112
      %s132 = sphi 0, %s132
      %s134 = sphi 0, %s132
      %s135 = sphi 0, %s134
      %s149 = sphi 0, %s135
      %s153 = sphi 0, %s153
      %s155 = sphi 0, %s153
      %s156 = sphi 0, %s155
      %s170 = sphi 0, %s156
      %s174 = sphi 0, %s174
      %s176 = sphi 0, %s174
      %s177 = sphi 0, %s176
      %s191 = sphi 0, %s177
      %s195 = sphi 0, %s195
      %s197 = sphi 0, %s195
      %s198 = sphi 0, %s197
      %s212 = sphi 0, %s198
      %s216 = sphi 0, %s216
      %s218 = sphi 0, %s216
      %s219 = sphi 0, %s218
      %s233 = sphi 0, %s219
      %s237 = sphi 0, %s237
      %s239 = sphi 0, %s237
      %s240 = sphi 0, %s239
      %s254 = sphi 0, %s240
      %s258 = sphi 0, %s258
      %s260 = sphi 0, %s258
      %s261 = sphi 0, %s260
      %s275 = sphi 0, %s261
      %s279 = sphi 0, %s279
      %s281 = sphi 0, %s279
      %s282 = sphi 0, %s281
      %s296 = sphi 0, %s282
      %s300 = sphi 0, %s300
      %s302 = sphi 0, %s300
      %s303 = sphi 0, %s302
      %s317 = sphi 0, %s303
      %s321 = sphi 0, %s321
      %s323 = sphi 0, %s321
      %s324 = sphi 0, %s323
      %s338 = sphi 0, %s324
      %s342 = sphi 0, %s342
      %s344 = sphi 0, %s342
      %s345 = sphi 0, %s344
      %s359 = sphi 0, %s345
      %s363 = sphi 0, %s363
      %s365 = sphi 0, %s363
      %s366 = sphi 0, %s365
      %s380 = sphi 0, %s366
      %s384 = sphi 0, %s384
      %s386 = sphi 0, %s384
      %s387 = sphi 0, %s386
      %s401 = sphi 0, %s387
      %s405 = sphi 0, %s405
      %s407 = sphi 0, %s405
      %s408 = sphi 0, %s407
      %s422 = sphi 0, %s408
      %s426 = sphi 0, %s426
      %s428 = sphi 0, %s426
      %s429 = sphi 0, %s428
      %s443 = sphi 0, %s429
      %s447 = sphi 0, %s447
      %s449 = sphi 0, %s447
      %s450 = sphi 0, %s449
      %s464 = sphi 0, %s450
      %s468 = sphi 0, %s468
      %s470 = sphi 0, %s468
      %s471 = sphi 0, %s470
      %s485 = sphi 0, %s471
      %s489 = sphi 0, %s489
      %s491 = sphi 0, %s489
      %s492 = sphi 0, %s491
      %s506 = sphi 0, %s492
      %s510 = sphi 0, %s510
      %s512 = sphi 0, %s510
      %s513 = sphi 0, %s512
      %s527 = sphi 0, %s513
      %s531 = sphi 0, %s531
      %s533 = sphi 0, %s531
      %s534 = sphi 0, %s533
      %s548 = sphi 0, %s534
      %s552 = sphi 0, %s552
      %s554 = sphi 0, %s552
      %s555 = sphi 0, %s554
      %s569 = sphi 0, %s555
      %s573 = sphi 0, %s573
      %s575 = sphi 0, %s573
      %s576 = sphi 0, %s575
      %s590 = sphi 0, %s576
      %s598 = sphi 0, %s600
      %s601 = sphi 0, %s598
      %s602 = sphi 0, %s601
      %s618 = sphi 0, %s602
    $region4: #{key_emotions_forward.6} parent=1 // loop_header_branch
      %37 = sbr.rel (%p35) target = $region8
    $region5: #{key_emotions_forward.6} parent=1 // loop_body
      %s39 = ssub.s32 %s34, 1
      %s40 = ssub.s32 %s34, 2
      %s47 = sadd.s32 1, %s42
      %p48 = scmp.ge.s32.totalorder %s47, 1
      %s49 = scalar_select %p48, 0, %s47
      %s50 = sadd.s32 1, %s41
      %s51 = scalar_select %p48, %s50, %s41
      %p52 = scmp.ge.s32.totalorder %s51, 2
      %s53 = scalar_select %p52, 0, %s51
      %s54 = ssub.s32 %s41, %s53
      %p55 = scmp.eq.s32.totalorder %s54, 0
      %s57 = sadd.s32 %s56, 1
      %s58 = scalar_select %p55, %s56, %s57
      %p61 = pneg %p55
      %p62 = scmp.eq.s32.totalorder %s34, 1
      %p63 = por %p61, %p62
      %p64 = scmp.ne.s32.totalorder %s56, %s59
      %p65 = scmp.eq.s32.totalorder %s34, 0
      %p66 = por %p64, %p65
      %p67 = scmp.ne.s32.totalorder %s56, %s59
      %p68 = scmp.eq.s32.totalorder %s39, 1
      %p69 = por %p67, %p68
      %p70 = scmp.ne.s32.totalorder %s59, %s60
      %p71 = scmp.eq.s32.totalorder %s39, 0
      %p72 = por %p70, %p71
      %p73 = scmp.ne.s32.totalorder %s59, %s60
      %p74 = scmp.eq.s32.totalorder %s40, 1
      %p75 = por %p73, %p74
      %p77 = scmp.ne.s32.totalorder %s60, %s76
      %p78 = scmp.eq.s32.totalorder %s40, 0
      %p79 = por %p77, %p78
      %s80 = ssub.s32 %s41, %s53
      %p81 = scmp.eq.s32.totalorder %s80, 0
      %s83 = sadd.s32 %s82, 1
      %s84 = scalar_select %p81, %s82, %s83
      %p87 = pneg %p81
      %p88 = scmp.eq.s32.totalorder %s34, 1
      %p89 = por %p87, %p88
      %p90 = scmp.ne.s32.totalorder %s82, %s85
      %p91 = scmp.eq.s32.totalorder %s34, 0
      %p92 = por %p90, %p91
      %p93 = scmp.ne.s32.totalorder %s82, %s85
      %p94 = scmp.eq.s32.totalorder %s39, 1
      %p95 = por %p93, %p94
      %p96 = scmp.ne.s32.totalorder %s85, %s86
      %p97 = scmp.eq.s32.totalorder %s39, 0
      %p98 = por %p96, %p97
      %p99 = scmp.ne.s32.totalorder %s85, %s86
      %p100 = scmp.eq.s32.totalorder %s40, 1
      %p101 = por %p99, %p100
      %p103 = scmp.ne.s32.totalorder %s86, %s102
      %p104 = scmp.eq.s32.totalorder %s40, 0
      %p105 = por %p103, %p104
      %s106 = ssub.s32 %s41, %s53
      %p107 = scmp.eq.s32.totalorder %s106, 0
      %s109 = sadd.s32 %s108, 1
      %s110 = scalar_select %p107, %s108, %s109
      %p113 = pneg %p107
      %p114 = scmp.eq.s32.totalorder %s34, 1
      %p115 = por %p113, %p114
      %p116 = scmp.ne.s32.totalorder %s108, %s111
      %p117 = scmp.eq.s32.totalorder %s34, 0
      %p118 = por %p116, %p117
      %p119 = scmp.ne.s32.totalorder %s108, %s111
      %p120 = scmp.eq.s32.totalorder %s39, 1
      %p121 = por %p119, %p120
      %p122 = scmp.ne.s32.totalorder %s111, %s112
      %p123 = scmp.eq.s32.totalorder %s39, 0
      %p124 = por %p122, %p123
      %p125 = scmp.ne.s32.totalorder %s111, %s112
      %p126 = scmp.eq.s32.totalorder %s40, 1
      %p127 = por %p125, %p126
      %p129 = scmp.ne.s32.totalorder %s112, %s128
      %p130 = scmp.eq.s32.totalorder %s40, 0
      %p131 = por %p129, %p130
      %s133 = sadd.s32 %s132, 1
      %p136 = scmp.eq.s32.totalorder %s34, 1
      %p137 = scmp.ne.s32.totalorder %s132, %s134
      %p138 = scmp.eq.s32.totalorder %s34, 0
      %p139 = por %p137, %p138
      %p140 = scmp.ne.s32.totalorder %s132, %s134
      %p141 = scmp.eq.s32.totalorder %s39, 1
      %p142 = por %p140, %p141
      %p143 = scmp.ne.s32.totalorder %s134, %s135
      %p144 = scmp.eq.s32.totalorder %s39, 0
      %p145 = por %p143, %p144
      %p146 = scmp.ne.s32.totalorder %s134, %s135
      %p147 = scmp.eq.s32.totalorder %s40, 1
      %p148 = por %p146, %p147
      %p150 = scmp.ne.s32.totalorder %s135, %s149
      %p151 = scmp.eq.s32.totalorder %s40, 0
      %p152 = por %p150, %p151
      %s154 = sadd.s32 %s153, 1
      %p157 = scmp.eq.s32.totalorder %s34, 1
      %p158 = scmp.ne.s32.totalorder %s153, %s155
      %p159 = scmp.eq.s32.totalorder %s34, 0
      %p160 = por %p158, %p159
      %p161 = scmp.ne.s32.totalorder %s153, %s155
      %p162 = scmp.eq.s32.totalorder %s39, 1
      %p163 = por %p161, %p162
      %p164 = scmp.ne.s32.totalorder %s155, %s156
      %p165 = scmp.eq.s32.totalorder %s39, 0
      %p166 = por %p164, %p165
      %p167 = scmp.ne.s32.totalorder %s155, %s156
      %p168 = scmp.eq.s32.totalorder %s40, 1
      %p169 = por %p167, %p168
      %p171 = scmp.ne.s32.totalorder %s156, %s170
      %p172 = scmp.eq.s32.totalorder %s40, 0
      %p173 = por %p171, %p172
      %s175 = sadd.s32 %s174, 1
      %p178 = scmp.eq.s32.totalorder %s34, 1
      %p179 = scmp.ne.s32.totalorder %s174, %s176
      %p180 = scmp.eq.s32.totalorder %s34, 0
      %p181 = por %p179, %p180
      %p182 = scmp.ne.s32.totalorder %s174, %s176
      %p183 = scmp.eq.s32.totalorder %s39, 1
      %p184 = por %p182, %p183
      %p185 = scmp.ne.s32.totalorder %s176, %s177
      %p186 = scmp.eq.s32.totalorder %s39, 0
      %p187 = por %p185, %p186
      %p188 = scmp.ne.s32.totalorder %s176, %s177
      %p189 = scmp.eq.s32.totalorder %s40, 1
      %p190 = por %p188, %p189
      %p192 = scmp.ne.s32.totalorder %s177, %s191
      %p193 = scmp.eq.s32.totalorder %s40, 0
      %p194 = por %p192, %p193
      %s196 = sadd.s32 %s195, 1
      %p199 = scmp.eq.s32.totalorder %s34, 1
      %p200 = scmp.ne.s32.totalorder %s195, %s197
      %p201 = scmp.eq.s32.totalorder %s34, 0
      %p202 = por %p200, %p201
      %p203 = scmp.ne.s32.totalorder %s195, %s197
      %p204 = scmp.eq.s32.totalorder %s39, 1
      %p205 = por %p203, %p204
      %p206 = scmp.ne.s32.totalorder %s197, %s198
      %p207 = scmp.eq.s32.totalorder %s39, 0
      %p208 = por %p206, %p207
      %p209 = scmp.ne.s32.totalorder %s197, %s198
      %p210 = scmp.eq.s32.totalorder %s40, 1
      %p211 = por %p209, %p210
      %p213 = scmp.ne.s32.totalorder %s198, %s212
      %p214 = scmp.eq.s32.totalorder %s40, 0
      %p215 = por %p213, %p214
      %s217 = sadd.s32 %s216, 1
      %p220 = scmp.eq.s32.totalorder %s34, 1
      %p221 = scmp.ne.s32.totalorder %s216, %s218
      %p222 = scmp.eq.s32.totalorder %s34, 0
      %p223 = por %p221, %p222
      %p224 = scmp.ne.s32.totalorder %s216, %s218
      %p225 = scmp.eq.s32.totalorder %s39, 1
      %p226 = por %p224, %p225
      %p227 = scmp.ne.s32.totalorder %s218, %s219
      %p228 = scmp.eq.s32.totalorder %s39, 0
      %p229 = por %p227, %p228
      %p230 = scmp.ne.s32.totalorder %s218, %s219
      %p231 = scmp.eq.s32.totalorder %s40, 1
      %p232 = por %p230, %p231
      %p234 = scmp.ne.s32.totalorder %s219, %s233
      %p235 = scmp.eq.s32.totalorder %s40, 0
      %p236 = por %p234, %p235
      %s238 = sadd.s32 %s237, 1
      %p241 = scmp.eq.s32.totalorder %s34, 1
      %p242 = scmp.ne.s32.totalorder %s237, %s239
      %p243 = scmp.eq.s32.totalorder %s34, 0
      %p244 = por %p242, %p243
      %p245 = scmp.ne.s32.totalorder %s237, %s239
      %p246 = scmp.eq.s32.totalorder %s39, 1
      %p247 = por %p245, %p246
      %p248 = scmp.ne.s32.totalorder %s239, %s240
      %p249 = scmp.eq.s32.totalorder %s39, 0
      %p250 = por %p248, %p249
      %p251 = scmp.ne.s32.totalorder %s239, %s240
      %p252 = scmp.eq.s32.totalorder %s40, 1
      %p253 = por %p251, %p252
      %p255 = scmp.ne.s32.totalorder %s240, %s254
      %p256 = scmp.eq.s32.totalorder %s40, 0
      %p257 = por %p255, %p256
      %s259 = sadd.s32 %s258, 1
      %p262 = scmp.eq.s32.totalorder %s34, 1
      %p263 = scmp.ne.s32.totalorder %s258, %s260
      %p264 = scmp.eq.s32.totalorder %s34, 0
      %p265 = por %p263, %p264
      %p266 = scmp.ne.s32.totalorder %s258, %s260
      %p267 = scmp.eq.s32.totalorder %s39, 1
      %p268 = por %p266, %p267
      %p269 = scmp.ne.s32.totalorder %s260, %s261
      %p270 = scmp.eq.s32.totalorder %s39, 0
      %p271 = por %p269, %p270
      %p272 = scmp.ne.s32.totalorder %s260, %s261
      %p273 = scmp.eq.s32.totalorder %s40, 1
      %p274 = por %p272, %p273
      %p276 = scmp.ne.s32.totalorder %s261, %s275
      %p277 = scmp.eq.s32.totalorder %s40, 0
      %p278 = por %p276, %p277
      %s280 = sadd.s32 %s279, 1
      %p283 = scmp.eq.s32.totalorder %s34, 1
      %p284 = scmp.ne.s32.totalorder %s279, %s281
      %p285 = scmp.eq.s32.totalorder %s34, 0
      %p286 = por %p284, %p285
      %p287 = scmp.ne.s32.totalorder %s279, %s281
      %p288 = scmp.eq.s32.totalorder %s39, 1
      %p289 = por %p287, %p288
      %p290 = scmp.ne.s32.totalorder %s281, %s282
      %p291 = scmp.eq.s32.totalorder %s39, 0
      %p292 = por %p290, %p291
      %p293 = scmp.ne.s32.totalorder %s281, %s282
      %p294 = scmp.eq.s32.totalorder %s40, 1
      %p295 = por %p293, %p294
      %p297 = scmp.ne.s32.totalorder %s282, %s296
      %p298 = scmp.eq.s32.totalorder %s40, 0
      %p299 = por %p297, %p298
      %s301 = sadd.s32 %s300, 1
      %p304 = scmp.eq.s32.totalorder %s34, 1
      %p305 = scmp.ne.s32.totalorder %s300, %s302
      %p306 = scmp.eq.s32.totalorder %s34, 0
      %p307 = por %p305, %p306
      %p308 = scmp.ne.s32.totalorder %s300, %s302
      %p309 = scmp.eq.s32.totalorder %s39, 1
      %p310 = por %p308, %p309
      %p311 = scmp.ne.s32.totalorder %s302, %s303
      %p312 = scmp.eq.s32.totalorder %s39, 0
      %p313 = por %p311, %p312
      %p314 = scmp.ne.s32.totalorder %s302, %s303
      %p315 = scmp.eq.s32.totalorder %s40, 1
      %p316 = por %p314, %p315
      %p318 = scmp.ne.s32.totalorder %s303, %s317
      %p319 = scmp.eq.s32.totalorder %s40, 0
      %p320 = por %p318, %p319
      %s322 = sadd.s32 %s321, 1
      %p325 = scmp.eq.s32.totalorder %s34, 1
      %p326 = scmp.ne.s32.totalorder %s321, %s323
      %p327 = scmp.eq.s32.totalorder %s34, 0
      %p328 = por %p326, %p327
      %p329 = scmp.ne.s32.totalorder %s321, %s323
      %p330 = scmp.eq.s32.totalorder %s39, 1
      %p331 = por %p329, %p330
      %p332 = scmp.ne.s32.totalorder %s323, %s324
      %p333 = scmp.eq.s32.totalorder %s39, 0
      %p334 = por %p332, %p333
      %p335 = scmp.ne.s32.totalorder %s323, %s324
      %p336 = scmp.eq.s32.totalorder %s40, 1
      %p337 = por %p335, %p336
      %p339 = scmp.ne.s32.totalorder %s324, %s338
      %p340 = scmp.eq.s32.totalorder %s40, 0
      %p341 = por %p339, %p340
      %s343 = sadd.s32 %s342, 1
      %p346 = scmp.eq.s32.totalorder %s34, 1
      %p347 = scmp.ne.s32.totalorder %s342, %s344
      %p348 = scmp.eq.s32.totalorder %s34, 0
      %p349 = por %p347, %p348
      %p350 = scmp.ne.s32.totalorder %s342, %s344
      %p351 = scmp.eq.s32.totalorder %s39, 1
      %p352 = por %p350, %p351
      %p353 = scmp.ne.s32.totalorder %s344, %s345
      %p354 = scmp.eq.s32.totalorder %s39, 0
      %p355 = por %p353, %p354
      %p356 = scmp.ne.s32.totalorder %s344, %s345
      %p357 = scmp.eq.s32.totalorder %s40, 1
      %p358 = por %p356, %p357
      %p360 = scmp.ne.s32.totalorder %s345, %s359
      %p361 = scmp.eq.s32.totalorder %s40, 0
      %p362 = por %p360, %p361
      %s364 = sadd.s32 %s363, 1
      %p367 = scmp.eq.s32.totalorder %s34, 1
      %p368 = scmp.ne.s32.totalorder %s363, %s365
      %p369 = scmp.eq.s32.totalorder %s34, 0
      %p370 = por %p368, %p369
      %p371 = scmp.ne.s32.totalorder %s363, %s365
      %p372 = scmp.eq.s32.totalorder %s39, 1
      %p373 = por %p371, %p372
      %p374 = scmp.ne.s32.totalorder %s365, %s366
      %p375 = scmp.eq.s32.totalorder %s39, 0
      %p376 = por %p374, %p375
      %p377 = scmp.ne.s32.totalorder %s365, %s366
      %p378 = scmp.eq.s32.totalorder %s40, 1
      %p379 = por %p377, %p378
      %p381 = scmp.ne.s32.totalorder %s366, %s380
      %p382 = scmp.eq.s32.totalorder %s40, 0
      %p383 = por %p381, %p382
      %s385 = sadd.s32 %s384, 1
      %p388 = scmp.eq.s32.totalorder %s34, 1
      %p389 = scmp.ne.s32.totalorder %s384, %s386
      %p390 = scmp.eq.s32.totalorder %s34, 0
      %p391 = por %p389, %p390
      %p392 = scmp.ne.s32.totalorder %s384, %s386
      %p393 = scmp.eq.s32.totalorder %s39, 1
      %p394 = por %p392, %p393
      %p395 = scmp.ne.s32.totalorder %s386, %s387
      %p396 = scmp.eq.s32.totalorder %s39, 0
      %p397 = por %p395, %p396
      %p398 = scmp.ne.s32.totalorder %s386, %s387
      %p399 = scmp.eq.s32.totalorder %s40, 1
      %p400 = por %p398, %p399
      %p402 = scmp.ne.s32.totalorder %s387, %s401
      %p403 = scmp.eq.s32.totalorder %s40, 0
      %p404 = por %p402, %p403
      %s406 = sadd.s32 %s405, 1
      %p409 = scmp.eq.s32.totalorder %s34, 1
      %p410 = scmp.ne.s32.totalorder %s405, %s407
      %p411 = scmp.eq.s32.totalorder %s34, 0
      %p412 = por %p410, %p411
      %p413 = scmp.ne.s32.totalorder %s405, %s407
      %p414 = scmp.eq.s32.totalorder %s39, 1
      %p415 = por %p413, %p414
      %p416 = scmp.ne.s32.totalorder %s407, %s408
      %p417 = scmp.eq.s32.totalorder %s39, 0
      %p418 = por %p416, %p417
      %p419 = scmp.ne.s32.totalorder %s407, %s408
      %p420 = scmp.eq.s32.totalorder %s40, 1
      %p421 = por %p419, %p420
      %p423 = scmp.ne.s32.totalorder %s408, %s422
      %p424 = scmp.eq.s32.totalorder %s40, 0
      %p425 = por %p423, %p424
      %s427 = sadd.s32 %s426, 1
      %p430 = scmp.eq.s32.totalorder %s34, 1
      %p431 = scmp.ne.s32.totalorder %s426, %s428
      %p432 = scmp.eq.s32.totalorder %s34, 0
      %p433 = por %p431, %p432
      %p434 = scmp.ne.s32.totalorder %s426, %s428
      %p435 = scmp.eq.s32.totalorder %s39, 1
      %p436 = por %p434, %p435
      %p437 = scmp.ne.s32.totalorder %s428, %s429
      %p438 = scmp.eq.s32.totalorder %s39, 0
      %p439 = por %p437, %p438
      %p440 = scmp.ne.s32.totalorder %s428, %s429
      %p441 = scmp.eq.s32.totalorder %s40, 1
      %p442 = por %p440, %p441
      %p444 = scmp.ne.s32.totalorder %s429, %s443
      %p445 = scmp.eq.s32.totalorder %s40, 0
      %p446 = por %p444, %p445
      %s448 = sadd.s32 %s447, 1
      %p451 = scmp.eq.s32.totalorder %s34, 1
      %p452 = scmp.ne.s32.totalorder %s447, %s449
      %p453 = scmp.eq.s32.totalorder %s34, 0
      %p454 = por %p452, %p453
      %p455 = scmp.ne.s32.totalorder %s447, %s449
      %p456 = scmp.eq.s32.totalorder %s39, 1
      %p457 = por %p455, %p456
      %p458 = scmp.ne.s32.totalorder %s449, %s450
      %p459 = scmp.eq.s32.totalorder %s39, 0
      %p460 = por %p458, %p459
      %p461 = scmp.ne.s32.totalorder %s449, %s450
      %p462 = scmp.eq.s32.totalorder %s40, 1
      %p463 = por %p461, %p462
      %p465 = scmp.ne.s32.totalorder %s450, %s464
      %p466 = scmp.eq.s32.totalorder %s40, 0
      %p467 = por %p465, %p466
      %s469 = sadd.s32 %s468, 1
      %p472 = scmp.eq.s32.totalorder %s34, 1
      %p473 = scmp.ne.s32.totalorder %s468, %s470
      %p474 = scmp.eq.s32.totalorder %s34, 0
      %p475 = por %p473, %p474
      %p476 = scmp.ne.s32.totalorder %s468, %s470
      %p477 = scmp.eq.s32.totalorder %s39, 1
      %p478 = por %p476, %p477
      %p479 = scmp.ne.s32.totalorder %s470, %s471
      %p480 = scmp.eq.s32.totalorder %s39, 0
      %p481 = por %p479, %p480
      %p482 = scmp.ne.s32.totalorder %s470, %s471
      %p483 = scmp.eq.s32.totalorder %s40, 1
      %p484 = por %p482, %p483
      %p486 = scmp.ne.s32.totalorder %s471, %s485
      %p487 = scmp.eq.s32.totalorder %s40, 0
      %p488 = por %p486, %p487
      %s490 = sadd.s32 %s489, 1
      %p493 = scmp.eq.s32.totalorder %s34, 1
      %p494 = scmp.ne.s32.totalorder %s489, %s491
      %p495 = scmp.eq.s32.totalorder %s34, 0
      %p496 = por %p494, %p495
      %p497 = scmp.ne.s32.totalorder %s489, %s491
      %p498 = scmp.eq.s32.totalorder %s39, 1
      %p499 = por %p497, %p498
      %p500 = scmp.ne.s32.totalorder %s491, %s492
      %p501 = scmp.eq.s32.totalorder %s39, 0
      %p502 = por %p500, %p501
      %p503 = scmp.ne.s32.totalorder %s491, %s492
      %p504 = scmp.eq.s32.totalorder %s40, 1
      %p505 = por %p503, %p504
      %p507 = scmp.ne.s32.totalorder %s492, %s506
      %p508 = scmp.eq.s32.totalorder %s40, 0
      %p509 = por %p507, %p508
      %s511 = sadd.s32 %s510, 1
      %p514 = scmp.eq.s32.totalorder %s34, 1
      %p515 = scmp.ne.s32.totalorder %s510, %s512
      %p516 = scmp.eq.s32.totalorder %s34, 0
      %p517 = por %p515, %p516
      %p518 = scmp.ne.s32.totalorder %s510, %s512
      %p519 = scmp.eq.s32.totalorder %s39, 1
      %p520 = por %p518, %p519
      %p521 = scmp.ne.s32.totalorder %s512, %s513
      %p522 = scmp.eq.s32.totalorder %s39, 0
      %p523 = por %p521, %p522
      %p524 = scmp.ne.s32.totalorder %s512, %s513
      %p525 = scmp.eq.s32.totalorder %s40, 1
      %p526 = por %p524, %p525
      %p528 = scmp.ne.s32.totalorder %s513, %s527
      %p529 = scmp.eq.s32.totalorder %s40, 0
      %p530 = por %p528, %p529
      %s532 = sadd.s32 %s531, 1
      %p535 = scmp.eq.s32.totalorder %s34, 1
      %p536 = scmp.ne.s32.totalorder %s531, %s533
      %p537 = scmp.eq.s32.totalorder %s34, 0
      %p538 = por %p536, %p537
      %p539 = scmp.ne.s32.totalorder %s531, %s533
      %p540 = scmp.eq.s32.totalorder %s39, 1
      %p541 = por %p539, %p540
      %p542 = scmp.ne.s32.totalorder %s533, %s534
      %p543 = scmp.eq.s32.totalorder %s39, 0
      %p544 = por %p542, %p543
      %p545 = scmp.ne.s32.totalorder %s533, %s534
      %p546 = scmp.eq.s32.totalorder %s40, 1
      %p547 = por %p545, %p546
      %p549 = scmp.ne.s32.totalorder %s534, %s548
      %p550 = scmp.eq.s32.totalorder %s40, 0
      %p551 = por %p549, %p550
      %s553 = sadd.s32 %s552, 1
      %p556 = scmp.eq.s32.totalorder %s34, 1
      %p557 = scmp.ne.s32.totalorder %s552, %s554
      %p558 = scmp.eq.s32.totalorder %s34, 0
      %p559 = por %p557, %p558
      %p560 = scmp.ne.s32.totalorder %s552, %s554
      %p561 = scmp.eq.s32.totalorder %s39, 1
      %p562 = por %p560, %p561
      %p563 = scmp.ne.s32.totalorder %s554, %s555
      %p564 = scmp.eq.s32.totalorder %s39, 0
      %p565 = por %p563, %p564
      %p566 = scmp.ne.s32.totalorder %s554, %s555
      %p567 = scmp.eq.s32.totalorder %s40, 1
      %p568 = por %p566, %p567
      %p570 = scmp.ne.s32.totalorder %s555, %s569
      %p571 = scmp.eq.s32.totalorder %s40, 0
      %p572 = por %p570, %p571
      %s574 = sadd.s32 %s573, 1
      %p577 = scmp.eq.s32.totalorder %s34, 1
      %p578 = scmp.ne.s32.totalorder %s573, %s575
      %p579 = scmp.eq.s32.totalorder %s34, 0
      %p580 = por %p578, %p579
      %p581 = scmp.ne.s32.totalorder %s573, %s575
      %p582 = scmp.eq.s32.totalorder %s39, 1
      %p583 = por %p581, %p582
      %p584 = scmp.ne.s32.totalorder %s575, %s576
      %p585 = scmp.eq.s32.totalorder %s39, 0
      %p586 = por %p584, %p585
      %p587 = scmp.ne.s32.totalorder %s575, %s576
      %p588 = scmp.eq.s32.totalorder %s40, 1
      %p589 = por %p587, %p588
      %p591 = scmp.ne.s32.totalorder %s576, %s590
      %p592 = scmp.eq.s32.totalorder %s40, 0
      %p593 = por %p591, %p592
      %s594 = ssub.s32 %s41, %s53
      %s595 = ssub.s32 %s42, %s49
      %s596 = sor.u32 %s594, %s595
      %p597 = scmp.eq.s32.totalorder %s596, 0
      %s599 = sadd.s32 %s598, 1
      %s600 = scalar_select %p597, %s598, %s599
      %p603 = pneg %p597
      %p604 = scmp.eq.s32.totalorder %s34, 1
      %p605 = por %p603, %p604
      %p606 = scmp.ne.s32.totalorder %s598, %s601
      %p607 = scmp.eq.s32.totalorder %s34, 0
      %p608 = por %p606, %p607
      %p609 = scmp.ne.s32.totalorder %s598, %s601
      %p610 = scmp.eq.s32.totalorder %s39, 1
      %p611 = por %p609, %p610
      %p612 = scmp.ne.s32.totalorder %s601, %s602
      %p613 = scmp.eq.s32.totalorder %s39, 0
      %p614 = por %p612, %p613
      %p615 = scmp.ne.s32.totalorder %s601, %s602
      %p616 = scmp.eq.s32.totalorder %s40, 1
      %p617 = por %p615, %p616
      %p619 = scmp.ne.s32.totalorder %s602, %s618
      %p620 = scmp.eq.s32.totalorder %s40, 0
      %p621 = por %p619, %p620
      %p622 = scmp.le.s32.totalorder 1, %s34
      %p623 = scmp.lt.s32.totalorder %s34, 3
      %p624 = pnand %p622, %p623
      %p625 = pneg %p624
      // Predicated region
      $region9: #{key_emotions_forward.6} parent=5 // pred_check
        _
      $region10: #{key_emotions_forward.6} parent=5 // pred_check_branch
        %627 = sbr.rel (%p624) target = $region12
      $region11: #{key_emotions_forward.6} parent=5 // pred_region
        %s628 = ssub.s32 %s34, 1
        // Predicated region
        $region13: #{key_emotions_forward.6} parent=11 // pred_check
          %p629 = pneg %p145
        $region14: #{key_emotions_forward.6} parent=11 // pred_check_branch
          %631 = sbr.rel (%p629) target = $region16
        $region15: #{key_emotions_forward.6} parent=11 // pred_region
          _
        $region16: #{key_emotions_forward.6} parent=11 // pred_fallthru
          _
        // Predicated region
        $region17: #{key_emotions_forward.6} parent=11 // pred_check
          %p632 = pneg %p166
        $region18: #{key_emotions_forward.6} parent=11 // pred_check_branch
          %634 = sbr.rel (%p632) target = $region20
        $region19: #{key_emotions_forward.6} parent=11 // pred_region
          _
        $region20: #{key_emotions_forward.6} parent=11 // pred_fallthru
          _
        // Predicated region
        $region21: #{key_emotions_forward.6} parent=11 // pred_check
          %p635 = pneg %p187
        $region22: #{key_emotions_forward.6} parent=11 // pred_check_branch
          %637 = sbr.rel (%p635) target = $region24
        $region23: #{key_emotions_forward.6} parent=11 // pred_region
          _
        $region24: #{key_emotions_forward.6} parent=11 // pred_fallthru
          _
        // Predicated region
        $region25: #{key_emotions_forward.6} parent=11 // pred_check
          %p638 = pneg %p208
        $region26: #{key_emotions_forward.6} parent=11 // pred_check_branch
          %640 = sbr.rel (%p638) target = $region28
        $region27: #{key_emotions_forward.6} parent=11 // pred_region
          _
        $region28: #{key_emotions_forward.6} parent=11 // pred_fallthru
          _
        // Predicated region
        $region29: #{key_emotions_forward.6} parent=11 // pred_check
          %p641 = pneg %p229
        $region30: #{key_emotions_forward.6} parent=11 // pred_check_branch
          %643 = sbr.rel (%p641) target = $region32
        $region31: #{key_emotions_forward.6} parent=11 // pred_region
          _
        $region32: #{key_emotions_forward.6} parent=11 // pred_fallthru
          _
        // Predicated region
        $region33: #{key_emotions_forward.6} parent=11 // pred_check
          %p644 = pneg %p250
        $region34: #{key_emotions_forward.6} parent=11 // pred_check_branch
          %646 = sbr.rel (%p644) target = $region36
        $region35: #{key_emotions_forward.6} parent=11 // pred_region
          _
        $region36: #{key_emotions_forward.6} parent=11 // pred_fallthru
          _
        // Predicated region
        $region37: #{key_emotions_forward.6} parent=11 // pred_check
          %p647 = pneg %p271
        $region38: #{key_emotions_forward.6} parent=11 // pred_check_branch
          %649 = sbr.rel (%p647) target = $region40
        $region39: #{key_emotions_forward.6} parent=11 // pred_region
          _
        $region40: #{key_emotions_forward.6} parent=11 // pred_fallthru
          _
        // Predicated region
        $region41: #{key_emotions_forward.6} parent=11 // pred_check
          %p650 = pneg %p292
        $region42: #{key_emotions_forward.6} parent=11 // pred_check_branch
          %652 = sbr.rel (%p650) target = $region44
        $region43: #{key_emotions_forward.6} parent=11 // pred_region
          _
        $region44: #{key_emotions_forward.6} parent=11 // pred_fallthru
          _
        // Predicated region
        $region45: #{key_emotions_forward.6} parent=11 // pred_check
          %p653 = pneg %p313
        $region46: #{key_emotions_forward.6} parent=11 // pred_check_branch
          %655 = sbr.rel (%p653) target = $region48
        $region47: #{key_emotions_forward.6} parent=11 // pred_region
          _
        $region48: #{key_emotions_forward.6} parent=11 // pred_fallthru
          _
        // Predicated region
        $region49: #{key_emotions_forward.6} parent=11 // pred_check
          %p656 = pneg %p334
        $region50: #{key_emotions_forward.6} parent=11 // pred_check_branch
          %658 = sbr.rel (%p656) target = $region52
        $region51: #{key_emotions_forward.6} parent=11 // pred_region
          _
        $region52: #{key_emotions_forward.6} parent=11 // pred_fallthru
          _
        // Predicated region
        $region53: #{key_emotions_forward.6} parent=11 // pred_check
          %p659 = pneg %p355
        $region54: #{key_emotions_forward.6} parent=11 // pred_check_branch
          %661 = sbr.rel (%p659) target = $region56
        $region55: #{key_emotions_forward.6} parent=11 // pred_region
          _
        $region56: #{key_emotions_forward.6} parent=11 // pred_fallthru
          _
        // Predicated region
        $region57: #{key_emotions_forward.6} parent=11 // pred_check
          %p662 = pneg %p376
        $region58: #{key_emotions_forward.6} parent=11 // pred_check_branch
          %664 = sbr.rel (%p662) target = $region60
        $region59: #{key_emotions_forward.6} parent=11 // pred_region
          _
        $region60: #{key_emotions_forward.6} parent=11 // pred_fallthru
          _
        // Predicated region
        $region61: #{key_emotions_forward.6} parent=11 // pred_check
          %p665 = pneg %p397
        $region62: #{key_emotions_forward.6} parent=11 // pred_check_branch
          %667 = sbr.rel (%p665) target = $region64
        $region63: #{key_emotions_forward.6} parent=11 // pred_region
          _
        $region64: #{key_emotions_forward.6} parent=11 // pred_fallthru
          _
        // Predicated region
        $region65: #{key_emotions_forward.6} parent=11 // pred_check
          %p668 = pneg %p418
        $region66: #{key_emotions_forward.6} parent=11 // pred_check_branch
          %670 = sbr.rel (%p668) target = $region68
        $region67: #{key_emotions_forward.6} parent=11 // pred_region
          _
        $region68: #{key_emotions_forward.6} parent=11 // pred_fallthru
          _
        // Predicated region
        $region69: #{key_emotions_forward.6} parent=11 // pred_check
          %p671 = pneg %p439
        $region70: #{key_emotions_forward.6} parent=11 // pred_check_branch
          %673 = sbr.rel (%p671) target = $region72
        $region71: #{key_emotions_forward.6} parent=11 // pred_region
          _
        $region72: #{key_emotions_forward.6} parent=11 // pred_fallthru
          _
        // Predicated region
        $region73: #{key_emotions_forward.6} parent=11 // pred_check
          %p674 = pneg %p460
        $region74: #{key_emotions_forward.6} parent=11 // pred_check_branch
          %676 = sbr.rel (%p674) target = $region76
        $region75: #{key_emotions_forward.6} parent=11 // pred_region
          _
        $region76: #{key_emotions_forward.6} parent=11 // pred_fallthru
          _
        // Predicated region
        $region77: #{key_emotions_forward.6} parent=11 // pred_check
          %p677 = pneg %p481
        $region78: #{key_emotions_forward.6} parent=11 // pred_check_branch
          %679 = sbr.rel (%p677) target = $region80
        $region79: #{key_emotions_forward.6} parent=11 // pred_region
          _
        $region80: #{key_emotions_forward.6} parent=11 // pred_fallthru
          _
        // Predicated region
        $region81: #{key_emotions_forward.6} parent=11 // pred_check
          %p680 = pneg %p502
        $region82: #{key_emotions_forward.6} parent=11 // pred_check_branch
          %682 = sbr.rel (%p680) target = $region84
        $region83: #{key_emotions_forward.6} parent=11 // pred_region
          %s684 = ssub.s32 16, 16
          %685 = vsyncadd [#allocation6], %s684
          %s687 = sshll.u32 [#allocation5], 4
          %s688 = int_to_ptr.vmem [resolvable:$true] %s687
          %690 = dma.hbm_to_vmem [thread:$0]  %s20, 16, %s688, [#allocation6]
        $region84: #{key_emotions_forward.6} parent=11 // pred_fallthru
          _
        // Predicated region
        $region85: #{key_emotions_forward.6} parent=11 // pred_check
          %p691 = pneg %p523
        $region86: #{key_emotions_forward.6} parent=11 // pred_check_branch
          %693 = sbr.rel (%p691) target = $region88
        $region87: #{key_emotions_forward.6} parent=11 // pred_region
          _
        $region88: #{key_emotions_forward.6} parent=11 // pred_fallthru
          _
        // Predicated region
        $region89: #{key_emotions_forward.6} parent=11 // pred_check
          %p694 = pneg %p544
        $region90: #{key_emotions_forward.6} parent=11 // pred_check_branch
          %696 = sbr.rel (%p694) target = $region92
        $region91: #{key_emotions_forward.6} parent=11 // pred_region
          %s698 = ssub.s32 16, 16
          %699 = vsyncadd [#allocation8], %s698
          %s701 = sshll.u32 [#allocation7], 4
          %s702 = int_to_ptr.vmem [resolvable:$true] %s701
          %704 = dma.hbm_to_vmem [thread:$0]  %s22, 16, %s702, [#allocation8]
        $region92: #{key_emotions_forward.6} parent=11 // pred_fallthru
          _
        // Predicated region
        $region93: #{key_emotions_forward.6} parent=11 // pred_check
          %p705 = pneg %p565
        $region94: #{key_emotions_forward.6} parent=11 // pred_check_branch
          %707 = sbr.rel (%p705) target = $region96
        $region95: #{key_emotions_forward.6} parent=11 // pred_region
          %s709 = ssub.s32 16, 16
          %710 = vsyncadd [#allocation8], %s709
          %s712 = sshll.u32 [#allocation9], 4
          %s713 = int_to_ptr.vmem [resolvable:$true] %s712
          %715 = dma.hbm_to_vmem [thread:$0]  %s23, 16, %s713, [#allocation8]
        $region96: #{key_emotions_forward.6} parent=11 // pred_fallthru
          _
        // Predicated region
        $region97: #{key_emotions_forward.6} parent=11 // pred_check
          %p716 = pneg %p586
        $region98: #{key_emotions_forward.6} parent=11 // pred_check_branch
          %718 = sbr.rel (%p716) target = $region100
        $region99: #{key_emotions_forward.6} parent=11 // pred_region
          %s720 = ssub.s32 16, 16
          %721 = vsyncadd [#allocation11], %s720
          %s723 = sshll.u32 [#allocation10], 4
          %s724 = int_to_ptr.vmem [resolvable:$true] %s723
          %726 = dma.hbm_to_vmem [thread:$0]  %s24, 16, %s724, [#allocation11]
        $region100: #{key_emotions_forward.6} parent=11 // pred_fallthru
          _
      $region12: #{key_emotions_forward.6} parent=5 // pred_fallthru
        _
      %p727 = scmp.lt.s32.totalorder %s34, 2
      // Predicated region
      $region101: #{key_emotions_forward.6} parent=5 // pred_check
        %p728 = pneg %p727
      $region102: #{key_emotions_forward.6} parent=5 // pred_check_branch
        %730 = sbr.rel (%p728) target = $region104
      $region103: #{key_emotions_forward.6} parent=5 // pred_region
        // Predicated region
        $region105: #{key_emotions_forward.6} parent=103 // pred_check
          %p731 = pneg %p66
        $region106: #{key_emotions_forward.6} parent=103 // pred_check_branch
          %733 = sbr.rel (%p731) target = $region108
        $region107: #{key_emotions_forward.6} parent=103 // pred_region
          %p734 = scmp.lt.s32.totalorder %s41, 1
          %s735 = scalar_select %p734, %s41, 1
          %s736 = smul.addr %s735, 8
          %s737 = scalar_lea.vmem %s0, %s736
        $region108: #{key_emotions_forward.6} parent=103 // pred_fallthru
          _
        // Predicated region
        $region109: #{key_emotions_forward.6} parent=103 // pred_check
          %p738 = pneg %p92
        $region110: #{key_emotions_forward.6} parent=103 // pred_check_branch
          %740 = sbr.rel (%p738) target = $region112
        $region111: #{key_emotions_forward.6} parent=103 // pred_region
          %p741 = scmp.lt.s32.totalorder %s41, 1
          %s742 = scalar_select %p741, %s41, 1
          %s743 = smul.addr %s742, 8
          %s744 = scalar_lea.vmem %s1, %s743
        $region112: #{key_emotions_forward.6} parent=103 // pred_fallthru
          _
        // Predicated region
        $region113: #{key_emotions_forward.6} parent=103 // pred_check
          %p745 = pneg %p118
        $region114: #{key_emotions_forward.6} parent=103 // pred_check_branch
          %747 = sbr.rel (%p745) target = $region116
        $region115: #{key_emotions_forward.6} parent=103 // pred_region
          %p748 = scmp.lt.s32.totalorder %s41, 1
          %s749 = scalar_select %p748, %s41, 1
          %s750 = scalar_lea.vmem %s2, %s749
        $region116: #{key_emotions_forward.6} parent=103 // pred_fallthru
          _
      $region104: #{key_emotions_forward.6} parent=5 // pred_fallthru
        _
      %p751 = scmp.le.s32.totalorder 1, %s34
      %p752 = scmp.lt.s32.totalorder %s34, 3
      %p753 = pnand %p751, %p752
      %p754 = pneg %p753
      // Predicated region
      $region117: #{key_emotions_forward.6} parent=5 // pred_check
        _
      $region118: #{key_emotions_forward.6} parent=5 // pred_check_branch
        %756 = sbr.rel (%p753) target = $region120
      $region119: #{key_emotions_forward.6} parent=5 // pred_region
        %s757 = ssub.s32 %s34, 1
        // Predicated region
        $region121: #{key_emotions_forward.6} parent=119 // pred_check
          %p758 = pneg %p502
        $region122: #{key_emotions_forward.6} parent=119 // pred_check_branch
          %760 = sbr.rel (%p758) target = $region124
        $region123: #{key_emotions_forward.6} parent=119 // pred_region
          %761 = dma.done [#allocation6], 16
        $region124: #{key_emotions_forward.6} parent=119 // pred_fallthru
          _
        // Predicated region
        $region125: #{key_emotions_forward.6} parent=119 // pred_check
          %p762 = pneg %p544
        $region126: #{key_emotions_forward.6} parent=119 // pred_check_branch
          %764 = sbr.rel (%p762) target = $region128
        $region127: #{key_emotions_forward.6} parent=119 // pred_region
          %765 = dma.done [#allocation8], 16
        $region128: #{key_emotions_forward.6} parent=119 // pred_fallthru
          _
        // Predicated region
        $region129: #{key_emotions_forward.6} parent=119 // pred_check
          %p766 = pneg %p565
        $region130: #{key_emotions_forward.6} parent=119 // pred_check_branch
          %768 = sbr.rel (%p766) target = $region132
        $region131: #{key_emotions_forward.6} parent=119 // pred_region
          %769 = dma.done [#allocation8], 16
        $region132: #{key_emotions_forward.6} parent=119 // pred_fallthru
          _
        // Predicated region
        $region133: #{key_emotions_forward.6} parent=119 // pred_check
          %p770 = pneg %p586
        $region134: #{key_emotions_forward.6} parent=119 // pred_check_branch
          %772 = sbr.rel (%p770) target = $region136
        $region135: #{key_emotions_forward.6} parent=119 // pred_region
          %773 = dma.done [#allocation11], 16
        $region136: #{key_emotions_forward.6} parent=119 // pred_fallthru
          _
        %p774 = scmp.lt.s32.totalorder %s43, 1
        %s775 = scalar_select %p774, %s43, 1
        %s776 = smul.addr %s775, 8
        %s777 = scalar_lea.vmem %s0, %s776
        %p778 = pneg %p72
        %p779 = pneg %p69
        %p780 = scmp.lt.s32.totalorder %s43, 1
        %s781 = scalar_select %p780, %s43, 1
        %s782 = smul.addr %s781, 8
        %s783 = scalar_lea.vmem %s1, %s782
        %p784 = pneg %p98
        %p785 = pneg %p95
        %p786 = scmp.lt.s32.totalorder %s43, 1
        %s787 = scalar_select %p786, %s43, 1
        %s788 = scalar_lea.vmem %s2, %s787
        %p789 = pneg %p124
        %p790 = pneg %p121
        %p791 = pneg %p145
        %p792 = pneg %p142
        %p793 = pneg %p166
        %p794 = pneg %p163
        %p795 = pneg %p187
        %p796 = pneg %p184
        %p797 = pneg %p208
        %p798 = pneg %p205
        %p799 = pneg %p229
        %p800 = pneg %p226
        %p801 = pneg %p250
        %p802 = pneg %p247
        %p803 = pneg %p271
        %p804 = pneg %p268
        %p805 = pneg %p292
        %p806 = pneg %p289
        %p807 = pneg %p313
        %p808 = pneg %p310
        %p809 = pneg %p334
        %p810 = pneg %p331
        %p811 = pneg %p355
        %p812 = pneg %p352
        %p813 = pneg %p376
        %p814 = pneg %p373
        %p815 = pneg %p397
        %p816 = pneg %p394
        %p817 = pneg %p418
        %p818 = pneg %p415
        %p819 = pneg %p439
        %p820 = pneg %p436
        %p821 = pneg %p460
        %p822 = pneg %p457
        %p823 = pneg %p481
        %p824 = pneg %p478
        %p825 = pneg %p502
        %p826 = pneg %p499
        %p827 = pneg %p523
        %p828 = pneg %p520
        %p829 = pneg %p544
        %p830 = pneg %p541
        %p831 = pneg %p565
        %p832 = pneg %p562
        %p833 = pneg %p586
        %p834 = pneg %p583
        %p835 = pneg %p614
        %p836 = pneg %p611
        %p837 = scmp.lt.s32.totalorder %s43, 1
        %s838 = scalar_select %p837, %s43, 1
        %p839 = scmp.lt.s32.totalorder %s44, 0
        %s840 = scalar_select %p839, %s44, 0
        %s841 = sadd.s32 %s840, %s838
        %s842 = smul.addr %s841, 8
        %s843 = scalar_lea.vmem %s25, %s842
        %p844 = scmp.lt.s32.totalorder %s43, 1
        %s845 = scalar_select %p844, %s43, 1
        %s846 = smul.addr %s845, 8
        %s847 = scalar_lea.vmem %s0, %s846
        %p848 = scmp.lt.s32.totalorder %s43, 1
        %s849 = scalar_select %p848, %s43, 1
        %s850 = smul.addr %s849, 8
        %s851 = scalar_lea.vmem %s1, %s850
        %p852 = scmp.lt.s32.totalorder %s43, 1
        %s853 = scalar_select %p852, %s43, 1
        %s854 = scalar_lea.vmem %s2, %s853
        %p855 = scmp.lt.s32.totalorder %s43, 1
        %s856 = scalar_select %p855, %s43, 1
        %p857 = scmp.lt.s32.totalorder %s44, 0
        %s858 = scalar_select %p857, %s44, 0
        %s859 = sadd.s32 %s858, %s856
        %s860 = smul.addr %s859, 8
        %s861 = scalar_lea.vmem %s25, %s860
        %p863 = scmp.eq.s32.totalorder %s44, 0
        // Predicated region
        $region137: #{key_emotions_forward.6} parent=119 // pred_check
          %p864 = pneg %p863
        $region138: #{key_emotions_forward.6} parent=119 // pred_check_branch
          %866 = sbr.rel (%p864) target = $region140
        $region139: #{key_emotions_forward.6} parent=119 // pred_region
          %v867 = vld [vmem:[%s847] sm:$0xff]
          %v868 = vld [vmem:[%s5] sm:$0xf]
          %v869 = vld [vmem:[%s5 + $0x4] sm:$0xf]
          %v870 = vld [vmem:[%s5 + $0x8] sm:$0xf]
          %v871 = vld [vmem:[%s5 + $0xc] sm:$0xf]
          %v872 = vpack.c.bf16 %v867, %v867
          %v873 = vld [vmem:[%s6] sm:$0x1]
          %v875 = vlaneseq
          %v876 = vshrl.u32 %v875, 7
          %v877 = vsub.s32 0, %v876
          %v878 = vrot.slane %v873, %v877
          %v884 = vunpack.c.l.b16 %v868
          %v885 = vunpack.c.l.b16 %v869
          %v886 = vunpack.c.l.b16 %v870
          %v887 = vunpack.c.l.b16 %v871
          %v888 = vpack.c.b16 %v885, %v884
          %v889 = vpack.c.b16 %v887, %v886
          %vm892 = vcmask 261120
          %v894 = vsel %vm892, %v872, 0
          %896 = vmatprep.subr.bf16.mxu0 0
          %897 = vmatpush1.bf16.msra.mxu0 %v888
          %898 = vmatprep.subr.bf16.mxu0 0
          %899 = vmatpush1.bf16.msra.mxu0 %v889
          %900 = vmatprep.subr.bf16.mxu0 0
          %901 = vmatpush1.bf16.msra.mxu0 0
          %902 = vmatprep.subr.bf16.mxu0 0
          %903 = vmatpush1.bf16.msra.mxu0 0
          %904 = vmatprep.subr.bf16.mxu0 0
          %905 = vmatpush1.bf16.msra.mxu0 0
          %906 = vmatprep.subr.bf16.mxu0 0
          %907 = vmatpush1.bf16.msra.mxu0 0
          %908 = vmatprep.subr.bf16.mxu0 0
          %909 = vmatpush1.bf16.msra.mxu0 0
          %910 = vmatprep.subr.bf16.mxu0 0
          %911 = vmatpush1.bf16.msra.mxu0 0
          %912 = vmatprep.subr.bf16.mxu0 0
          %913 = vmatpush1.bf16.msra.mxu0 0
          %914 = vmatprep.subr.bf16.mxu0 0
          %915 = vmatpush1.bf16.msra.mxu0 0
          %916 = vmatprep.subr.bf16.mxu0 0
          %917 = vmatpush1.bf16.msra.mxu0 0
          %918 = vmatprep.subr.bf16.mxu0 0
          %919 = vmatpush1.bf16.msra.mxu0 0
          %920 = vmatprep.subr.bf16.mxu0 0
          %921 = vmatpush1.bf16.msra.mxu0 0
          %922 = vmatprep.subr.bf16.mxu0 0
          %923 = vmatpush1.bf16.msra.mxu0 0
          %924 = vmatprep.subr.bf16.mxu0 0
          %925 = vmatpush1.bf16.msra.mxu0 0
          %926 = vmatprep.subr.bf16.mxu0 0
          %927 = vmatpush1.bf16.msra.mxu0 0
          %928 = vmatprep.mubr.bf16.mxu0 0
          %929 = vmatmul.mubr.bf16.gmra.mrb[0].mxu0 %v894
          %v930 = vpop.f32.mrb[0].mxu0
          %v931 = vadd.f32 %v878, %v930
          %v932 = vpop.f32.mrb[0].mxu0
          %v933 = vpop.f32.mrb[0].mxu0
          %v934 = vpop.f32.mrb[0].mxu0
          %935 = vdwg.mxu0
          %v936 = vpack.c.bf16 %v931, %v931
          %vm937 = vcmask 519168
          %938 = vst.msk [vmem:[#allocation2] sm:$0xf] %vm937, %v936
          %v939 = vld [vmem:[%s851] sm:$0xff]
          %v940 = vld [vmem:[%s13] sm:$0xf]
          %v941 = vld [vmem:[%s13 + $0x4] sm:$0xf]
          %v942 = vld [vmem:[%s13 + $0x8] sm:$0xf]
          %v943 = vld [vmem:[%s13 + $0xc] sm:$0xf]
          %v944 = vpack.c.bf16 %v939, %v939
          %v945 = vld [vmem:[%s14] sm:$0x1]
          %v947 = vlaneseq
          %v948 = vshrl.u32 %v947, 7
          %v949 = vsub.s32 0, %v948
          %v950 = vrot.slane %v945, %v949
          %v956 = vunpack.c.l.b16 %v940
          %v957 = vunpack.c.l.b16 %v941
          %v958 = vunpack.c.l.b16 %v942
          %v959 = vunpack.c.l.b16 %v943
          %v960 = vpack.c.b16 %v957, %v956
          %v961 = vpack.c.b16 %v959, %v958
          %v965 = vsel %vm892, %v944, 0
          %967 = vmatprep.subr.bf16.mxu0 0
          %968 = vmatpush1.bf16.msra.mxu0 %v960
          %969 = vmatprep.subr.bf16.mxu0 0
          %970 = vmatpush1.bf16.msra.mxu0 %v961
          %971 = vmatprep.subr.bf16.mxu0 0
          %972 = vmatpush1.bf16.msra.mxu0 0
          %973 = vmatprep.subr.bf16.mxu0 0
          %974 = vmatpush1.bf16.msra.mxu0 0
          %975 = vmatprep.subr.bf16.mxu0 0
          %976 = vmatpush1.bf16.msra.mxu0 0
          %977 = vmatprep.subr.bf16.mxu0 0
          %978 = vmatpush1.bf16.msra.mxu0 0
          %979 = vmatprep.subr.bf16.mxu0 0
          %980 = vmatpush1.bf16.msra.mxu0 0
          %981 = vmatprep.subr.bf16.mxu0 0
          %982 = vmatpush1.bf16.msra.mxu0 0
          %983 = vmatprep.subr.bf16.mxu0 0
          %984 = vmatpush1.bf16.msra.mxu0 0
          %985 = vmatprep.subr.bf16.mxu0 0
          %986 = vmatpush1.bf16.msra.mxu0 0
          %987 = vmatprep.subr.bf16.mxu0 0
          %988 = vmatpush1.bf16.msra.mxu0 0
          %989 = vmatprep.subr.bf16.mxu0 0
          %990 = vmatpush1.bf16.msra.mxu0 0
          %991 = vmatprep.subr.bf16.mxu0 0
          %992 = vmatpush1.bf16.msra.mxu0 0
          %993 = vmatprep.subr.bf16.mxu0 0
          %994 = vmatpush1.bf16.msra.mxu0 0
          %995 = vmatprep.subr.bf16.mxu0 0
          %996 = vmatpush1.bf16.msra.mxu0 0
          %997 = vmatprep.subr.bf16.mxu0 0
          %998 = vmatpush1.bf16.msra.mxu0 0
          %999 = vmatprep.mubr.bf16.mxu0 0
          %1000 = vmatmul.mubr.bf16.gmra.mrb[0].mxu0 %v965
          %v1001 = vpop.f32.mrb[0].mxu0
          %v1002 = vadd.f32 %v950, %v1001
          %v1003 = vpop.f32.mrb[0].mxu0
          %v1004 = vpop.f32.mrb[0].mxu0
          %v1005 = vpop.f32.mrb[0].mxu0
          %1006 = vdwg.mxu0
          %v1007 = vpack.c.bf16 %v1002, %v1002
          %1008 = vst.msk [vmem:[#allocation3] sm:$0xf] %vm937, %v1007
        $region140: #{key_emotions_forward.6} parent=119 // pred_fallthru
          _
        %s1009 = smul.u32 %s44, 8
        %s1010 = scalar_lea.vmem %s847, %s1009
        %v1011 = vld [vmem:[%s1010] sm:$0xff]
        %v1012 = vlaneseq
        %v1013 = vshrl.u32 %v1012, 7
        %v1014 = vstv %s1009
        %v1015 = vadd.s32 %v1014, %v1013
        %v1016 = vlaneseq
        %v1017 = vand.u32 %v1016, 127
        %vm1018 = vcmp.gt.s32.totalorder %v1017, %v1015
        %v1019 = vsel %vm1018, -1e+09, 0.0
        %v1020 = vld [vmem:[%s854] sm:$0x1]
        %v1022 = vlaneseq
        %v1023 = vshrl.u32 %v1022, 7
        %v1024 = vsub.s32 0, %v1023
        %v1025 = vrot.slane %v1020, %v1024
        %v1027 = vadd.f32 %v1019, %v1025
        %v1028 = vld [vmem:[%s3] sm:$0xf]
        %v1029 = vld [vmem:[%s3 + $0x4] sm:$0xf]
        %v1030 = vld [vmem:[%s3 + $0x8] sm:$0xf]
        %v1031 = vld [vmem:[%s3 + $0xc] sm:$0xf]
        %v1032 = vpack.c.bf16 %v1011, %v1011
        %v1033 = vld [vmem:[%s4] sm:$0x1]
        %v1035 = vlaneseq
        %v1036 = vshrl.u32 %v1035, 7
        %v1037 = vsub.s32 0, %v1036
        %v1038 = vrot.slane %v1033, %v1037
        %v1044 = vunpack.c.l.b16 %v1028
        %v1045 = vunpack.c.l.b16 %v1029
        %v1046 = vunpack.c.l.b16 %v1030
        %v1047 = vunpack.c.l.b16 %v1031
        %v1048 = vpack.c.b16 %v1045, %v1044
        %v1049 = vpack.c.b16 %v1047, %v1046
        %vm1052 = vcmask 261120
        %v1054 = vsel %vm1052, %v1032, 0
        %1056 = vmatprep.subr.bf16.mxu0 0
        %1057 = vmatpush1.bf16.msra.mxu0 %v1048
        %1058 = vmatprep.subr.bf16.mxu0 0
        %1059 = vmatpush1.bf16.msra.mxu0 %v1049
        %1060 = vmatprep.subr.bf16.mxu0 0
        %1061 = vmatpush1.bf16.msra.mxu0 0
        %1062 = vmatprep.subr.bf16.mxu0 0
        %1063 = vmatpush1.bf16.msra.mxu0 0
        %1064 = vmatprep.subr.bf16.mxu0 0
        %1065 = vmatpush1.bf16.msra.mxu0 0
        %1066 = vmatprep.subr.bf16.mxu0 0
        %1067 = vmatpush1.bf16.msra.mxu0 0
        %1068 = vmatprep.subr.bf16.mxu0 0
        %1069 = vmatpush1.bf16.msra.mxu0 0
        %1070 = vmatprep.subr.bf16.mxu0 0
        %1071 = vmatpush1.bf16.msra.mxu0 0
        %1072 = vmatprep.subr.bf16.mxu0 0
        %1073 = vmatpush1.bf16.msra.mxu0 0
        %1074 = vmatprep.subr.bf16.mxu0 0
        %1075 = vmatpush1.bf16.msra.mxu0 0
        %1076 = vmatprep.subr.bf16.mxu0 0
        %1077 = vmatpush1.bf16.msra.mxu0 0
        %1078 = vmatprep.subr.bf16.mxu0 0
        %1079 = vmatpush1.bf16.msra.mxu0 0
        %1080 = vmatprep.subr.bf16.mxu0 0
        %1081 = vmatpush1.bf16.msra.mxu0 0
        %1082 = vmatprep.subr.bf16.mxu0 0
        %1083 = vmatpush1.bf16.msra.mxu0 0
        %1084 = vmatprep.subr.bf16.mxu0 0
        %1085 = vmatpush1.bf16.msra.mxu0 0
        %1086 = vmatprep.subr.bf16.mxu0 0
        %1087 = vmatpush1.bf16.msra.mxu0 0
        %1088 = vmatprep.mubr.bf16.mxu0 0
        %1089 = vmatmul.mubr.bf16.gmra.mrb[0].mxu0 %v1054
        %v1090 = vpop.f32.mrb[0].mxu0
        %v1091 = vadd.f32 %v1038, %v1090
        %v1092 = vpop.f32.mrb[0].mxu0
        %v1093 = vpop.f32.mrb[0].mxu0
        %v1094 = vpop.f32.mrb[0].mxu0
        %1095 = vdwg.mxu0
        %v1096 = vld [vmem:[#allocation2] sm:$0xf]
        %v1097 = vpack.c.bf16 %v1091, %v1091
        %vm1098 = vcmask 130048
        %v1100 = vsel %vm1098, %v1097, 0
        %v1103 = vsel %vm1098, %v1096, 0
        %1105 = vmatprep.subr.bf16.mxu0 0
        %1106 = vmatpush1.bf16.xpose.msra.mxu0 %v1103
        %1107 = vmatprep.subr.bf16.mxu0 0
        %1108 = vmatpush1.bf16.xpose.msra.mxu0 0
        %1109 = vmatprep.subr.bf16.mxu0 0
        %1110 = vmatpush1.bf16.xpose.msra.mxu0 0
        %1111 = vmatprep.subr.bf16.mxu0 0
        %1112 = vmatpush1.bf16.xpose.msra.mxu0 0
        %1113 = vmatprep.subr.bf16.mxu0 0
        %1114 = vmatpush1.bf16.xpose.msra.mxu0 0
        %1115 = vmatprep.subr.bf16.mxu0 0
        %1116 = vmatpush1.bf16.xpose.msra.mxu0 0
        %1117 = vmatprep.subr.bf16.mxu0 0
        %1118 = vmatpush1.bf16.xpose.msra.mxu0 0
        %1119 = vmatprep.subr.bf16.mxu0 0
        %1120 = vmatpush1.bf16.xpose.msra.mxu0 0
        %1121 = vmatprep.subr.bf16.mxu0 0
        %1122 = vmatpush1.bf16.xpose.msra.mxu0 0
        %1123 = vmatprep.subr.bf16.mxu0 0
        %1124 = vmatpush1.bf16.xpose.msra.mxu0 0
        %1125 = vmatprep.subr.bf16.mxu0 0
        %1126 = vmatpush1.bf16.xpose.msra.mxu0 0
        %1127 = vmatprep.subr.bf16.mxu0 0
        %1128 = vmatpush1.bf16.xpose.msra.mxu0 0
        %1129 = vmatprep.subr.bf16.mxu0 0
        %1130 = vmatpush1.bf16.xpose.msra.mxu0 0
        %1131 = vmatprep.subr.bf16.mxu0 0
        %1132 = vmatpush1.bf16.xpose.msra.mxu0 0
        %1133 = vmatprep.subr.bf16.mxu0 0
        %1134 = vmatpush1.bf16.xpose.msra.mxu0 0
        %1135 = vmatprep.subr.bf16.mxu0 0
        %1136 = vmatpush1.bf16.xpose.msra.mxu0 0
        %1137 = vmatprep.mubr.bf16.mxu0 0
        %1138 = vmatmul.mubr.bf16.gmra.mrb[0].mxu0 %v1100
        %v1139 = vpop.f32.mrb[0].mxu0
        %v1140 = vadd.f32 0.0, %v1139
        %v1141 = vpop.f32.mrb[0].mxu0
        %v1142 = vpop.f32.mrb[0].mxu0
        %v1143 = vpop.f32.mrb[0].mxu0
        %1144 = vdwg.mxu0
        %v1145 = vmul.f32 %v1140, 0.25
        %v1146 = vadd.f32 %v1145, %v1027
        %vm1147 = vcmask 64512
        %v1148 = vsel %vm1147, %v1146, -inf
        %1149 = vmax.xlane.f32.xlu0 %v1148
        %v1150 = vpop.xlane.xlu0 %1149
        %v1151 = vsub.f32 %v1146, %v1150
        %v1152 = vmul.f32 %v1151, 1.442695
        %v1153 = vpow.pop %v1152
        %v1154 = vsel %vm1147, %v1153, 0.0
        %1155 = vadd.xlane.f32.xlu0 %v1154
        %v1156 = vpop.xlane.xlu0 %1155
        %v1157 = vrcp.pop %v1156
        %v1158 = vmul.f32 %v1153, %v1157
        %v1159 = vpack.c.bf16 %v1158, %v1158
        %v1161 = vunpack.c.l.b16 %v1096
        %v1162 = vpack.c.b16 %v1161, %v1161
        %1163 = vrot.lane.b32.xlu0 %v1162, 96
        %v1164 = vpop.permute.xlu0 %1163
        %v1166 = vsel %vm1147, %v1159, 0
        %vm1168 = vcmask 1043456
        %v1170 = vsel %vm1168, %v1164, 0
        %1172 = vmatprep.subr.bf16.mxu0 0
        %1173 = vmatpush1.bf16.msra.mxu0 %v1170
        %1174 = vmatprep.subr.bf16.mxu0 0
        %1175 = vmatpush1.bf16.msra.mxu0 0
        %1176 = vmatprep.subr.bf16.mxu0 0
        %1177 = vmatpush1.bf16.msra.mxu0 0
        %1178 = vmatprep.subr.bf16.mxu0 0
        %1179 = vmatpush1.bf16.msra.mxu0 0
        %1180 = vmatprep.subr.bf16.mxu0 0
        %1181 = vmatpush1.bf16.msra.mxu0 0
        %1182 = vmatprep.subr.bf16.mxu0 0
        %1183 = vmatpush1.bf16.msra.mxu0 0
        %1184 = vmatprep.subr.bf16.mxu0 0
        %1185 = vmatpush1.bf16.msra.mxu0 0
        %1186 = vmatprep.subr.bf16.mxu0 0
        %1187 = vmatpush1.bf16.msra.mxu0 0
        %1188 = vmatprep.subr.bf16.mxu0 0
        %1189 = vmatpush1.bf16.msra.mxu0 0
        %1190 = vmatprep.subr.bf16.mxu0 0
        %1191 = vmatpush1.bf16.msra.mxu0 0
        %1192 = vmatprep.subr.bf16.mxu0 0
        %1193 = vmatpush1.bf16.msra.mxu0 0
        %1194 = vmatprep.subr.bf16.mxu0 0
        %1195 = vmatpush1.bf16.msra.mxu0 0
        %1196 = vmatprep.subr.bf16.mxu0 0
        %1197 = vmatpush1.bf16.msra.mxu0 0
        %1198 = vmatprep.subr.bf16.mxu0 0
        %1199 = vmatpush1.bf16.msra.mxu0 0
        %1200 = vmatprep.subr.bf16.mxu0 0
        %1201 = vmatpush1.bf16.msra.mxu0 0
        %1202 = vmatprep.subr.bf16.mxu0 0
        %1203 = vmatpush1.bf16.msra.mxu0 0
        %1204 = vmatprep.mubr.bf16.mxu0 0
        %1205 = vmatmul.mubr.bf16.gmra.mrb[0].mxu0 %v1166
        %v1206 = vpop.f32.mrb[0].mxu0
        %v1207 = vadd.f32 0.0, %v1206
        %v1208 = vpop.f32.mrb[0].mxu0
        %v1209 = vpop.f32.mrb[0].mxu0
        %v1210 = vpop.f32.mrb[0].mxu0
        %1211 = vdwg.mxu0
        %1212 = vst.msk [vmem:[#allocation4] sm:$0xff] %vm1098, %v1207
        %v1213 = vld [vmem:[#allocation2] sm:$0xf]
        %1215 = vrot.lane.b32.xlu0 %v1097, 112
        %v1216 = vpop.permute.xlu0 %1215
        %v1218 = vunpack.c.l.b16 %v1213
        %v1219 = vpack.c.b16 %v1218, %v1218
        %1220 = vrot.lane.b32.xlu0 %v1219, 112
        %v1221 = vpop.permute.xlu0 %1220
        %v1223 = vsel %vm1098, %v1216, 0
        %v1226 = vsel %vm1098, %v1221, 0
        %1228 = vmatprep.subr.bf16.mxu0 0
        %1229 = vmatpush1.bf16.xpose.msra.mxu0 %v1226
        %1230 = vmatprep.subr.bf16.mxu0 0
        %1231 = vmatpush1.bf16.xpose.msra.mxu0 0
        %1232 = vmatprep.subr.bf16.mxu0 0
        %1233 = vmatpush1.bf16.xpose.msra.mxu0 0
        %1234 = vmatprep.subr.bf16.mxu0 0
        %1235 = vmatpush1.bf16.xpose.msra.mxu0 0
        %1236 = vmatprep.subr.bf16.mxu0 0
        %1237 = vmatpush1.bf16.xpose.msra.mxu0 0
        %1238 = vmatprep.subr.bf16.mxu0 0
        %1239 = vmatpush1.bf16.xpose.msra.mxu0 0
        %1240 = vmatprep.subr.bf16.mxu0 0
        %1241 = vmatpush1.bf16.xpose.msra.mxu0 0
        %1242 = vmatprep.subr.bf16.mxu0 0
        %1243 = vmatpush1.bf16.xpose.msra.mxu0 0
        %1244 = vmatprep.subr.bf16.mxu0 0
        %1245 = vmatpush1.bf16.xpose.msra.mxu0 0
        %1246 = vmatprep.subr.bf16.mxu0 0
        %1247 = vmatpush1.bf16.xpose.msra.mxu0 0
        %1248 = vmatprep.subr.bf16.mxu0 0
        %1249 = vmatpush1.bf16.xpose.msra.mxu0 0
        %1250 = vmatprep.subr.bf16.mxu0 0
        %1251 = vmatpush1.bf16.xpose.msra.mxu0 0
        %1252 = vmatprep.subr.bf16.mxu0 0
        %1253 = vmatpush1.bf16.xpose.msra.mxu0 0
        %1254 = vmatprep.subr.bf16.mxu0 0
        %1255 = vmatpush1.bf16.xpose.msra.mxu0 0
        %1256 = vmatprep.subr.bf16.mxu0 0
        %1257 = vmatpush1.bf16.xpose.msra.mxu0 0
        %1258 = vmatprep.subr.bf16.mxu0 0
        %1259 = vmatpush1.bf16.xpose.msra.mxu0 0
        %1260 = vmatprep.mubr.bf16.mxu0 0
        %1261 = vmatmul.mubr.bf16.gmra.mrb[0].mxu0 %v1223
        %v1262 = vpop.f32.mrb[0].mxu0
        %v1263 = vadd.f32 0.0, %v1262
        %v1264 = vpop.f32.mrb[0].mxu0
        %v1265 = vpop.f32.mrb[0].mxu0
        %v1266 = vpop.f32.mrb[0].mxu0
        %1267 = vdwg.mxu0
        %v1268 = vmul.f32 %v1263, 0.25
        %v1269 = vadd.f32 %v1268, %v1027
        %v1270 = vsel %vm1147, %v1269, -inf
        %1271 = vmax.xlane.f32.xlu0 %v1270
        %v1272 = vpop.xlane.xlu0 %1271
        %v1273 = vsub.f32 %v1269, %v1272
        %v1274 = vmul.f32 %v1273, 1.442695
        %v1275 = vpow.pop %v1274
        %v1276 = vsel %vm1147, %v1275, 0.0
        %1277 = vadd.xlane.f32.xlu0 %v1276
        %v1278 = vpop.xlane.xlu0 %1277
        %v1279 = vrcp.pop %v1278
        %v1280 = vmul.f32 %v1275, %v1279
        %v1281 = vpack.c.bf16 %v1280, %v1280
        %1282 = vrot.lane.b32.xlu0 %v1219, 80
        %v1283 = vpop.permute.xlu0 %1282
        %v1285 = vsel %vm1147, %v1281, 0
        %v1288 = vsel %vm1168, %v1283, 0
        %1290 = vmatprep.subr.bf16.mxu0 0
        %1291 = vmatpush1.bf16.msra.mxu0 %v1288
        %1292 = vmatprep.subr.bf16.mxu0 0
        %1293 = vmatpush1.bf16.msra.mxu0 0
        %1294 = vmatprep.subr.bf16.mxu0 0
        %1295 = vmatpush1.bf16.msra.mxu0 0
        %1296 = vmatprep.subr.bf16.mxu0 0
        %1297 = vmatpush1.bf16.msra.mxu0 0
        %1298 = vmatprep.subr.bf16.mxu0 0
        %1299 = vmatpush1.bf16.msra.mxu0 0
        %1300 = vmatprep.subr.bf16.mxu0 0
        %1301 = vmatpush1.bf16.msra.mxu0 0
        %1302 = vmatprep.subr.bf16.mxu0 0
        %1303 = vmatpush1.bf16.msra.mxu0 0
        %1304 = vmatprep.subr.bf16.mxu0 0
        %1305 = vmatpush1.bf16.msra.mxu0 0
        %1306 = vmatprep.subr.bf16.mxu0 0
        %1307 = vmatpush1.bf16.msra.mxu0 0
        %1308 = vmatprep.subr.bf16.mxu0 0
        %1309 = vmatpush1.bf16.msra.mxu0 0
        %1310 = vmatprep.subr.bf16.mxu0 0
        %1311 = vmatpush1.bf16.msra.mxu0 0
        %1312 = vmatprep.subr.bf16.mxu0 0
        %1313 = vmatpush1.bf16.msra.mxu0 0
        %1314 = vmatprep.subr.bf16.mxu0 0
        %1315 = vmatpush1.bf16.msra.mxu0 0
        %1316 = vmatprep.subr.bf16.mxu0 0
        %1317 = vmatpush1.bf16.msra.mxu0 0
        %1318 = vmatprep.subr.bf16.mxu0 0
        %1319 = vmatpush1.bf16.msra.mxu0 0
        %1320 = vmatprep.subr.bf16.mxu0 0
        %1321 = vmatpush1.bf16.msra.mxu0 0
        %1322 = vmatprep.mubr.bf16.mxu0 0
        %1323 = vmatmul.mubr.bf16.gmra.mrb[0].mxu0 %v1285
        %v1324 = vpop.f32.mrb[0].mxu0
        %v1325 = vadd.f32 0.0, %v1324
        %v1326 = vpop.f32.mrb[0].mxu0
        %v1327 = vpop.f32.mrb[0].mxu0
        %v1328 = vpop.f32.mrb[0].mxu0
        %1329 = vdwg.mxu0
        %1331 = vrot.lane.b32.xlu0 %v1325, 16
        %v1332 = vpop.permute.xlu0 %1331
        %vm1334 = vcmask 261248
        %1335 = vst.msk [vmem:[#allocation4] sm:$0xff] %vm1334, %v1332
        %v1336 = vld [vmem:[#allocation4] sm:$0xff]
        %v1337 = vld [vmem:[%s7] sm:$0xf]
        %v1338 = vld [vmem:[%s7 + $0x4] sm:$0xf]
        %v1339 = vld [vmem:[%s7 + $0x8] sm:$0xf]
        %v1340 = vld [vmem:[%s7 + $0xc] sm:$0xf]
        %v1341 = vpack.c.bf16 %v1336, %v1336
        %v1346 = vunpack.c.l.b16 %v1337
        %v1347 = vunpack.c.l.b16 %v1338
        %v1348 = vunpack.c.l.b16 %v1339
        %v1349 = vunpack.c.l.b16 %v1340
        %v1350 = vpack.c.b16 %v1347, %v1346
        %v1351 = vpack.c.b16 %v1349, %v1348
        %v1355 = vsel %vm1052, %v1341, 0
        %1357 = vmatprep.subr.bf16.mxu0 0
        %1358 = vmatpush1.bf16.msra.mxu0 %v1350
        %1359 = vmatprep.subr.bf16.mxu0 0
        %1360 = vmatpush1.bf16.msra.mxu0 %v1351
        %1361 = vmatprep.subr.bf16.mxu0 0
        %1362 = vmatpush1.bf16.msra.mxu0 0
        %1363 = vmatprep.subr.bf16.mxu0 0
        %1364 = vmatpush1.bf16.msra.mxu0 0
        %1365 = vmatprep.subr.bf16.mxu0 0
        %1366 = vmatpush1.bf16.msra.mxu0 0
        %1367 = vmatprep.subr.bf16.mxu0 0
        %1368 = vmatpush1.bf16.msra.mxu0 0
        %1369 = vmatprep.subr.bf16.mxu0 0
        %1370 = vmatpush1.bf16.msra.mxu0 0
        %1371 = vmatprep.subr.bf16.mxu0 0
        %1372 = vmatpush1.bf16.msra.mxu0 0
        %1373 = vmatprep.subr.bf16.mxu0 0
        %1374 = vmatpush1.bf16.msra.mxu0 0
        %1375 = vmatprep.subr.bf16.mxu0 0
        %1376 = vmatpush1.bf16.msra.mxu0 0
        %1377 = vmatprep.subr.bf16.mxu0 0
        %1378 = vmatpush1.bf16.msra.mxu0 0
        %1379 = vmatprep.subr.bf16.mxu0 0
        %1380 = vmatpush1.bf16.msra.mxu0 0
        %1381 = vmatprep.subr.bf16.mxu0 0
        %1382 = vmatpush1.bf16.msra.mxu0 0
        %1383 = vmatprep.subr.bf16.mxu0 0
        %1384 = vmatpush1.bf16.msra.mxu0 0
        %1385 = vmatprep.subr.bf16.mxu0 0
        %1386 = vmatpush1.bf16.msra.mxu0 0
        %1387 = vmatprep.subr.bf16.mxu0 0
        %1388 = vmatpush1.bf16.msra.mxu0 0
        %1389 = vmatprep.mubr.bf16.mxu0 0
        %1390 = vmatmul.mubr.bf16.gmra.mrb[0].mxu0 %v1355
        %v1391 = vpop.f32.mrb[0].mxu0
        %v1392 = vadd.f32 0.0, %v1391
        %v1393 = vpop.f32.mrb[0].mxu0
        %v1394 = vpop.f32.mrb[0].mxu0
        %v1395 = vpop.f32.mrb[0].mxu0
        %1396 = vdwg.mxu0
        %v1397 = vadd.f32 %v1011, %v1392
        %v1398 = vld [vmem:[%s8] sm:$0x1]
        %v1400 = vlaneseq
        %v1401 = vshrl.u32 %v1400, 7
        %v1402 = vsub.s32 0, %v1401
        %v1403 = vrot.slane %v1398, %v1402
        %v1405 = vadd.f32 %v1397, %v1403
        %v1406 = vld [vmem:[%s9] sm:$0x1]
        %v1407 = vld [vmem:[%s10] sm:$0x1]
        %v1408 = vsel %vm1052, %v1405, 0.0
        %1409 = vadd.xlane.f32.xlu0 %v1408
        %v1410 = vpop.xlane.xlu0 %1409
        %v1411 = vrcp.pop 32.0
        %v1412 = vmul.f32 %v1410, %v1411
        %v1413 = vsub.f32 %v1405, %v1412
        %v1414 = vmul.f32 %v1413, %v1413
        %v1415 = vsel %vm1052, %v1414, 0.0
        %1416 = vadd.xlane.f32.xlu0 %v1415
        %v1417 = vpop.xlane.xlu0 %1416
        %v1418 = vmul.f32 %v1417, %v1411
        %v1419 = vadd.f32 %v1418, 1e-05
        %v1420 = vrsqrt.pop %v1419
        %v1421 = vmul.f32 %v1413, %v1420
        %v1423 = vlaneseq
        %v1424 = vshrl.u32 %v1423, 7
        %v1425 = vsub.s32 0, %v1424
        %v1426 = vrot.slane %v1406, %v1425
        %v1428 = vmul.f32 %v1421, %v1426
        %v1430 = vlaneseq
        %v1431 = vshrl.u32 %v1430, 7
        %v1432 = vsub.s32 0, %v1431
        %v1433 = vrot.slane %v1407, %v1432
        %v1435 = vadd.f32 %v1428, %v1433
        %v1436 = vld [vmem:[%s11] sm:$0xf]
        %v1437 = vld [vmem:[%s11 + $0x4] sm:$0xf]
        %v1438 = vld [vmem:[%s11 + $0x8] sm:$0xf]
        %v1439 = vld [vmem:[%s11 + $0xc] sm:$0xf]
        %v1440 = vpack.c.bf16 %v1435, %v1435
        %v1441 = vld [vmem:[%s12] sm:$0x1]
        %v1443 = vlaneseq
        %v1444 = vshrl.u32 %v1443, 7
        %v1445 = vsub.s32 0, %v1444
        %v1446 = vrot.slane %v1441, %v1445
        %v1452 = vunpack.c.l.b16 %v1436
        %v1453 = vunpack.c.l.b16 %v1437
        %v1454 = vunpack.c.l.b16 %v1438
        %v1455 = vunpack.c.l.b16 %v1439
        %v1456 = vpack.c.b16 %v1453, %v1452
        %v1457 = vpack.c.b16 %v1455, %v1454
        %v1461 = vsel %vm1052, %v1440, 0
        %1463 = vmatprep.subr.bf16.mxu0 0
        %1464 = vmatpush1.bf16.msra.mxu0 %v1456
        %1465 = vmatprep.subr.bf16.mxu0 0
        %1466 = vmatpush1.bf16.msra.mxu0 %v1457
        %1467 = vmatprep.subr.bf16.mxu0 0
        %1468 = vmatpush1.bf16.msra.mxu0 0
        %1469 = vmatprep.subr.bf16.mxu0 0
        %1470 = vmatpush1.bf16.msra.mxu0 0
        %1471 = vmatprep.subr.bf16.mxu0 0
        %1472 = vmatpush1.bf16.msra.mxu0 0
        %1473 = vmatprep.subr.bf16.mxu0 0
        %1474 = vmatpush1.bf16.msra.mxu0 0
        %1475 = vmatprep.subr.bf16.mxu0 0
        %1476 = vmatpush1.bf16.msra.mxu0 0
        %1477 = vmatprep.subr.bf16.mxu0 0
        %1478 = vmatpush1.bf16.msra.mxu0 0
        %1479 = vmatprep.subr.bf16.mxu0 0
        %1480 = vmatpush1.bf16.msra.mxu0 0
        %1481 = vmatprep.subr.bf16.mxu0 0
        %1482 = vmatpush1.bf16.msra.mxu0 0
        %1483 = vmatprep.subr.bf16.mxu0 0
        %1484 = vmatpush1.bf16.msra.mxu0 0
        %1485 = vmatprep.subr.bf16.mxu0 0
        %1486 = vmatpush1.bf16.msra.mxu0 0
        %1487 = vmatprep.subr.bf16.mxu0 0
        %1488 = vmatpush1.bf16.msra.mxu0 0
        %1489 = vmatprep.subr.bf16.mxu0 0
        %1490 = vmatpush1.bf16.msra.mxu0 0
        %1491 = vmatprep.subr.bf16.mxu0 0
        %1492 = vmatpush1.bf16.msra.mxu0 0
        %1493 = vmatprep.subr.bf16.mxu0 0
        %1494 = vmatpush1.bf16.msra.mxu0 0
        %1495 = vmatprep.mubr.bf16.mxu0 0
        %1496 = vmatmul.mubr.bf16.gmra.mrb[0].mxu0 %v1461
        %v1497 = vpop.f32.mrb[0].mxu0
        %v1498 = vadd.f32 %v1446, %v1497
        %v1499 = vpop.f32.mrb[0].mxu0
        %v1500 = vpop.f32.mrb[0].mxu0
        %v1501 = vpop.f32.mrb[0].mxu0
        %1502 = vdwg.mxu0
        %v1503 = vld [vmem:[#allocation3] sm:$0xf]
        %v1504 = vpack.c.bf16 %v1498, %v1498
        %v1506 = vsel %vm1098, %v1504, 0
        %v1509 = vsel %vm1098, %v1503, 0
        %1511 = vmatprep.subr.bf16.mxu0 0
        %1512 = vmatpush1.bf16.xpose.msra.mxu0 %v1509
        %1513 = vmatprep.subr.bf16.mxu0 0
        %1514 = vmatpush1.bf16.xpose.msra.mxu0 0
        %1515 = vmatprep.subr.bf16.mxu0 0
        %1516 = vmatpush1.bf16.xpose.msra.mxu0 0
        %1517 = vmatprep.subr.bf16.mxu0 0
        %1518 = vmatpush1.bf16.xpose.msra.mxu0 0
        %1519 = vmatprep.subr.bf16.mxu0 0
        %1520 = vmatpush1.bf16.xpose.msra.mxu0 0
        %1521 = vmatprep.subr.bf16.mxu0 0
        %1522 = vmatpush1.bf16.xpose.msra.mxu0 0
        %1523 = vmatprep.subr.bf16.mxu0 0
        %1524 = vmatpush1.bf16.xpose.msra.mxu0 0
        %1525 = vmatprep.subr.bf16.mxu0 0
        %1526 = vmatpush1.bf16.xpose.msra.mxu0 0
        %1527 = vmatprep.subr.bf16.mxu0 0
        %1528 = vmatpush1.bf16.xpose.msra.mxu0 0
        %1529 = vmatprep.subr.bf16.mxu0 0
        %1530 = vmatpush1.bf16.xpose.msra.mxu0 0
        %1531 = vmatprep.subr.bf16.mxu0 0
        %1532 = vmatpush1.bf16.xpose.msra.mxu0 0
        %1533 = vmatprep.subr.bf16.mxu0 0
        %1534 = vmatpush1.bf16.xpose.msra.mxu0 0
        %1535 = vmatprep.subr.bf16.mxu0 0
        %1536 = vmatpush1.bf16.xpose.msra.mxu0 0
        %1537 = vmatprep.subr.bf16.mxu0 0
        %1538 = vmatpush1.bf16.xpose.msra.mxu0 0
        %1539 = vmatprep.subr.bf16.mxu0 0
        %1540 = vmatpush1.bf16.xpose.msra.mxu0 0
        %1541 = vmatprep.subr.bf16.mxu0 0
        %1542 = vmatpush1.bf16.xpose.msra.mxu0 0
        %1543 = vmatprep.mubr.bf16.mxu0 0
        %1544 = vmatmul.mubr.bf16.gmra.mrb[0].mxu0 %v1506
        %v1545 = vpop.f32.mrb[0].mxu0
        %v1546 = vadd.f32 0.0, %v1545
        %v1547 = vpop.f32.mrb[0].mxu0
        %v1548 = vpop.f32.mrb[0].mxu0
        %v1549 = vpop.f32.mrb[0].mxu0
        %1550 = vdwg.mxu0
        %v1551 = vmul.f32 %v1546, 0.25
        %v1552 = vsel %vm1147, %v1551, -inf
        %1553 = vmax.xlane.f32.xlu0 %v1552
        %v1554 = vpop.xlane.xlu0 %1553
        %v1555 = vsub.f32 %v1551, %v1554
        %v1556 = vmul.f32 %v1555, 1.442695
        %v1557 = vpow.pop %v1556
        %v1558 = vsel %vm1147, %v1557, 0.0
        %1559 = vadd.xlane.f32.xlu0 %v1558
        %v1560 = vpop.xlane.xlu0 %1559
        %v1561 = vrcp.pop %v1560
        %v1562 = vmul.f32 %v1557, %v1561
        %v1563 = vpack.c.bf16 %v1562, %v1562
        %v1565 = vunpack.c.l.b16 %v1503
        %v1566 = vpack.c.b16 %v1565, %v1565
        %1567 = vrot.lane.b32.xlu0 %v1566, 96
        %v1568 = vpop.permute.xlu0 %1567
        %v1570 = vsel %vm1147, %v1563, 0
        %v1573 = vsel %vm1168, %v1568, 0
        %1575 = vmatprep.subr.bf16.mxu0 0
        %1576 = vmatpush1.bf16.msra.mxu0 %v1573
        %1577 = vmatprep.subr.bf16.mxu0 0
        %1578 = vmatpush1.bf16.msra.mxu0 0
        %1579 = vmatprep.subr.bf16.mxu0 0
        %1580 = vmatpush1.bf16.msra.mxu0 0
        %1581 = vmatprep.subr.bf16.mxu0 0
        %1582 = vmatpush1.bf16.msra.mxu0 0
        %1583 = vmatprep.subr.bf16.mxu0 0
        %1584 = vmatpush1.bf16.msra.mxu0 0
        %1585 = vmatprep.subr.bf16.mxu0 0
        %1586 = vmatpush1.bf16.msra.mxu0 0
        %1587 = vmatprep.subr.bf16.mxu0 0
        %1588 = vmatpush1.bf16.msra.mxu0 0
        %1589 = vmatprep.subr.bf16.mxu0 0
        %1590 = vmatpush1.bf16.msra.mxu0 0
        %1591 = vmatprep.subr.bf16.mxu0 0
        %1592 = vmatpush1.bf16.msra.mxu0 0
        %1593 = vmatprep.subr.bf16.mxu0 0
        %1594 = vmatpush1.bf16.msra.mxu0 0
        %1595 = vmatprep.subr.bf16.mxu0 0
        %1596 = vmatpush1.bf16.msra.mxu0 0
        %1597 = vmatprep.subr.bf16.mxu0 0
        %1598 = vmatpush1.bf16.msra.mxu0 0
        %1599 = vmatprep.subr.bf16.mxu0 0
        %1600 = vmatpush1.bf16.msra.mxu0 0
        %1601 = vmatprep.subr.bf16.mxu0 0
        %1602 = vmatpush1.bf16.msra.mxu0 0
        %1603 = vmatprep.subr.bf16.mxu0 0
        %1604 = vmatpush1.bf16.msra.mxu0 0
        %1605 = vmatprep.subr.bf16.mxu0 0
        %1606 = vmatpush1.bf16.msra.mxu0 0
        %1607 = vmatprep.mubr.bf16.mxu0 0
        %1608 = vmatmul.mubr.bf16.gmra.mrb[0].mxu0 %v1570
        %v1609 = vpop.f32.mrb[0].mxu0
        %v1610 = vadd.f32 0.0, %v1609
        %v1611 = vpop.f32.mrb[0].mxu0
        %v1612 = vpop.f32.mrb[0].mxu0
        %v1613 = vpop.f32.mrb[0].mxu0
        %1614 = vdwg.mxu0
        %1615 = vst.msk [vmem:[#allocation4] sm:$0xff] %vm1098, %v1610
        %v1616 = vld [vmem:[#allocation3] sm:$0xf]
        %1618 = vrot.lane.b32.xlu0 %v1504, 112
        %v1619 = vpop.permute.xlu0 %1618
        %v1621 = vunpack.c.l.b16 %v1616
        %v1622 = vpack.c.b16 %v1621, %v1621
        %1623 = vrot.lane.b32.xlu0 %v1622, 112
        %v1624 = vpop.permute.xlu0 %1623
        %v1626 = vsel %vm1098, %v1619, 0
        %v1629 = vsel %vm1098, %v1624, 0
        %1631 = vmatprep.subr.bf16.mxu0 0
        %1632 = vmatpush1.bf16.xpose.msra.mxu0 %v1629
        %1633 = vmatprep.subr.bf16.mxu0 0
        %1634 = vmatpush1.bf16.xpose.msra.mxu0 0
        %1635 = vmatprep.subr.bf16.mxu0 0
        %1636 = vmatpush1.bf16.xpose.msra.mxu0 0
        %1637 = vmatprep.subr.bf16.mxu0 0
        %1638 = vmatpush1.bf16.xpose.msra.mxu0 0
        %1639 = vmatprep.subr.bf16.mxu0 0
        %1640 = vmatpush1.bf16.xpose.msra.mxu0 0
        %1641 = vmatprep.subr.bf16.mxu0 0
        %1642 = vmatpush1.bf16.xpose.msra.mxu0 0
        %1643 = vmatprep.subr.bf16.mxu0 0
        %1644 = vmatpush1.bf16.xpose.msra.mxu0 0
        %1645 = vmatprep.subr.bf16.mxu0 0
        %1646 = vmatpush1.bf16.xpose.msra.mxu0 0
        %1647 = vmatprep.subr.bf16.mxu0 0
        %1648 = vmatpush1.bf16.xpose.msra.mxu0 0
        %1649 = vmatprep.subr.bf16.mxu0 0
        %1650 = vmatpush1.bf16.xpose.msra.mxu0 0
        %1651 = vmatprep.subr.bf16.mxu0 0
        %1652 = vmatpush1.bf16.xpose.msra.mxu0 0
        %1653 = vmatprep.subr.bf16.mxu0 0
        %1654 = vmatpush1.bf16.xpose.msra.mxu0 0
        %1655 = vmatprep.subr.bf16.mxu0 0
        %1656 = vmatpush1.bf16.xpose.msra.mxu0 0
        %1657 = vmatprep.subr.bf16.mxu0 0
        %1658 = vmatpush1.bf16.xpose.msra.mxu0 0
        %1659 = vmatprep.subr.bf16.mxu0 0
        %1660 = vmatpush1.bf16.xpose.msra.mxu0 0
        %1661 = vmatprep.subr.bf16.mxu0 0
        %1662 = vmatpush1.bf16.xpose.msra.mxu0 0
        %1663 = vmatprep.mubr.bf16.mxu0 0
        %1664 = vmatmul.mubr.bf16.gmra.mrb[0].mxu0 %v1626
        %v1665 = vpop.f32.mrb[0].mxu0
        %v1666 = vadd.f32 0.0, %v1665
        %v1667 = vpop.f32.mrb[0].mxu0
        %v1668 = vpop.f32.mrb[0].mxu0
        %v1669 = vpop.f32.mrb[0].mxu0
        %1670 = vdwg.mxu0
        %v1671 = vmul.f32 %v1666, 0.25
        %v1672 = vsel %vm1147, %v1671, -inf
        %1673 = vmax.xlane.f32.xlu0 %v1672
        %v1674 = vpop.xlane.xlu0 %1673
        %v1675 = vsub.f32 %v1671, %v1674
        %v1676 = vmul.f32 %v1675, 1.442695
        %v1677 = vpow.pop %v1676
        %v1678 = vsel %vm1147, %v1677, 0.0
        %1679 = vadd.xlane.f32.xlu0 %v1678
        %v1680 = vpop.xlane.xlu0 %1679
        %v1681 = vrcp.pop %v1680
        %v1682 = vmul.f32 %v1677, %v1681
        %v1683 = vpack.c.bf16 %v1682, %v1682
        %1684 = vrot.lane.b32.xlu0 %v1622, 80
        %v1685 = vpop.permute.xlu0 %1684
        %v1687 = vsel %vm1147, %v1683, 0
        %v1690 = vsel %vm1168, %v1685, 0
        %1692 = vmatprep.subr.bf16.mxu0 0
        %1693 = vmatpush1.bf16.msra.mxu0 %v1690
        %1694 = vmatprep.subr.bf16.mxu0 0
        %1695 = vmatpush1.bf16.msra.mxu0 0
        %1696 = vmatprep.subr.bf16.mxu0 0
        %1697 = vmatpush1.bf16.msra.mxu0 0
        %1698 = vmatprep.subr.bf16.mxu0 0
        %1699 = vmatpush1.bf16.msra.mxu0 0
        %1700 = vmatprep.subr.bf16.mxu0 0
        %1701 = vmatpush1.bf16.msra.mxu0 0
        %1702 = vmatprep.subr.bf16.mxu0 0
        %1703 = vmatpush1.bf16.msra.mxu0 0
        %1704 = vmatprep.subr.bf16.mxu0 0
        %1705 = vmatpush1.bf16.msra.mxu0 0
        %1706 = vmatprep.subr.bf16.mxu0 0
        %1707 = vmatpush1.bf16.msra.mxu0 0
        %1708 = vmatprep.subr.bf16.mxu0 0
        %1709 = vmatpush1.bf16.msra.mxu0 0
        %1710 = vmatprep.subr.bf16.mxu0 0
        %1711 = vmatpush1.bf16.msra.mxu0 0
        %1712 = vmatprep.subr.bf16.mxu0 0
        %1713 = vmatpush1.bf16.msra.mxu0 0
        %1714 = vmatprep.subr.bf16.mxu0 0
        %1715 = vmatpush1.bf16.msra.mxu0 0
        %1716 = vmatprep.subr.bf16.mxu0 0
        %1717 = vmatpush1.bf16.msra.mxu0 0
        %1718 = vmatprep.subr.bf16.mxu0 0
        %1719 = vmatpush1.bf16.msra.mxu0 0
        %1720 = vmatprep.subr.bf16.mxu0 0
        %1721 = vmatpush1.bf16.msra.mxu0 0
        %1722 = vmatprep.subr.bf16.mxu0 0
        %1723 = vmatpush1.bf16.msra.mxu0 0
        %1724 = vmatprep.mubr.bf16.mxu0 0
        %1725 = vmatmul.mubr.bf16.gmra.mrb[0].mxu0 %v1687
        %v1726 = vpop.f32.mrb[0].mxu0
        %v1727 = vadd.f32 0.0, %v1726
        %v1728 = vpop.f32.mrb[0].mxu0
        %v1729 = vpop.f32.mrb[0].mxu0
        %v1730 = vpop.f32.mrb[0].mxu0
        %1731 = vdwg.mxu0
        %1733 = vrot.lane.b32.xlu0 %v1727, 16
        %v1734 = vpop.permute.xlu0 %1733
        %1736 = vst.msk [vmem:[#allocation4] sm:$0xff] %vm1334, %v1734
        %v1737 = vld [vmem:[#allocation4] sm:$0xff]
        %v1738 = vld [vmem:[%s15] sm:$0xf]
        %v1739 = vld [vmem:[%s15 + $0x4] sm:$0xf]
        %v1740 = vld [vmem:[%s15 + $0x8] sm:$0xf]
        %v1741 = vld [vmem:[%s15 + $0xc] sm:$0xf]
        %v1742 = vpack.c.bf16 %v1737, %v1737
        %v1747 = vunpack.c.l.b16 %v1738
        %v1748 = vunpack.c.l.b16 %v1739
        %v1749 = vunpack.c.l.b16 %v1740
        %v1750 = vunpack.c.l.b16 %v1741
        %v1751 = vpack.c.b16 %v1748, %v1747
        %v1752 = vpack.c.b16 %v1750, %v1749
        %v1756 = vsel %vm1052, %v1742, 0
        %1758 = vmatprep.subr.bf16.mxu0 0
        %1759 = vmatpush1.bf16.msra.mxu0 %v1751
        %1760 = vmatprep.subr.bf16.mxu0 0
        %1761 = vmatpush1.bf16.msra.mxu0 %v1752
        %1762 = vmatprep.subr.bf16.mxu0 0
        %1763 = vmatpush1.bf16.msra.mxu0 0
        %1764 = vmatprep.subr.bf16.mxu0 0
        %1765 = vmatpush1.bf16.msra.mxu0 0
        %1766 = vmatprep.subr.bf16.mxu0 0
        %1767 = vmatpush1.bf16.msra.mxu0 0
        %1768 = vmatprep.subr.bf16.mxu0 0
        %1769 = vmatpush1.bf16.msra.mxu0 0
        %1770 = vmatprep.subr.bf16.mxu0 0
        %1771 = vmatpush1.bf16.msra.mxu0 0
        %1772 = vmatprep.subr.bf16.mxu0 0
        %1773 = vmatpush1.bf16.msra.mxu0 0
        %1774 = vmatprep.subr.bf16.mxu0 0
        %1775 = vmatpush1.bf16.msra.mxu0 0
        %1776 = vmatprep.subr.bf16.mxu0 0
        %1777 = vmatpush1.bf16.msra.mxu0 0
        %1778 = vmatprep.subr.bf16.mxu0 0
        %1779 = vmatpush1.bf16.msra.mxu0 0
        %1780 = vmatprep.subr.bf16.mxu0 0
        %1781 = vmatpush1.bf16.msra.mxu0 0
        %1782 = vmatprep.subr.bf16.mxu0 0
        %1783 = vmatpush1.bf16.msra.mxu0 0
        %1784 = vmatprep.subr.bf16.mxu0 0
        %1785 = vmatpush1.bf16.msra.mxu0 0
        %1786 = vmatprep.subr.bf16.mxu0 0
        %1787 = vmatpush1.bf16.msra.mxu0 0
        %1788 = vmatprep.subr.bf16.mxu0 0
        %1789 = vmatpush1.bf16.msra.mxu0 0
        %1790 = vmatprep.mubr.bf16.mxu0 0
        %1791 = vmatmul.mubr.bf16.gmra.mrb[0].mxu0 %v1756
        %v1792 = vpop.f32.mrb[0].mxu0
        %v1793 = vadd.f32 0.0, %v1792
        %v1794 = vpop.f32.mrb[0].mxu0
        %v1795 = vpop.f32.mrb[0].mxu0
        %v1796 = vpop.f32.mrb[0].mxu0
        %1797 = vdwg.mxu0
        %v1798 = vadd.f32 %v1435, %v1793
        %v1799 = vld [vmem:[%s16] sm:$0x1]
        %v1801 = vlaneseq
        %v1802 = vshrl.u32 %v1801, 7
        %v1803 = vsub.s32 0, %v1802
        %v1804 = vrot.slane %v1799, %v1803
        %v1806 = vadd.f32 %v1798, %v1804
        %v1807 = vld [vmem:[%s17] sm:$0x1]
        %v1808 = vld [vmem:[%s18] sm:$0x1]
        %v1809 = vsel %vm1052, %v1806, 0.0
        %1810 = vadd.xlane.f32.xlu0 %v1809
        %v1811 = vpop.xlane.xlu0 %1810
        %v1812 = vmul.f32 %v1811, %v1411
        %v1813 = vsub.f32 %v1806, %v1812
        %v1814 = vmul.f32 %v1813, %v1813
        %v1815 = vsel %vm1052, %v1814, 0.0
        %1816 = vadd.xlane.f32.xlu0 %v1815
        %v1817 = vpop.xlane.xlu0 %1816
        %v1818 = vmul.f32 %v1817, %v1411
        %v1819 = vadd.f32 %v1818, 1e-05
        %v1820 = vrsqrt.pop %v1819
        %v1821 = vmul.f32 %v1813, %v1820
        %v1823 = vlaneseq
        %v1824 = vshrl.u32 %v1823, 7
        %v1825 = vsub.s32 0, %v1824
        %v1826 = vrot.slane %v1807, %v1825
        %v1828 = vmul.f32 %v1821, %v1826
        %v1830 = vlaneseq
        %v1831 = vshrl.u32 %v1830, 7
        %v1832 = vsub.s32 0, %v1831
        %v1833 = vrot.slane %v1808, %v1832
        %v1835 = vadd.f32 %v1828, %v1833
        %v1836 = vld [vmem:[%s19] sm:$0xf]
        %v1837 = vld [vmem:[%s19 + $0x4] sm:$0xf]
        %v1838 = vld [vmem:[%s19 + $0x8] sm:$0xf]
        %v1839 = vld [vmem:[%s19 + $0xc] sm:$0xf]
        %v1840 = vpack.c.bf16 %v1835, %v1835
        %v1841 = vld [vmem:[#allocation5] sm:$0x1]
        %v1843 = vlaneseq
        %v1844 = vshrl.u32 %v1843, 7
        %v1845 = vsub.s32 0, %v1844
        %v1846 = vrot.slane %v1841, %v1845
        %v1852 = vunpack.c.l.b16 %v1836
        %v1853 = vunpack.c.l.b16 %v1837
        %v1854 = vunpack.c.l.b16 %v1838
        %v1855 = vunpack.c.l.b16 %v1839
        %v1856 = vpack.c.b16 %v1853, %v1852
        %v1857 = vpack.c.b16 %v1855, %v1854
        %v1861 = vsel %vm1052, %v1840, 0
        %1863 = vmatprep.subr.bf16.mxu0 0
        %1864 = vmatpush1.bf16.msra.mxu0 %v1856
        %1865 = vmatprep.subr.bf16.mxu0 0
        %1866 = vmatpush1.bf16.msra.mxu0 %v1857
        %1867 = vmatprep.subr.bf16.mxu0 0
        %1868 = vmatpush1.bf16.msra.mxu0 0
        %1869 = vmatprep.subr.bf16.mxu0 0
        %1870 = vmatpush1.bf16.msra.mxu0 0
        %1871 = vmatprep.subr.bf16.mxu0 0
        %1872 = vmatpush1.bf16.msra.mxu0 0
        %1873 = vmatprep.subr.bf16.mxu0 0
        %1874 = vmatpush1.bf16.msra.mxu0 0
        %1875 = vmatprep.subr.bf16.mxu0 0
        %1876 = vmatpush1.bf16.msra.mxu0 0
        %1877 = vmatprep.subr.bf16.mxu0 0
        %1878 = vmatpush1.bf16.msra.mxu0 0
        %1879 = vmatprep.subr.bf16.mxu0 0
        %1880 = vmatpush1.bf16.msra.mxu0 0
        %1881 = vmatprep.subr.bf16.mxu0 0
        %1882 = vmatpush1.bf16.msra.mxu0 0
        %1883 = vmatprep.subr.bf16.mxu0 0
        %1884 = vmatpush1.bf16.msra.mxu0 0
        %1885 = vmatprep.subr.bf16.mxu0 0
        %1886 = vmatpush1.bf16.msra.mxu0 0
        %1887 = vmatprep.subr.bf16.mxu0 0
        %1888 = vmatpush1.bf16.msra.mxu0 0
        %1889 = vmatprep.subr.bf16.mxu0 0
        %1890 = vmatpush1.bf16.msra.mxu0 0
        %1891 = vmatprep.subr.bf16.mxu0 0
        %1892 = vmatpush1.bf16.msra.mxu0 0
        %1893 = vmatprep.subr.bf16.mxu0 0
        %1894 = vmatpush1.bf16.msra.mxu0 0
        %1895 = vmatprep.mubr.bf16.mxu0 0
        %1896 = vmatmul.mubr.bf16.gmra.mrb[0].mxu0 %v1861
        %v1897 = vpop.f32.mrb[0].mxu0
        %v1898 = vadd.f32 %v1846, %v1897
        %v1899 = vpop.f32.mrb[0].mxu0
        %v1900 = vpop.f32.mrb[0].mxu0
        %v1901 = vpop.f32.mrb[0].mxu0
        %1902 = vdwg.mxu0
        %v1903 = vmax.f32 %v1898, 0.0
        %v1904 = vld [vmem:[%s21] sm:$0xf]
        %v1905 = vld [vmem:[%s21 + $0x4] sm:$0xf]
        %v1906 = vld [vmem:[%s21 + $0x8] sm:$0xf]
        %v1907 = vld [vmem:[%s21 + $0xc] sm:$0xf]
        %v1908 = vld [vmem:[%s21 + $0x10] sm:$0xf]
        %v1909 = vld [vmem:[%s21 + $0x14] sm:$0xf]
        %v1910 = vld [vmem:[%s21 + $0x18] sm:$0xf]
        %v1911 = vld [vmem:[%s21 + $0x1c] sm:$0xf]
        %v1912 = vpack.c.bf16 %v1903, %v1903
        %v1921 = vunpack.c.l.b16 %v1904
        %v1922 = vunpack.c.l.b16 %v1905
        %v1923 = vunpack.c.l.b16 %v1906
        %v1924 = vunpack.c.l.b16 %v1907
        %v1925 = vunpack.c.l.b16 %v1908
        %v1926 = vunpack.c.l.b16 %v1909
        %v1927 = vunpack.c.l.b16 %v1910
        %v1928 = vunpack.c.l.b16 %v1911
        %v1929 = vpack.c.b16 %v1922, %v1921
        %v1930 = vpack.c.b16 %v1924, %v1923
        %v1931 = vpack.c.b16 %v1926, %v1925
        %v1932 = vpack.c.b16 %v1928, %v1927
        %vm1937 = vcmask 523264
        %v1939 = vsel %vm1937, %v1912, 0
        %1941 = vmatprep.subr.bf16.mxu0 0
        %1942 = vmatpush1.bf16.msra.mxu0 %v1929
        %1943 = vmatprep.subr.bf16.mxu0 0
        %1944 = vmatpush1.bf16.msra.mxu0 %v1930
        %1945 = vmatprep.subr.bf16.mxu0 0
        %1946 = vmatpush1.bf16.msra.mxu0 %v1931
        %1947 = vmatprep.subr.bf16.mxu0 0
        %1948 = vmatpush1.bf16.msra.mxu0 %v1932
        %1949 = vmatprep.subr.bf16.mxu0 0
        %1950 = vmatpush1.bf16.msra.mxu0 0
        %1951 = vmatprep.subr.bf16.mxu0 0
        %1952 = vmatpush1.bf16.msra.mxu0 0
        %1953 = vmatprep.subr.bf16.mxu0 0
        %1954 = vmatpush1.bf16.msra.mxu0 0
        %1955 = vmatprep.subr.bf16.mxu0 0
        %1956 = vmatpush1.bf16.msra.mxu0 0
        %1957 = vmatprep.subr.bf16.mxu0 0
        %1958 = vmatpush1.bf16.msra.mxu0 0
        %1959 = vmatprep.subr.bf16.mxu0 0
        %1960 = vmatpush1.bf16.msra.mxu0 0
        %1961 = vmatprep.subr.bf16.mxu0 0
        %1962 = vmatpush1.bf16.msra.mxu0 0
        %1963 = vmatprep.subr.bf16.mxu0 0
        %1964 = vmatpush1.bf16.msra.mxu0 0
        %1965 = vmatprep.subr.bf16.mxu0 0
        %1966 = vmatpush1.bf16.msra.mxu0 0
        %1967 = vmatprep.subr.bf16.mxu0 0
        %1968 = vmatpush1.bf16.msra.mxu0 0
        %1969 = vmatprep.subr.bf16.mxu0 0
        %1970 = vmatpush1.bf16.msra.mxu0 0
        %1971 = vmatprep.subr.bf16.mxu0 0
        %1972 = vmatpush1.bf16.msra.mxu0 0
        %1973 = vmatprep.mubr.bf16.mxu0 0
        %1974 = vmatmul.mubr.bf16.gmra.mrb[0].mxu0 %v1939
        %v1975 = vpop.f32.mrb[0].mxu0
        %v1976 = vadd.f32 0.0, %v1975
        %v1977 = vpop.f32.mrb[0].mxu0
        %v1978 = vpop.f32.mrb[0].mxu0
        %v1979 = vpop.f32.mrb[0].mxu0
        %1980 = vdwg.mxu0
        %v1981 = vadd.f32 %v1835, %v1976
        %v1982 = vld [vmem:[#allocation7] sm:$0x1]
        %v1984 = vlaneseq
        %v1985 = vshrl.u32 %v1984, 7
        %v1986 = vsub.s32 0, %v1985
        %v1987 = vrot.slane %v1982, %v1986
        %v1989 = vadd.f32 %v1981, %v1987
        %v1990 = vld [vmem:[#allocation9] sm:$0x1]
        %v1991 = vld [vmem:[#allocation10] sm:$0x1]
        %v1992 = vsel %vm1052, %v1989, 0.0
        %1993 = vadd.xlane.f32.xlu0 %v1992
        %v1994 = vpop.xlane.xlu0 %1993
        %v1995 = vmul.f32 %v1994, %v1411
        %v1996 = vsub.f32 %v1989, %v1995
        %v1997 = vmul.f32 %v1996, %v1996
        %v1998 = vsel %vm1052, %v1997, 0.0
        %1999 = vadd.xlane.f32.xlu0 %v1998
        %v2000 = vpop.xlane.xlu0 %1999
        %v2001 = vmul.f32 %v2000, %v1411
        %v2002 = vadd.f32 %v2001, 1e-05
        %v2003 = vrsqrt.pop %v2002
        %v2004 = vmul.f32 %v1996, %v2003
        %v2006 = vlaneseq
        %v2007 = vshrl.u32 %v2006, 7
        %v2008 = vsub.s32 0, %v2007
        %v2009 = vrot.slane %v1990, %v2008
        %v2011 = vmul.f32 %v2004, %v2009
        %v2013 = vlaneseq
        %v2014 = vshrl.u32 %v2013, 7
        %v2015 = vsub.s32 0, %v2014
        %v2016 = vrot.slane %v1991, %v2015
        %v2018 = vadd.f32 %v2011, %v2016
        %2019 = vst.msk [vmem:[%s861] sm:$0xff] %vm1052, %v2018
        %p2020 = scmp.lt.s32.totalorder %s43, 1
        %s2021 = scalar_select %p2020, %s43, 1
        %p2022 = scmp.lt.s32.totalorder %s44, 0
        %s2023 = scalar_select %p2022, %s44, 0
        %s2024 = sadd.s32 %s2023, %s2021
        %s2025 = smul.addr %s2024, 8
        %s2026 = scalar_lea.vmem %s25, %s2025
        // Predicated region
        $region141: #{key_emotions_forward.6} parent=119 // pred_check
          %p2027 = pneg %p611
        $region142: #{key_emotions_forward.6} parent=119 // pred_check_branch
          %2029 = sbr.rel (%p2027) target = $region144
        $region143: #{key_emotions_forward.6} parent=119 // pred_region
          _
        $region144: #{key_emotions_forward.6} parent=119 // pred_fallthru
          _
      $region120: #{key_emotions_forward.6} parent=5 // pred_fallthru
        _
      %p2030 = scmp.le.s32.totalorder 2, %s34
      // Predicated region
      $region145: #{key_emotions_forward.6} parent=5 // pred_check
        %p2031 = pneg %p2030
      $region146: #{key_emotions_forward.6} parent=5 // pred_check_branch
        %2033 = sbr.rel (%p2031) target = $region148
      $region147: #{key_emotions_forward.6} parent=5 // pred_region
        %s2034 = ssub.s32 %s34, 2
        // Predicated region
        $region149: #{key_emotions_forward.6} parent=147 // pred_check
          %p2035 = pneg %p617
        $region150: #{key_emotions_forward.6} parent=147 // pred_check_branch
          %2037 = sbr.rel (%p2035) target = $region152
        $region151: #{key_emotions_forward.6} parent=147 // pred_region
          %p2038 = scmp.lt.s32.totalorder %s45, 1
          %s2039 = scalar_select %p2038, %s45, 1
          %p2040 = scmp.lt.s32.totalorder %s46, 0
          %s2041 = scalar_select %p2040, %s46, 0
          %s2042 = sadd.s32 %s2041, %s2039
          %s2043 = smul.addr %s2042, 8
          %s2044 = scalar_lea.vmem %s25, %s2043
        $region152: #{key_emotions_forward.6} parent=147 // pred_fallthru
          _
      $region148: #{key_emotions_forward.6} parent=5 // pred_fallthru
        _
    $region6: #{key_emotions_forward.6} parent=1 // loop_footer
      %s38 = sadd.s32 1, %s34
    $region7: #{key_emotions_forward.6} parent=1 // loop_footer_branch
      %33 = sbr.rel target = $region3
    $region8: #{key_emotions_forward.6} parent=1 // loop_exit
      _
    %2045 = vsyncpa [#allocation6], 1
    %s2046 = scalar_lea.sflag [#allocation6], 1
    %2047 = vsyncpa %s2046, 1
    %2048 = vsyncpa [#allocation8], 1
    %2049 = vsyncpa [#allocation11], 1

</llo_original>
